<compile_context>
chip_gen: v7x
topology: tpu7x:2x2x1
jax: 0.10.0
libtpu: 0.0.40
codegen_flags: <defaults>
</compile_context>

<pallas_src>
import math

import jax
import jax.numpy as jnp
from jax.experimental import pallas as pl
from jax.experimental.pallas import tpu as pltpu

# ----------------------------- hyper-parameters ------------------------------
INPUT_SIZE = 4        # conv in-channels
OUTPUT_SIZE = 10
HIDDEN = 48           # hidden_dim, divisible by nhead=6
N_LAYERS = 2
NHEAD = 6
HEAD_DIM = HIDDEN // NHEAD       # 8
FFN = 2048                       # TransformerEncoderLayer default
KSIZE = 80
STRIDE = 16
POOL = 4
BATCH = 2
SEQ_LEN = 576
L_OUT = (SEQ_LEN - KSIZE) // STRIDE + 1   # 32
L2 = L_OUT // POOL                        # 8
ROWS = BATCH * L2                         # 16 transformer rows, row = b*L2 + l2
LN_EPS = 1e-5
BN_EPS = 1e-5

# attention kernel is specialized for sequence length == BATCH == 2
assert BATCH == 2, "2-way attention specialization requires BATCH == 2"


def _vmem_spec(shape):
    nd = len(shape)

    def idx(i):
        return (0,) * nd

    return pl.BlockSpec(shape, idx)


# ------------------------------- fused kernel --------------------------------
def _layer_norm(x, g, b, eps=LN_EPS):
    mu = jnp.mean(x, axis=-1, keepdims=True)
    var = jnp.mean((x - mu) ** 2, axis=-1, keepdims=True)
    return (x - mu) * jax.lax.rsqrt(var + eps) * g + b


def fused_forward_kernel(patches_ref, wc_ref, cb_ref, blk_ref,
                         wqkv_ref, bqkv_ref, wo_ref, bo_ref,
                         ln1g_ref, ln1b_ref,
                         w1_ref, b1_ref, w2_ref, b2_ref,
                         ln2g_ref, ln2b_ref,
                         wfc_ref, bfc_ref, o_ref):
    f32 = jnp.float32

    # ---- conv1 (im2col matmul, BN scale folded into weights) + ReLU + pool ---
    # patches: (POOL*ROWS, C*K), row = p*ROWS + b*L2 + l2
    y = jnp.dot(patches_ref[...], wc_ref[...], preferred_element_type=f32)
    y = jnp.maximum(y + cb_ref[...], 0.0)                 # (POOL*ROWS, H)
    x = y[0:ROWS]                                         # MaxPool1d(4) over p
    for p in range(1, POOL):
        x = jnp.maximum(x, y[p * ROWS:(p + 1) * ROWS])    # (ROWS, H)

    blk = blk_ref[...]          # (H, H) block-diag ones, head blocks of 8
    half = ROWS // 2            # = L2: rows [0,half) are b=0, [half,ROWS) b=1

    for layer in range(N_LAYERS):
        # ---------------- multi-head self-attention (2 x 2 per group) --------
        qkv = (jnp.dot(x, wqkv_ref[layer], preferred_element_type=f32)
               + bqkv_ref[layer])                          # (ROWS, 3H), q pre-scaled
        q = qkv[:, 0:HIDDEN]
        k = qkv[:, HIDDEN:2 * HIDDEN]
        v = qkv[:, 2 * HIDDEN:3 * HIDDEN]
        q0, q1 = q[0:half], q[half:ROWS]
        k0, k1 = k[0:half], k[half:ROWS]
        v0, v1 = v[0:half], v[half:ROWS]

        # per-head dot products: segment-sum over each head's 8 lanes and
        # broadcast the result back over those lanes (one small MXU push)
        prods = jnp.concatenate([q0 * k0, q0 * k1, q1 * k0, q1 * k1], axis=0)
        sw = jnp.dot(prods, blk, preferred_element_type=f32)       # (4*half, H)
        s00, s01 = sw[0:half], sw[half:2 * half]
        s10, s11 = sw[2 * half:3 * half], sw[3 * half:4 * half]

        # 2-way softmax over the true-batch (sequence) axis
        m0 = jnp.maximum(s00, s01)
        m1 = jnp.maximum(s10, s11)
        e00, e01 = jnp.exp(s00 - m0), jnp.exp(s01 - m0)
        e10, e11 = jnp.exp(s10 - m1), jnp.exp(s11 - m1)
        r0 = pl.reciprocal(e00 + e01, approx=True)
        r1 = pl.reciprocal(e10 + e11, approx=True)
        o0 = (e00 * r0) * v0 + (e01 * r0) * v1
        o1 = (e10 * r1) * v0 + (e11 * r1) * v1
        attn = jnp.concatenate([o0, o1], axis=0)                    # (ROWS, H)
        attn = (jnp.dot(attn, wo_ref[layer], preferred_element_type=f32)
                + bo_ref[layer])

        x = _layer_norm(x + attn, ln1g_ref[layer], ln1b_ref[layer])

        # ---------------- feed-forward (bf16 weights, f32 accumulate) --------
        h1 = jnp.dot(x.astype(jnp.bfloat16), w1_ref[layer],
                     preferred_element_type=f32) + b1_ref[layer]
        h1 = jnp.maximum(h1, 0.0)
        ff = jnp.dot(h1.astype(jnp.bfloat16), w2_ref[layer],
                     preferred_element_type=f32) + b2_ref[layer]
        x = _layer_norm(x + ff, ln2g_ref[layer], ln2b_ref[layer])

    # ---- permute(0,2,1) + max_pool1d(full) + squeeze + fc1 -------------------
    # rows [0,L2) are batch 0, [L2,2*L2) are batch 1; max over l2 is a pure
    # sublane (XLU) reduce on 2-D slabs — no 3-D reshape needed.
    pooled = jnp.concatenate(
        [jnp.max(x[0:L2], axis=0, keepdims=True),
         jnp.max(x[L2:ROWS], axis=0, keepdims=True)], axis=0)       # (BATCH, H)
    o_ref[...] = (jnp.dot(pooled, wfc_ref[...], preferred_element_type=f32)
                  + bfc_ref[...])


# --------------------------------- glue ---------------------------------------
def im2col_pool(x):
    """x: (B, C, L) -> (POOL*B*L2, C*K); row = p*(B*L2) + b*L2 + l2, conv output
    position = l2*POOL + p."""
    b, c, _ = x.shape
    starts = jnp.arange(L_OUT) * STRIDE
    idx = starts[:, None] + jnp.arange(KSIZE)[None, :]        # (L_OUT, K)
    patches = x[:, :, idx]                                    # (B, C, L_OUT, K)
    patches = jnp.transpose(patches, (2, 0, 1, 3))            # (L_OUT, B, C, K)
    patches = patches.reshape(L2, POOL, b, c * KSIZE)
    patches = jnp.transpose(patches, (1, 2, 0, 3))            # (POOL, B, L2, CK)
    return patches.reshape(POOL * b * L2, c * KSIZE)


def prepare_params(p):
    """One-time (outside jit) re-layout of PyTorch-style params into
    kernel-ready arrays: BN folded into conv weights, 1/sqrt(d) folded into Wq,
    combined QKV weights, layer params stacked on a leading N_LAYERS axis,
    big FFN weights cast to bf16 (they are ~98% of all parameter bytes)."""
    E, d = HIDDEN, HEAD_DIM

    s = p['bn_gamma'] / jnp.sqrt(p['bn_var'] + BN_EPS)              # (H,)
    wc = p['conv_w'].reshape(E, INPUT_SIZE * KSIZE).T * s[None, :]  # (CK, H)
    cb = ((p['conv_b'] - p['bn_mean']) * s + p['bn_beta']).reshape(1, E)

    heads = jnp.arange(E) // d
    blk = (heads[:, None] == heads[None, :]).astype(jnp.float32)    # (E, E)

    inv = 1.0 / math.sqrt(d)
    qscale = jnp.concatenate(
        [jnp.full((E,), inv, jnp.float32), jnp.ones((2 * E,), jnp.float32)])

    wqkv, bqkv, wo, bo = [], [], [], []
    ln1g, ln1b, w1, b1, w2, b2, ln2g, ln2b = [], [], [], [], [], [], [], []
    for lp in p['layers']:
        wqkv.append(lp['in_proj_w'].T * qscale[None, :])            # (E, 3E)
        bqkv.append((lp['in_proj_b'] * qscale).reshape(1, 3 * E))
        wo.append(lp['out_proj_w'].T)                               # (E, E)
        bo.append(lp['out_proj_b'].reshape(1, E))
        ln1g.append(lp['ln1_g'].reshape(1, E))
        ln1b.append(lp['ln1_b'].reshape(1, E))
        w1.append(lp['ff1_w'].T.astype(jnp.bfloat16))               # (E, FFN)
        b1.append(lp['ff1_b'].reshape(1, FFN))
        w2.append(lp['ff2_w'].T.astype(jnp.bfloat16))               # (FFN, E)
        b2.append(lp['ff2_b'].reshape(1, E))
        ln2g.append(lp['ln2_g'].reshape(1, E))
        ln2b.append(lp['ln2_b'].reshape(1, E))

    st = lambda xs: jnp.stack(xs, axis=0)
    return dict(
        wc=wc.astype(jnp.float32), cb=cb, blk=blk,
        wqkv=st(wqkv), bqkv=st(bqkv), wo=st(wo), bo=st(bo),
        ln1g=st(ln1g), ln1b=st(ln1b),
        w1=st(w1), b1=st(b1), w2=st(w2), b2=st(b2),
        ln2g=st(ln2g), ln2b=st(ln2b),
        wfc=p['fc_w'].T, bfc=p['fc_b'].reshape(1, OUTPUT_SIZE),
    )


@jax.jit
def audio_trans_forward(x, kp):
    patches = im2col_pool(x)
    args = (patches, kp['wc'], kp['cb'], kp['blk'],
            kp['wqkv'], kp['bqkv'], kp['wo'], kp['bo'],
            kp['ln1g'], kp['ln1b'],
            kp['w1'], kp['b1'], kp['w2'], kp['b2'],
            kp['ln2g'], kp['ln2b'],
            kp['wfc'], kp['bfc'])
    # Single fused pallas_call: total resident footprint < 3 MiB, so the whole
    # forward stays VMEM-resident on every generation (v5e / v6e / v7x).
    return pl.pallas_call(
        fused_forward_kernel,
        out_shape=jax.ShapeDtypeStruct((BATCH, OUTPUT_SIZE), jnp.float32),
        grid=(1,),
        in_specs=[_vmem_spec(a.shape) for a in args],
        out_specs=_vmem_spec((BATCH, OUTPUT_SIZE)),
        compiler_params=pltpu.CompilerParams(dimension_semantics=("arbitrary",)),
    )(*args)


# ------------------------- pure-JAX reference (f32) ---------------------------
def _ref_layer_norm(x, g, b):
    mu = jnp.mean(x, axis=-1, keepdims=True)
    var = jnp.mean((x - mu) ** 2, axis=-1, keepdims=True)
    return (x - mu) / jnp.sqrt(var + LN_EPS) * g + b


def reference_forward(x, p):
    y = jax.lax.conv_general_dilated(
        x, p['conv_w'], window_strides=(STRIDE,), padding='VALID',
        dimension_numbers=('NCH', 'OIH', 'NCH'))
    y = y + p['conv_b'][None, :, None]
    s = p['bn_gamma'] / jnp.sqrt(p['bn_var'] + BN_EPS)
    y = (y - p['bn_mean'][None, :, None]) * s[None, :, None] + p['bn_beta'][None, :, None]
    y = jnp.maximum(y, 0.0)
    y = y.reshape(BATCH, HIDDEN, L2, POOL).max(axis=-1)      # MaxPool1d(4)
    xt = jnp.transpose(y, (0, 2, 1))                         # (B, L2, H)

    # PyTorch TransformerEncoder with batch_first=False: (B, L2, H) is read as
    # (seq=B, batch=L2, embed=H).
    h = xt
    for lp in p['layers']:
        S, N, E = h.shape
        qkv = h @ lp['in_proj_w'].T + lp['in_proj_b']
        q, k, v = jnp.split(qkv, 3, axis=-1)
        d = E // NHEAD
        q = q.reshape(S, N, NHEAD, d) / math.sqrt(d)
        k = k.reshape(S, N, NHEAD, d)
        v = v.reshape(S, N, NHEAD, d)
        sc = jnp.einsum('snhd,tnhd->nhst', q, k)
        pw = jax.nn.softmax(sc, axis=-1)
        o = jnp.einsum('nhst,tnhd->snhd', pw, v).reshape(S, N, E)
        o = o @ lp['out_proj_w'].T + lp['out_proj_b']
        h = _ref_layer_norm(h + o, lp['ln1_g'], lp['ln1_b'])
        f = jnp.maximum(h @ lp['ff1_w'].T + lp['ff1_b'], 0.0)
        f = f @ lp['ff2_w'].T + lp['ff2_b']
        h = _ref_layer_norm(h + f, lp['ln2_g'], lp['ln2_b'])

    pooled = jnp.max(h, axis=1)                              # (B, H)
    return pooled @ p['fc_w'].T + p['fc_b']


# ------------------------------ random params ---------------------------------
def init_params(key):
    ks = iter(jax.random.split(key, 64))

    def nrm(shape, scale):
        return scale * jax.random.normal(next(ks), shape, dtype=jnp.float32)

    p = {
        'conv_w': nrm((HIDDEN, INPUT_SIZE, KSIZE), 1.0 / math.sqrt(INPUT_SIZE * KSIZE)),
        'conv_b': nrm((HIDDEN,), 0.05),
        'bn_gamma': 1.0 + nrm((HIDDEN,), 0.1),
        'bn_beta': nrm((HIDDEN,), 0.1),
        'bn_mean': nrm((HIDDEN,), 0.1),
        'bn_var': 1.0 + jnp.abs(nrm((HIDDEN,), 0.1)),
        'fc_w': nrm((OUTPUT_SIZE, HIDDEN), 1.0 / math.sqrt(HIDDEN)),
        'fc_b': nrm((OUTPUT_SIZE,), 0.05),
        'layers': [],
    }
    for _ in range(N_LAYERS):
        p['layers'].append({
            'in_proj_w': nrm((3 * HIDDEN, HIDDEN), 1.0 / math.sqrt(HIDDEN)),
            'in_proj_b': nrm((3 * HIDDEN,), 0.05),
            'out_proj_w': nrm((HIDDEN, HIDDEN), 1.0 / math.sqrt(HIDDEN)),
            'out_proj_b': nrm((HIDDEN,), 0.05),
            'ln1_g': 1.0 + nrm((HIDDEN,), 0.05),
            'ln1_b': nrm((HIDDEN,), 0.05),
            'ff1_w': nrm((FFN, HIDDEN), 1.0 / math.sqrt(HIDDEN)),
            'ff1_b': nrm((FFN,), 0.05),
            'ff2_w': nrm((HIDDEN, FFN), 1.0 / math.sqrt(FFN)),
            'ff2_b': nrm((HIDDEN,), 0.05),
            'ln2_g': 1.0 + nrm((HIDDEN,), 0.05),
            'ln2_b': nrm((HIDDEN,), 0.05),
        })
    return p


if __name__ == "__main__":
    key = jax.random.PRNGKey(0)
    pkey, xkey = jax.random.split(key)
    params = init_params(pkey)
    kernel_params = prepare_params(params)          # one-time layout, outside jit
    x = jax.random.normal(xkey, (BATCH, INPUT_SIZE, SEQ_LEN), dtype=jnp.float32)

    out = audio_trans_forward(x, kernel_params)
    out = jax.block_until_ready(out)

    assert out.shape == (BATCH, OUTPUT_SIZE), out.shape
    assert bool(jnp.all(jnp.isfinite(out)))

    # Loose correctness check vs. f32 reference (kernel uses bf16 FFN weights
    # and an approx-reciprocal softmax denominator, so allow a small tolerance).
    ref = jax.block_until_ready(reference_forward(x, params))
    max_err = float(jnp.max(jnp.abs(out - ref)))
    assert max_err < 0.25, f"max abs error vs reference: {max_err}"

    print("KERNEL_OK")
</pallas_src>

<mosaic_0001>
module attributes {stable_mosaic.version = 11 : i64} {
  func.func @fused_forward_kernel(%arg0: i32, %arg1: memref<64x320xf32, #tpu.memory_space<vmem>>, %arg2: memref<320x48xf32, #tpu.memory_space<vmem>>, %arg3: memref<1x48xf32, #tpu.memory_space<vmem>>, %arg4: memref<48x48xf32, #tpu.memory_space<vmem>>, %arg5: memref<2x48x144xf32, #tpu.memory_space<vmem>>, %arg6: memref<2x1x144xf32, #tpu.memory_space<vmem>>, %arg7: memref<2x48x48xf32, #tpu.memory_space<vmem>>, %arg8: memref<2x1x48xf32, #tpu.memory_space<vmem>>, %arg9: memref<2x1x48xf32, #tpu.memory_space<vmem>>, %arg10: memref<2x1x48xf32, #tpu.memory_space<vmem>>, %arg11: memref<2x48x2048xbf16, #tpu.memory_space<vmem>>, %arg12: memref<2x1x2048xf32, #tpu.memory_space<vmem>>, %arg13: memref<2x2048x48xbf16, #tpu.memory_space<vmem>>, %arg14: memref<2x1x48xf32, #tpu.memory_space<vmem>>, %arg15: memref<2x1x48xf32, #tpu.memory_space<vmem>>, %arg16: memref<2x1x48xf32, #tpu.memory_space<vmem>>, %arg17: memref<48x10xf32, #tpu.memory_space<vmem>>, %arg18: memref<1x10xf32, #tpu.memory_space<vmem>>, %arg19: memref<2x10xf32, #tpu.memory_space<vmem>>) attributes {dimension_semantics = [#tpu.dimension_semantics<arbitrary>], iteration_bounds = array<i64: 1>, scalar_prefetch = 0 : i64, scratch_operands = 0 : i64, tpu.core_type = #tpu.core_type<tc>, window_params = [{pipeline_mode = #tpu.pipeline_mode<synchronous>, transform_indices = @transform_0, window_bounds = array<i64: 64, 320>}, {pipeline_mode = #tpu.pipeline_mode<synchronous>, transform_indices = @transform_1, window_bounds = array<i64: 320, 48>}, {pipeline_mode = #tpu.pipeline_mode<synchronous>, transform_indices = @transform_2, window_bounds = array<i64: 1, 48>}, {pipeline_mode = #tpu.pipeline_mode<synchronous>, transform_indices = @transform_3, window_bounds = array<i64: 48, 48>}, {pipeline_mode = #tpu.pipeline_mode<synchronous>, transform_indices = @transform_4, window_bounds = array<i64: 2, 48, 144>}, {pipeline_mode = #tpu.pipeline_mode<synchronous>, transform_indices = @transform_5, window_bounds = array<i64: 2, 1, 144>}, {pipeline_mode = #tpu.pipeline_mode<synchronous>, transform_indices = @transform_6, window_bounds = array<i64: 2, 48, 48>}, {pipeline_mode = #tpu.pipeline_mode<synchronous>, transform_indices = @transform_7, window_bounds = array<i64: 2, 1, 48>}, {pipeline_mode = #tpu.pipeline_mode<synchronous>, transform_indices = @transform_8, window_bounds = array<i64: 2, 1, 48>}, {pipeline_mode = #tpu.pipeline_mode<synchronous>, transform_indices = @transform_9, window_bounds = array<i64: 2, 1, 48>}, {pipeline_mode = #tpu.pipeline_mode<synchronous>, transform_indices = @transform_10, window_bounds = array<i64: 2, 48, 2048>}, {pipeline_mode = #tpu.pipeline_mode<synchronous>, transform_indices = @transform_11, window_bounds = array<i64: 2, 1, 2048>}, {pipeline_mode = #tpu.pipeline_mode<synchronous>, transform_indices = @transform_12, window_bounds = array<i64: 2, 2048, 48>}, {pipeline_mode = #tpu.pipeline_mode<synchronous>, transform_indices = @transform_13, window_bounds = array<i64: 2, 1, 48>}, {pipeline_mode = #tpu.pipeline_mode<synchronous>, transform_indices = @transform_14, window_bounds = array<i64: 2, 1, 48>}, {pipeline_mode = #tpu.pipeline_mode<synchronous>, transform_indices = @transform_15, window_bounds = array<i64: 2, 1, 48>}, {pipeline_mode = #tpu.pipeline_mode<synchronous>, transform_indices = @transform_16, window_bounds = array<i64: 48, 10>}, {pipeline_mode = #tpu.pipeline_mode<synchronous>, transform_indices = @transform_17, window_bounds = array<i64: 1, 10>}, {pipeline_mode = #tpu.pipeline_mode<synchronous>, transform_indices = @transform_18, window_bounds = array<i64: 2, 10>}]} {
    %c0 = arith.constant 0 : index
    %c0_0 = arith.constant 0 : index
    %0 = vector.load %arg1[%c0, %c0_0] : memref<64x320xf32, #tpu.memory_space<vmem>>, vector<64x320xf32>
    %c0_1 = arith.constant 0 : index
    %c0_2 = arith.constant 0 : index
    %1 = vector.load %arg2[%c0_1, %c0_2] : memref<320x48xf32, #tpu.memory_space<vmem>>, vector<320x48xf32>
    %cst = arith.constant dense<0.000000e+00> : vector<64x48xf32>
    %2 = tpu.matmul %0, %1, %cst {dimension_numbers = #tpu.dot_dimension_numbers<[1], [0], [0], [1], [0, 0, 1, 1], [], []>} : vector<64x320xf32>, vector<320x48xf32>, vector<64x48xf32> -> vector<64x48xf32>
    %c0_3 = arith.constant 0 : index
    %c0_4 = arith.constant 0 : index
    %3 = vector.load %arg3[%c0_3, %c0_4] : memref<1x48xf32, #tpu.memory_space<vmem>>, vector<1x48xf32>
    %4 = vector.broadcast %3 : vector<1x48xf32> to vector<64x48xf32>
    %5 = arith.addf %2, %4 : vector<64x48xf32>
    %cst_5 = arith.constant 0.000000e+00 : f32
    %6 = vector.broadcast %cst_5 : f32 to vector<64x48xf32>
    %7 = arith.maximumf %5, %6 : vector<64x48xf32>
    %8 = vector.extract_strided_slice %7 {offsets = [0, 0], sizes = [16, 48], strides = [1, 1]} : vector<64x48xf32> to vector<16x48xf32>
    %9 = vector.extract_strided_slice %7 {offsets = [16, 0], sizes = [16, 48], strides = [1, 1]} : vector<64x48xf32> to vector<16x48xf32>
    %10 = arith.maximumf %8, %9 : vector<16x48xf32>
    %11 = vector.extract_strided_slice %7 {offsets = [32, 0], sizes = [16, 48], strides = [1, 1]} : vector<64x48xf32> to vector<16x48xf32>
    %12 = arith.maximumf %10, %11 : vector<16x48xf32>
    %13 = vector.extract_strided_slice %7 {offsets = [48, 0], sizes = [16, 48], strides = [1, 1]} : vector<64x48xf32> to vector<16x48xf32>
    %14 = arith.maximumf %12, %13 : vector<16x48xf32>
    %c0_6 = arith.constant 0 : index
    %c0_7 = arith.constant 0 : index
    %15 = vector.load %arg4[%c0_6, %c0_7] : memref<48x48xf32, #tpu.memory_space<vmem>>, vector<48x48xf32>
    %c0_8 = arith.constant 0 : index
    %c0_9 = arith.constant 0 : index
    %c0_10 = arith.constant 0 : index
    %16 = vector.load %arg5[%c0_8, %c0_9, %c0_10] : memref<2x48x144xf32, #tpu.memory_space<vmem>>, vector<1x48x144xf32>
    %17 = vector.shape_cast %16 : vector<1x48x144xf32> to vector<48x144xf32>
    %cst_11 = arith.constant dense<0.000000e+00> : vector<16x144xf32>
    %18 = tpu.matmul %14, %17, %cst_11 {dimension_numbers = #tpu.dot_dimension_numbers<[1], [0], [0], [1], [0, 0, 1, 1], [], []>} : vector<16x48xf32>, vector<48x144xf32>, vector<16x144xf32> -> vector<16x144xf32>
    %c0_12 = arith.constant 0 : index
    %c0_13 = arith.constant 0 : index
    %c0_14 = arith.constant 0 : index
    %19 = vector.load %arg6[%c0_12, %c0_13, %c0_14] : memref<2x1x144xf32, #tpu.memory_space<vmem>>, vector<1x1x144xf32>
    %20 = vector.shape_cast %19 : vector<1x1x144xf32> to vector<1x144xf32>
    %21 = vector.broadcast %20 : vector<1x144xf32> to vector<16x144xf32>
    %22 = arith.addf %18, %21 : vector<16x144xf32>
    %23 = vector.extract_strided_slice %22 {offsets = [0, 0], sizes = [16, 48], strides = [1, 1]} : vector<16x144xf32> to vector<16x48xf32>
    %24 = vector.extract_strided_slice %22 {offsets = [0, 48], sizes = [16, 48], strides = [1, 1]} : vector<16x144xf32> to vector<16x48xf32>
    %25 = vector.extract_strided_slice %22 {offsets = [0, 96], sizes = [16, 48], strides = [1, 1]} : vector<16x144xf32> to vector<16x48xf32>
    %26 = vector.extract_strided_slice %23 {offsets = [0, 0], sizes = [8, 48], strides = [1, 1]} : vector<16x48xf32> to vector<8x48xf32>
    %27 = vector.extract_strided_slice %23 {offsets = [8, 0], sizes = [8, 48], strides = [1, 1]} : vector<16x48xf32> to vector<8x48xf32>
    %28 = vector.extract_strided_slice %24 {offsets = [0, 0], sizes = [8, 48], strides = [1, 1]} : vector<16x48xf32> to vector<8x48xf32>
    %29 = vector.extract_strided_slice %24 {offsets = [8, 0], sizes = [8, 48], strides = [1, 1]} : vector<16x48xf32> to vector<8x48xf32>
    %30 = vector.extract_strided_slice %25 {offsets = [0, 0], sizes = [8, 48], strides = [1, 1]} : vector<16x48xf32> to vector<8x48xf32>
    %31 = vector.extract_strided_slice %25 {offsets = [8, 0], sizes = [8, 48], strides = [1, 1]} : vector<16x48xf32> to vector<8x48xf32>
    %32 = arith.mulf %26, %28 : vector<8x48xf32>
    %33 = arith.mulf %26, %29 : vector<8x48xf32>
    %34 = arith.mulf %27, %28 : vector<8x48xf32>
    %35 = arith.mulf %27, %29 : vector<8x48xf32>
    %36 = tpu.concatenate %32, %33, %34, %35 in 0 : vector<8x48xf32>, vector<8x48xf32>, vector<8x48xf32>, vector<8x48xf32> -> vector<32x48xf32>
    %cst_15 = arith.constant dense<0.000000e+00> : vector<32x48xf32>
    %37 = tpu.matmul %36, %15, %cst_15 {dimension_numbers = #tpu.dot_dimension_numbers<[1], [0], [0], [1], [0, 0, 1, 1], [], []>} : vector<32x48xf32>, vector<48x48xf32>, vector<32x48xf32> -> vector<32x48xf32>
    %38 = vector.extract_strided_slice %37 {offsets = [0, 0], sizes = [8, 48], strides = [1, 1]} : vector<32x48xf32> to vector<8x48xf32>
    %39 = vector.extract_strided_slice %37 {offsets = [8, 0], sizes = [8, 48], strides = [1, 1]} : vector<32x48xf32> to vector<8x48xf32>
    %40 = vector.extract_strided_slice %37 {offsets = [16, 0], sizes = [8, 48], strides = [1, 1]} : vector<32x48xf32> to vector<8x48xf32>
    %41 = vector.extract_strided_slice %37 {offsets = [24, 0], sizes = [8, 48], strides = [1, 1]} : vector<32x48xf32> to vector<8x48xf32>
    %42 = arith.maximumf %38, %39 : vector<8x48xf32>
    %43 = arith.maximumf %40, %41 : vector<8x48xf32>
    %44 = arith.subf %38, %42 : vector<8x48xf32>
    %45 = math.exp %44 : vector<8x48xf32>
    %46 = arith.subf %39, %42 : vector<8x48xf32>
    %47 = math.exp %46 : vector<8x48xf32>
    %48 = arith.subf %40, %43 : vector<8x48xf32>
    %49 = math.exp %48 : vector<8x48xf32>
    %50 = arith.subf %41, %43 : vector<8x48xf32>
    %51 = math.exp %50 : vector<8x48xf32>
    %52 = arith.addf %45, %47 : vector<8x48xf32>
    %53 = tpu.reciprocal %52 {approx = true} : vector<8x48xf32> -> vector<8x48xf32>
    %54 = arith.addf %49, %51 : vector<8x48xf32>
    %55 = tpu.reciprocal %54 {approx = true} : vector<8x48xf32> -> vector<8x48xf32>
    %56 = arith.mulf %45, %53 : vector<8x48xf32>
    %57 = arith.mulf %56, %30 : vector<8x48xf32>
    %58 = arith.mulf %47, %53 : vector<8x48xf32>
    %59 = arith.mulf %58, %31 : vector<8x48xf32>
    %60 = arith.addf %57, %59 : vector<8x48xf32>
    %61 = arith.mulf %49, %55 : vector<8x48xf32>
    %62 = arith.mulf %61, %30 : vector<8x48xf32>
    %63 = arith.mulf %51, %55 : vector<8x48xf32>
    %64 = arith.mulf %63, %31 : vector<8x48xf32>
    %65 = arith.addf %62, %64 : vector<8x48xf32>
    %66 = tpu.concatenate %60, %65 in 0 : vector<8x48xf32>, vector<8x48xf32> -> vector<16x48xf32>
    %c0_16 = arith.constant 0 : index
    %c0_17 = arith.constant 0 : index
    %c0_18 = arith.constant 0 : index
    %67 = vector.load %arg7[%c0_16, %c0_17, %c0_18] : memref<2x48x48xf32, #tpu.memory_space<vmem>>, vector<1x48x48xf32>
    %68 = vector.shape_cast %67 : vector<1x48x48xf32> to vector<48x48xf32>
    %cst_19 = arith.constant dense<0.000000e+00> : vector<16x48xf32>
    %69 = tpu.matmul %66, %68, %cst_19 {dimension_numbers = #tpu.dot_dimension_numbers<[1], [0], [0], [1], [0, 0, 1, 1], [], []>} : vector<16x48xf32>, vector<48x48xf32>, vector<16x48xf32> -> vector<16x48xf32>
    %c0_20 = arith.constant 0 : index
    %c0_21 = arith.constant 0 : index
    %c0_22 = arith.constant 0 : index
    %70 = vector.load %arg8[%c0_20, %c0_21, %c0_22] : memref<2x1x48xf32, #tpu.memory_space<vmem>>, vector<1x1x48xf32>
    %71 = vector.shape_cast %70 : vector<1x1x48xf32> to vector<1x48xf32>
    %72 = vector.broadcast %71 : vector<1x48xf32> to vector<16x48xf32>
    %73 = arith.addf %69, %72 : vector<16x48xf32>
    %74 = arith.addf %14, %73 : vector<16x48xf32>
    %c0_23 = arith.constant 0 : index
    %c0_24 = arith.constant 0 : index
    %c0_25 = arith.constant 0 : index
    %75 = vector.load %arg9[%c0_23, %c0_24, %c0_25] : memref<2x1x48xf32, #tpu.memory_space<vmem>>, vector<1x1x48xf32>
    %76 = vector.shape_cast %75 : vector<1x1x48xf32> to vector<1x48xf32>
    %c0_26 = arith.constant 0 : index
    %c0_27 = arith.constant 0 : index
    %c0_28 = arith.constant 0 : index
    %77 = vector.load %arg10[%c0_26, %c0_27, %c0_28] : memref<2x1x48xf32, #tpu.memory_space<vmem>>, vector<1x1x48xf32>
    %78 = vector.shape_cast %77 : vector<1x1x48xf32> to vector<1x48xf32>
    %cst_29 = arith.constant dense<0.000000e+00> : vector<16xf32>
    %79 = vector.multi_reduction <add>, %74, %cst_29 [1] : vector<16x48xf32> to vector<16xf32>
    %80 = vector.shape_cast %79 : vector<16xf32> to vector<16x1xf32>
    %cst_30 = arith.constant 4.800000e+01 : f32
    %81 = vector.broadcast %cst_30 : f32 to vector<16x1xf32>
    %82 = arith.divf %80, %81 : vector<16x1xf32>
    %83 = vector.broadcast %82 : vector<16x1xf32> to vector<16x48xf32>
    %84 = arith.subf %74, %83 : vector<16x48xf32>
    %85 = arith.mulf %84, %84 : vector<16x48xf32>
    %cst_31 = arith.constant dense<0.000000e+00> : vector<16xf32>
    %86 = vector.multi_reduction <add>, %85, %cst_31 [1] : vector<16x48xf32> to vector<16xf32>
    %87 = vector.shape_cast %86 : vector<16xf32> to vector<16x1xf32>
    %cst_32 = arith.constant 4.800000e+01 : f32
    %88 = vector.broadcast %cst_32 : f32 to vector<16x1xf32>
    %89 = arith.divf %87, %88 : vector<16x1xf32>
    %90 = vector.broadcast %82 : vector<16x1xf32> to vector<16x48xf32>
    %91 = arith.subf %74, %90 : vector<16x48xf32>
    %cst_33 = arith.constant 9.99999974E-6 : f32
    %92 = vector.broadcast %cst_33 : f32 to vector<16x1xf32>
    %93 = arith.addf %89, %92 : vector<16x1xf32>
    %94 = math.rsqrt %93 : vector<16x1xf32>
    %95 = vector.broadcast %94 : vector<16x1xf32> to vector<16x48xf32>
    %96 = arith.mulf %91, %95 : vector<16x48xf32>
    %97 = vector.broadcast %76 : vector<1x48xf32> to vector<16x48xf32>
    %98 = arith.mulf %96, %97 : vector<16x48xf32>
    %99 = vector.broadcast %78 : vector<1x48xf32> to vector<16x48xf32>
    %100 = arith.addf %98, %99 : vector<16x48xf32>
    %101 = arith.truncf %100 : vector<16x48xf32> to vector<16x48xbf16>
    %c0_34 = arith.constant 0 : index
    %c0_35 = arith.constant 0 : index
    %c0_36 = arith.constant 0 : index
    %102 = vector.load %arg11[%c0_34, %c0_35, %c0_36] : memref<2x48x2048xbf16, #tpu.memory_space<vmem>>, vector<1x48x2048xbf16>
    %103 = vector.shape_cast %102 : vector<1x48x2048xbf16> to vector<48x2048xbf16>
    %cst_37 = arith.constant dense<0.000000e+00> : vector<16x2048xf32>
    %104 = tpu.matmul %101, %103, %cst_37 {dimension_numbers = #tpu.dot_dimension_numbers<[1], [0], [0], [1], [0, 0, 1, 1], [], []>} : vector<16x48xbf16>, vector<48x2048xbf16>, vector<16x2048xf32> -> vector<16x2048xf32>
    %c0_38 = arith.constant 0 : index
    %c0_39 = arith.constant 0 : index
    %c0_40 = arith.constant 0 : index
    %105 = vector.load %arg12[%c0_38, %c0_39, %c0_40] : memref<2x1x2048xf32, #tpu.memory_space<vmem>>, vector<1x1x2048xf32>
    %106 = vector.shape_cast %105 : vector<1x1x2048xf32> to vector<1x2048xf32>
    %107 = vector.broadcast %106 : vector<1x2048xf32> to vector<16x2048xf32>
    %108 = arith.addf %104, %107 : vector<16x2048xf32>
    %cst_41 = arith.constant 0.000000e+00 : f32
    %109 = vector.broadcast %cst_41 : f32 to vector<16x2048xf32>
    %110 = arith.maximumf %108, %109 : vector<16x2048xf32>
    %111 = arith.truncf %110 : vector<16x2048xf32> to vector<16x2048xbf16>
    %c0_42 = arith.constant 0 : index
    %c0_43 = arith.constant 0 : index
    %c0_44 = arith.constant 0 : index
    %112 = vector.load %arg13[%c0_42, %c0_43, %c0_44] : memref<2x2048x48xbf16, #tpu.memory_space<vmem>>, vector<1x2048x48xbf16>
    %113 = vector.shape_cast %112 : vector<1x2048x48xbf16> to vector<2048x48xbf16>
    %cst_45 = arith.constant dense<0.000000e+00> : vector<16x48xf32>
    %114 = tpu.matmul %111, %113, %cst_45 {dimension_numbers = #tpu.dot_dimension_numbers<[1], [0], [0], [1], [0, 0, 1, 1], [], []>} : vector<16x2048xbf16>, vector<2048x48xbf16>, vector<16x48xf32> -> vector<16x48xf32>
    %c0_46 = arith.constant 0 : index
    %c0_47 = arith.constant 0 : index
    %c0_48 = arith.constant 0 : index
    %115 = vector.load %arg14[%c0_46, %c0_47, %c0_48] : memref<2x1x48xf32, #tpu.memory_space<vmem>>, vector<1x1x48xf32>
    %116 = vector.shape_cast %115 : vector<1x1x48xf32> to vector<1x48xf32>
    %117 = vector.broadcast %116 : vector<1x48xf32> to vector<16x48xf32>
    %118 = arith.addf %114, %117 : vector<16x48xf32>
    %119 = arith.addf %100, %118 : vector<16x48xf32>
    %c0_49 = arith.constant 0 : index
    %c0_50 = arith.constant 0 : index
    %c0_51 = arith.constant 0 : index
    %120 = vector.load %arg15[%c0_49, %c0_50, %c0_51] : memref<2x1x48xf32, #tpu.memory_space<vmem>>, vector<1x1x48xf32>
    %121 = vector.shape_cast %120 : vector<1x1x48xf32> to vector<1x48xf32>
    %c0_52 = arith.constant 0 : index
    %c0_53 = arith.constant 0 : index
    %c0_54 = arith.constant 0 : index
    %122 = vector.load %arg16[%c0_52, %c0_53, %c0_54] : memref<2x1x48xf32, #tpu.memory_space<vmem>>, vector<1x1x48xf32>
    %123 = vector.shape_cast %122 : vector<1x1x48xf32> to vector<1x48xf32>
    %cst_55 = arith.constant dense<0.000000e+00> : vector<16xf32>
    %124 = vector.multi_reduction <add>, %119, %cst_55 [1] : vector<16x48xf32> to vector<16xf32>
    %125 = vector.shape_cast %124 : vector<16xf32> to vector<16x1xf32>
    %cst_56 = arith.constant 4.800000e+01 : f32
    %126 = vector.broadcast %cst_56 : f32 to vector<16x1xf32>
    %127 = arith.divf %125, %126 : vector<16x1xf32>
    %128 = vector.broadcast %127 : vector<16x1xf32> to vector<16x48xf32>
    %129 = arith.subf %119, %128 : vector<16x48xf32>
    %130 = arith.mulf %129, %129 : vector<16x48xf32>
    %cst_57 = arith.constant dense<0.000000e+00> : vector<16xf32>
    %131 = vector.multi_reduction <add>, %130, %cst_57 [1] : vector<16x48xf32> to vector<16xf32>
    %132 = vector.shape_cast %131 : vector<16xf32> to vector<16x1xf32>
    %cst_58 = arith.constant 4.800000e+01 : f32
    %133 = vector.broadcast %cst_58 : f32 to vector<16x1xf32>
    %134 = arith.divf %132, %133 : vector<16x1xf32>
    %135 = vector.broadcast %127 : vector<16x1xf32> to vector<16x48xf32>
    %136 = arith.subf %119, %135 : vector<16x48xf32>
    %cst_59 = arith.constant 9.99999974E-6 : f32
    %137 = vector.broadcast %cst_59 : f32 to vector<16x1xf32>
    %138 = arith.addf %134, %137 : vector<16x1xf32>
    %139 = math.rsqrt %138 : vector<16x1xf32>
    %140 = vector.broadcast %139 : vector<16x1xf32> to vector<16x48xf32>
    %141 = arith.mulf %136, %140 : vector<16x48xf32>
    %142 = vector.broadcast %121 : vector<1x48xf32> to vector<16x48xf32>
    %143 = arith.mulf %141, %142 : vector<16x48xf32>
    %144 = vector.broadcast %123 : vector<1x48xf32> to vector<16x48xf32>
    %145 = arith.addf %143, %144 : vector<16x48xf32>
    %c1 = arith.constant 1 : index
    %c0_60 = arith.constant 0 : index
    %c0_61 = arith.constant 0 : index
    %146 = vector.load %arg5[%c1, %c0_60, %c0_61] : memref<2x48x144xf32, #tpu.memory_space<vmem>>, vector<1x48x144xf32>
    %147 = vector.shape_cast %146 : vector<1x48x144xf32> to vector<48x144xf32>
    %cst_62 = arith.constant dense<0.000000e+00> : vector<16x144xf32>
    %148 = tpu.matmul %145, %147, %cst_62 {dimension_numbers = #tpu.dot_dimension_numbers<[1], [0], [0], [1], [0, 0, 1, 1], [], []>} : vector<16x48xf32>, vector<48x144xf32>, vector<16x144xf32> -> vector<16x144xf32>
    %c1_63 = arith.constant 1 : index
    %c0_64 = arith.constant 0 : index
    %c0_65 = arith.constant 0 : index
    %149 = vector.load %arg6[%c1_63, %c0_64, %c0_65] : memref<2x1x144xf32, #tpu.memory_space<vmem>>, vector<1x1x144xf32>
    %150 = vector.shape_cast %149 : vector<1x1x144xf32> to vector<1x144xf32>
    %151 = vector.broadcast %150 : vector<1x144xf32> to vector<16x144xf32>
    %152 = arith.addf %148, %151 : vector<16x144xf32>
    %153 = vector.extract_strided_slice %152 {offsets = [0, 0], sizes = [16, 48], strides = [1, 1]} : vector<16x144xf32> to vector<16x48xf32>
    %154 = vector.extract_strided_slice %152 {offsets = [0, 48], sizes = [16, 48], strides = [1, 1]} : vector<16x144xf32> to vector<16x48xf32>
    %155 = vector.extract_strided_slice %152 {offsets = [0, 96], sizes = [16, 48], strides = [1, 1]} : vector<16x144xf32> to vector<16x48xf32>
    %156 = vector.extract_strided_slice %153 {offsets = [0, 0], sizes = [8, 48], strides = [1, 1]} : vector<16x48xf32> to vector<8x48xf32>
    %157 = vector.extract_strided_slice %153 {offsets = [8, 0], sizes = [8, 48], strides = [1, 1]} : vector<16x48xf32> to vector<8x48xf32>
    %158 = vector.extract_strided_slice %154 {offsets = [0, 0], sizes = [8, 48], strides = [1, 1]} : vector<16x48xf32> to vector<8x48xf32>
    %159 = vector.extract_strided_slice %154 {offsets = [8, 0], sizes = [8, 48], strides = [1, 1]} : vector<16x48xf32> to vector<8x48xf32>
    %160 = vector.extract_strided_slice %155 {offsets = [0, 0], sizes = [8, 48], strides = [1, 1]} : vector<16x48xf32> to vector<8x48xf32>
    %161 = vector.extract_strided_slice %155 {offsets = [8, 0], sizes = [8, 48], strides = [1, 1]} : vector<16x48xf32> to vector<8x48xf32>
    %162 = arith.mulf %156, %158 : vector<8x48xf32>
    %163 = arith.mulf %156, %159 : vector<8x48xf32>
    %164 = arith.mulf %157, %158 : vector<8x48xf32>
    %165 = arith.mulf %157, %159 : vector<8x48xf32>
    %166 = tpu.concatenate %162, %163, %164, %165 in 0 : vector<8x48xf32>, vector<8x48xf32>, vector<8x48xf32>, vector<8x48xf32> -> vector<32x48xf32>
    %cst_66 = arith.constant dense<0.000000e+00> : vector<32x48xf32>
    %167 = tpu.matmul %166, %15, %cst_66 {dimension_numbers = #tpu.dot_dimension_numbers<[1], [0], [0], [1], [0, 0, 1, 1], [], []>} : vector<32x48xf32>, vector<48x48xf32>, vector<32x48xf32> -> vector<32x48xf32>
    %168 = vector.extract_strided_slice %167 {offsets = [0, 0], sizes = [8, 48], strides = [1, 1]} : vector<32x48xf32> to vector<8x48xf32>
    %169 = vector.extract_strided_slice %167 {offsets = [8, 0], sizes = [8, 48], strides = [1, 1]} : vector<32x48xf32> to vector<8x48xf32>
    %170 = vector.extract_strided_slice %167 {offsets = [16, 0], sizes = [8, 48], strides = [1, 1]} : vector<32x48xf32> to vector<8x48xf32>
    %171 = vector.extract_strided_slice %167 {offsets = [24, 0], sizes = [8, 48], strides = [1, 1]} : vector<32x48xf32> to vector<8x48xf32>
    %172 = arith.maximumf %168, %169 : vector<8x48xf32>
    %173 = arith.maximumf %170, %171 : vector<8x48xf32>
    %174 = arith.subf %168, %172 : vector<8x48xf32>
    %175 = math.exp %174 : vector<8x48xf32>
    %176 = arith.subf %169, %172 : vector<8x48xf32>
    %177 = math.exp %176 : vector<8x48xf32>
    %178 = arith.subf %170, %173 : vector<8x48xf32>
    %179 = math.exp %178 : vector<8x48xf32>
    %180 = arith.subf %171, %173 : vector<8x48xf32>
    %181 = math.exp %180 : vector<8x48xf32>
    %182 = arith.addf %175, %177 : vector<8x48xf32>
    %183 = tpu.reciprocal %182 {approx = true} : vector<8x48xf32> -> vector<8x48xf32>
    %184 = arith.addf %179, %181 : vector<8x48xf32>
    %185 = tpu.reciprocal %184 {approx = true} : vector<8x48xf32> -> vector<8x48xf32>
    %186 = arith.mulf %175, %183 : vector<8x48xf32>
    %187 = arith.mulf %186, %160 : vector<8x48xf32>
    %188 = arith.mulf %177, %183 : vector<8x48xf32>
    %189 = arith.mulf %188, %161 : vector<8x48xf32>
    %190 = arith.addf %187, %189 : vector<8x48xf32>
    %191 = arith.mulf %179, %185 : vector<8x48xf32>
    %192 = arith.mulf %191, %160 : vector<8x48xf32>
    %193 = arith.mulf %181, %185 : vector<8x48xf32>
    %194 = arith.mulf %193, %161 : vector<8x48xf32>
    %195 = arith.addf %192, %194 : vector<8x48xf32>
    %196 = tpu.concatenate %190, %195 in 0 : vector<8x48xf32>, vector<8x48xf32> -> vector<16x48xf32>
    %c1_67 = arith.constant 1 : index
    %c0_68 = arith.constant 0 : index
    %c0_69 = arith.constant 0 : index
    %197 = vector.load %arg7[%c1_67, %c0_68, %c0_69] : memref<2x48x48xf32, #tpu.memory_space<vmem>>, vector<1x48x48xf32>
    %198 = vector.shape_cast %197 : vector<1x48x48xf32> to vector<48x48xf32>
    %cst_70 = arith.constant dense<0.000000e+00> : vector<16x48xf32>
    %199 = tpu.matmul %196, %198, %cst_70 {dimension_numbers = #tpu.dot_dimension_numbers<[1], [0], [0], [1], [0, 0, 1, 1], [], []>} : vector<16x48xf32>, vector<48x48xf32>, vector<16x48xf32> -> vector<16x48xf32>
    %c1_71 = arith.constant 1 : index
    %c0_72 = arith.constant 0 : index
    %c0_73 = arith.constant 0 : index
    %200 = vector.load %arg8[%c1_71, %c0_72, %c0_73] : memref<2x1x48xf32, #tpu.memory_space<vmem>>, vector<1x1x48xf32>
    %201 = vector.shape_cast %200 : vector<1x1x48xf32> to vector<1x48xf32>
    %202 = vector.broadcast %201 : vector<1x48xf32> to vector<16x48xf32>
    %203 = arith.addf %199, %202 : vector<16x48xf32>
    %204 = arith.addf %145, %203 : vector<16x48xf32>
    %c1_74 = arith.constant 1 : index
    %c0_75 = arith.constant 0 : index
    %c0_76 = arith.constant 0 : index
    %205 = vector.load %arg9[%c1_74, %c0_75, %c0_76] : memref<2x1x48xf32, #tpu.memory_space<vmem>>, vector<1x1x48xf32>
    %206 = vector.shape_cast %205 : vector<1x1x48xf32> to vector<1x48xf32>
    %c1_77 = arith.constant 1 : index
    %c0_78 = arith.constant 0 : index
    %c0_79 = arith.constant 0 : index
    %207 = vector.load %arg10[%c1_77, %c0_78, %c0_79] : memref<2x1x48xf32, #tpu.memory_space<vmem>>, vector<1x1x48xf32>
    %208 = vector.shape_cast %207 : vector<1x1x48xf32> to vector<1x48xf32>
    %cst_80 = arith.constant dense<0.000000e+00> : vector<16xf32>
    %209 = vector.multi_reduction <add>, %204, %cst_80 [1] : vector<16x48xf32> to vector<16xf32>
    %210 = vector.shape_cast %209 : vector<16xf32> to vector<16x1xf32>
    %cst_81 = arith.constant 4.800000e+01 : f32
    %211 = vector.broadcast %cst_81 : f32 to vector<16x1xf32>
    %212 = arith.divf %210, %211 : vector<16x1xf32>
    %213 = vector.broadcast %212 : vector<16x1xf32> to vector<16x48xf32>
    %214 = arith.subf %204, %213 : vector<16x48xf32>
    %215 = arith.mulf %214, %214 : vector<16x48xf32>
    %cst_82 = arith.constant dense<0.000000e+00> : vector<16xf32>
    %216 = vector.multi_reduction <add>, %215, %cst_82 [1] : vector<16x48xf32> to vector<16xf32>
    %217 = vector.shape_cast %216 : vector<16xf32> to vector<16x1xf32>
    %cst_83 = arith.constant 4.800000e+01 : f32
    %218 = vector.broadcast %cst_83 : f32 to vector<16x1xf32>
    %219 = arith.divf %217, %218 : vector<16x1xf32>
    %220 = vector.broadcast %212 : vector<16x1xf32> to vector<16x48xf32>
    %221 = arith.subf %204, %220 : vector<16x48xf32>
    %cst_84 = arith.constant 9.99999974E-6 : f32
    %222 = vector.broadcast %cst_84 : f32 to vector<16x1xf32>
    %223 = arith.addf %219, %222 : vector<16x1xf32>
    %224 = math.rsqrt %223 : vector<16x1xf32>
    %225 = vector.broadcast %224 : vector<16x1xf32> to vector<16x48xf32>
    %226 = arith.mulf %221, %225 : vector<16x48xf32>
    %227 = vector.broadcast %206 : vector<1x48xf32> to vector<16x48xf32>
    %228 = arith.mulf %226, %227 : vector<16x48xf32>
    %229 = vector.broadcast %208 : vector<1x48xf32> to vector<16x48xf32>
    %230 = arith.addf %228, %229 : vector<16x48xf32>
    %231 = arith.truncf %230 : vector<16x48xf32> to vector<16x48xbf16>
    %c1_85 = arith.constant 1 : index
    %c0_86 = arith.constant 0 : index
    %c0_87 = arith.constant 0 : index
    %232 = vector.load %arg11[%c1_85, %c0_86, %c0_87] : memref<2x48x2048xbf16, #tpu.memory_space<vmem>>, vector<1x48x2048xbf16>
    %233 = vector.shape_cast %232 : vector<1x48x2048xbf16> to vector<48x2048xbf16>
    %cst_88 = arith.constant dense<0.000000e+00> : vector<16x2048xf32>
    %234 = tpu.matmul %231, %233, %cst_88 {dimension_numbers = #tpu.dot_dimension_numbers<[1], [0], [0], [1], [0, 0, 1, 1], [], []>} : vector<16x48xbf16>, vector<48x2048xbf16>, vector<16x2048xf32> -> vector<16x2048xf32>
    %c1_89 = arith.constant 1 : index
    %c0_90 = arith.constant 0 : index
    %c0_91 = arith.constant 0 : index
    %235 = vector.load %arg12[%c1_89, %c0_90, %c0_91] : memref<2x1x2048xf32, #tpu.memory_space<vmem>>, vector<1x1x2048xf32>
    %236 = vector.shape_cast %235 : vector<1x1x2048xf32> to vector<1x2048xf32>
    %237 = vector.broadcast %236 : vector<1x2048xf32> to vector<16x2048xf32>
    %238 = arith.addf %234, %237 : vector<16x2048xf32>
    %cst_92 = arith.constant 0.000000e+00 : f32
    %239 = vector.broadcast %cst_92 : f32 to vector<16x2048xf32>
    %240 = arith.maximumf %238, %239 : vector<16x2048xf32>
    %241 = arith.truncf %240 : vector<16x2048xf32> to vector<16x2048xbf16>
    %c1_93 = arith.constant 1 : index
    %c0_94 = arith.constant 0 : index
    %c0_95 = arith.constant 0 : index
    %242 = vector.load %arg13[%c1_93, %c0_94, %c0_95] : memref<2x2048x48xbf16, #tpu.memory_space<vmem>>, vector<1x2048x48xbf16>
    %243 = vector.shape_cast %242 : vector<1x2048x48xbf16> to vector<2048x48xbf16>
    %cst_96 = arith.constant dense<0.000000e+00> : vector<16x48xf32>
    %244 = tpu.matmul %241, %243, %cst_96 {dimension_numbers = #tpu.dot_dimension_numbers<[1], [0], [0], [1], [0, 0, 1, 1], [], []>} : vector<16x2048xbf16>, vector<2048x48xbf16>, vector<16x48xf32> -> vector<16x48xf32>
    %c1_97 = arith.constant 1 : index
    %c0_98 = arith.constant 0 : index
    %c0_99 = arith.constant 0 : index
    %245 = vector.load %arg14[%c1_97, %c0_98, %c0_99] : memref<2x1x48xf32, #tpu.memory_space<vmem>>, vector<1x1x48xf32>
    %246 = vector.shape_cast %245 : vector<1x1x48xf32> to vector<1x48xf32>
    %247 = vector.broadcast %246 : vector<1x48xf32> to vector<16x48xf32>
    %248 = arith.addf %244, %247 : vector<16x48xf32>
    %249 = arith.addf %230, %248 : vector<16x48xf32>
    %c1_100 = arith.constant 1 : index
    %c0_101 = arith.constant 0 : index
    %c0_102 = arith.constant 0 : index
    %250 = vector.load %arg15[%c1_100, %c0_101, %c0_102] : memref<2x1x48xf32, #tpu.memory_space<vmem>>, vector<1x1x48xf32>
    %251 = vector.shape_cast %250 : vector<1x1x48xf32> to vector<1x48xf32>
    %c1_103 = arith.constant 1 : index
    %c0_104 = arith.constant 0 : index
    %c0_105 = arith.constant 0 : index
    %252 = vector.load %arg16[%c1_103, %c0_104, %c0_105] : memref<2x1x48xf32, #tpu.memory_space<vmem>>, vector<1x1x48xf32>
    %253 = vector.shape_cast %252 : vector<1x1x48xf32> to vector<1x48xf32>
    %cst_106 = arith.constant dense<0.000000e+00> : vector<16xf32>
    %254 = vector.multi_reduction <add>, %249, %cst_106 [1] : vector<16x48xf32> to vector<16xf32>
    %255 = vector.shape_cast %254 : vector<16xf32> to vector<16x1xf32>
    %cst_107 = arith.constant 4.800000e+01 : f32
    %256 = vector.broadcast %cst_107 : f32 to vector<16x1xf32>
    %257 = arith.divf %255, %256 : vector<16x1xf32>
    %258 = vector.broadcast %257 : vector<16x1xf32> to vector<16x48xf32>
    %259 = arith.subf %249, %258 : vector<16x48xf32>
    %260 = arith.mulf %259, %259 : vector<16x48xf32>
    %cst_108 = arith.constant dense<0.000000e+00> : vector<16xf32>
    %261 = vector.multi_reduction <add>, %260, %cst_108 [1] : vector<16x48xf32> to vector<16xf32>
    %262 = vector.shape_cast %261 : vector<16xf32> to vector<16x1xf32>
    %cst_109 = arith.constant 4.800000e+01 : f32
    %263 = vector.broadcast %cst_109 : f32 to vector<16x1xf32>
    %264 = arith.divf %262, %263 : vector<16x1xf32>
    %265 = vector.broadcast %257 : vector<16x1xf32> to vector<16x48xf32>
    %266 = arith.subf %249, %265 : vector<16x48xf32>
    %cst_110 = arith.constant 9.99999974E-6 : f32
    %267 = vector.broadcast %cst_110 : f32 to vector<16x1xf32>
    %268 = arith.addf %264, %267 : vector<16x1xf32>
    %269 = math.rsqrt %268 : vector<16x1xf32>
    %270 = vector.broadcast %269 : vector<16x1xf32> to vector<16x48xf32>
    %271 = arith.mulf %266, %270 : vector<16x48xf32>
    %272 = vector.broadcast %251 : vector<1x48xf32> to vector<16x48xf32>
    %273 = arith.mulf %271, %272 : vector<16x48xf32>
    %274 = vector.broadcast %253 : vector<1x48xf32> to vector<16x48xf32>
    %275 = arith.addf %273, %274 : vector<16x48xf32>
    %276 = vector.extract_strided_slice %275 {offsets = [0, 0], sizes = [8, 48], strides = [1, 1]} : vector<16x48xf32> to vector<8x48xf32>
    %cst_111 = arith.constant dense<0xFF800000> : vector<48xf32>
    %277 = vector.multi_reduction <maximumf>, %276, %cst_111 [0] : vector<8x48xf32> to vector<48xf32>
    %278 = vector.shape_cast %277 : vector<48xf32> to vector<1x48xf32>
    %279 = vector.extract_strided_slice %275 {offsets = [8, 0], sizes = [8, 48], strides = [1, 1]} : vector<16x48xf32> to vector<8x48xf32>
    %cst_112 = arith.constant dense<0xFF800000> : vector<48xf32>
    %280 = vector.multi_reduction <maximumf>, %279, %cst_112 [0] : vector<8x48xf32> to vector<48xf32>
    %281 = vector.shape_cast %280 : vector<48xf32> to vector<1x48xf32>
    %282 = tpu.concatenate %278, %281 in 0 : vector<1x48xf32>, vector<1x48xf32> -> vector<2x48xf32>
    %c0_113 = arith.constant 0 : index
    %c0_114 = arith.constant 0 : index
    %283 = vector.load %arg17[%c0_113, %c0_114] : memref<48x10xf32, #tpu.memory_space<vmem>>, vector<48x10xf32>
    %cst_115 = arith.constant dense<0.000000e+00> : vector<2x10xf32>
    %284 = tpu.matmul %282, %283, %cst_115 {dimension_numbers = #tpu.dot_dimension_numbers<[1], [0], [0], [1], [0, 0, 1, 1], [], []>} : vector<2x48xf32>, vector<48x10xf32>, vector<2x10xf32> -> vector<2x10xf32>
    %c0_116 = arith.constant 0 : index
    %c0_117 = arith.constant 0 : index
    %285 = vector.load %arg18[%c0_116, %c0_117] : memref<1x10xf32, #tpu.memory_space<vmem>>, vector<1x10xf32>
    %286 = vector.broadcast %285 : vector<1x10xf32> to vector<2x10xf32>
    %287 = arith.addf %284, %286 : vector<2x10xf32>
    %c0_118 = arith.constant 0 : index
    %c0_119 = arith.constant 0 : index
    %288 = vector.load %arg19[%c0_118, %c0_119] : memref<2x10xf32, #tpu.memory_space<vmem>>, vector<2x10xf32>
    tpu.vector_store %arg19[%c0_118, %c0_119], %287 {strides = array<i32>} : memref<2x10xf32, #tpu.memory_space<vmem>>, vector<2x10xf32>,
    return
  }
  func.func @transform_0(%arg0: i32) -> (i32, i32) {
    %c0_i32 = arith.constant 0 : i32
    %c0_i32_0 = arith.constant 0 : i32
    %c0_i32_1 = arith.constant 0 : i32
    return %c0_i32, %c0_i32_0 : i32, i32
  }
  func.func @transform_1(%arg0: i32) -> (i32, i32) {
    %c0_i32 = arith.constant 0 : i32
    %c0_i32_0 = arith.constant 0 : i32
    %c0_i32_1 = arith.constant 0 : i32
    return %c0_i32, %c0_i32_0 : i32, i32
  }
  func.func @transform_2(%arg0: i32) -> (i32, i32) {
    %c0_i32 = arith.constant 0 : i32
    %c0_i32_0 = arith.constant 0 : i32
    %c0_i32_1 = arith.constant 0 : i32
    return %c0_i32, %c0_i32_0 : i32, i32
  }
  func.func @transform_3(%arg0: i32) -> (i32, i32) {
    %c0_i32 = arith.constant 0 : i32
    %c0_i32_0 = arith.constant 0 : i32
    %c0_i32_1 = arith.constant 0 : i32
    return %c0_i32, %c0_i32_0 : i32, i32
  }
  func.func @transform_4(%arg0: i32) -> (i32, i32, i32) {
    %c0_i32 = arith.constant 0 : i32
    %c0_i32_0 = arith.constant 0 : i32
    %c0_i32_1 = arith.constant 0 : i32
    %c0_i32_2 = arith.constant 0 : i32
    return %c0_i32, %c0_i32_0, %c0_i32_1 : i32, i32, i32
  }
  func.func @transform_5(%arg0: i32) -> (i32, i32, i32) {
    %c0_i32 = arith.constant 0 : i32
    %c0_i32_0 = arith.constant 0 : i32
    %c0_i32_1 = arith.constant 0 : i32
    %c0_i32_2 = arith.constant 0 : i32
    return %c0_i32, %c0_i32_0, %c0_i32_1 : i32, i32, i32
  }
  func.func @transform_6(%arg0: i32) -> (i32, i32, i32) {
    %c0_i32 = arith.constant 0 : i32
    %c0_i32_0 = arith.constant 0 : i32
    %c0_i32_1 = arith.constant 0 : i32
    %c0_i32_2 = arith.constant 0 : i32
    return %c0_i32, %c0_i32_0, %c0_i32_1 : i32, i32, i32
  }
  func.func @transform_7(%arg0: i32) -> (i32, i32, i32) {
    %c0_i32 = arith.constant 0 : i32
    %c0_i32_0 = arith.constant 0 : i32
    %c0_i32_1 = arith.constant 0 : i32
    %c0_i32_2 = arith.constant 0 : i32
    return %c0_i32, %c0_i32_0, %c0_i32_1 : i32, i32, i32
  }
  func.func @transform_8(%arg0: i32) -> (i32, i32, i32) {
    %c0_i32 = arith.constant 0 : i32
    %c0_i32_0 = arith.constant 0 : i32
    %c0_i32_1 = arith.constant 0 : i32
    %c0_i32_2 = arith.constant 0 : i32
    return %c0_i32, %c0_i32_0, %c0_i32_1 : i32, i32, i32
  }
  func.func @transform_9(%arg0: i32) -> (i32, i32, i32) {
    %c0_i32 = arith.constant 0 : i32
    %c0_i32_0 = arith.constant 0 : i32
    %c0_i32_1 = arith.constant 0 : i32
    %c0_i32_2 = arith.constant 0 : i32
    return %c0_i32, %c0_i32_0, %c0_i32_1 : i32, i32, i32
  }
  func.func @transform_10(%arg0: i32) -> (i32, i32, i32) {
    %c0_i32 = arith.constant 0 : i32
    %c0_i32_0 = arith.constant 0 : i32
    %c0_i32_1 = arith.constant 0 : i32
    %c0_i32_2 = arith.constant 0 : i32
    return %c0_i32, %c0_i32_0, %c0_i32_1 : i32, i32, i32
  }
  func.func @transform_11(%arg0: i32) -> (i32, i32, i32) {
    %c0_i32 = arith.constant 0 : i32
    %c0_i32_0 = arith.constant 0 : i32
    %c0_i32_1 = arith.constant 0 : i32
    %c0_i32_2 = arith.constant 0 : i32
    return %c0_i32, %c0_i32_0, %c0_i32_1 : i32, i32, i32
  }
  func.func @transform_12(%arg0: i32) -> (i32, i32, i32) {
    %c0_i32 = arith.constant 0 : i32
    %c0_i32_0 = arith.constant 0 : i32
    %c0_i32_1 = arith.constant 0 : i32
    %c0_i32_2 = arith.constant 0 : i32
    return %c0_i32, %c0_i32_0, %c0_i32_1 : i32, i32, i32
  }
  func.func @transform_13(%arg0: i32) -> (i32, i32, i32) {
    %c0_i32 = arith.constant 0 : i32
    %c0_i32_0 = arith.constant 0 : i32
    %c0_i32_1 = arith.constant 0 : i32
    %c0_i32_2 = arith.constant 0 : i32
    return %c0_i32, %c0_i32_0, %c0_i32_1 : i32, i32, i32
  }
  func.func @transform_14(%arg0: i32) -> (i32, i32, i32) {
    %c0_i32 = arith.constant 0 : i32
    %c0_i32_0 = arith.constant 0 : i32
    %c0_i32_1 = arith.constant 0 : i32
    %c0_i32_2 = arith.constant 0 : i32
    return %c0_i32, %c0_i32_0, %c0_i32_1 : i32, i32, i32
  }
  func.func @transform_15(%arg0: i32) -> (i32, i32, i32) {
    %c0_i32 = arith.constant 0 : i32
    %c0_i32_0 = arith.constant 0 : i32
    %c0_i32_1 = arith.constant 0 : i32
    %c0_i32_2 = arith.constant 0 : i32
    return %c0_i32, %c0_i32_0, %c0_i32_1 : i32, i32, i32
  }
  func.func @transform_16(%arg0: i32) -> (i32, i32) {
    %c0_i32 = arith.constant 0 : i32
    %c0_i32_0 = arith.constant 0 : i32
    %c0_i32_1 = arith.constant 0 : i32
    return %c0_i32, %c0_i32_0 : i32, i32
  }
  func.func @transform_17(%arg0: i32) -> (i32, i32) {
    %c0_i32 = arith.constant 0 : i32
    %c0_i32_0 = arith.constant 0 : i32
    %c0_i32_1 = arith.constant 0 : i32
    return %c0_i32, %c0_i32_0 : i32, i32
  }
  func.func @transform_18(%arg0: i32) -> (i32, i32) {
    %c0_i32 = arith.constant 0 : i32
    %c0_i32_0 = arith.constant 0 : i32
    %c0_i32_1 = arith.constant 0 : i32
    return %c0_i32, %c0_i32_0 : i32, i32
  }
}

</mosaic_0001>

<llo_original>
// kernel: audio_trans_forward.1
$region0: #{audio_trans_forward.1}
  #allocation0 [shape = 'u32[]', space=smem, size = 0x4, offset = 0x4, fixed_abs, tag = 'smem constant byte address 0x4 - core index']
  #allocation1 [shape = 'u32[144,128]{1,0:T(1,128)}', space=vmem, size = 0x12000, scoped, tag = 'internal scratch']
  %s0 = inlined_call_operand.vmem [shape: f32[64,320], index: 0, kind: input, shape index: {}]
  %s1 = inlined_call_operand.vmem [shape: f32[320,48], index: 1, kind: input, shape index: {}]
  %s2 = inlined_call_operand.vmem [shape: f32[1,48], index: 2, kind: input, shape index: {}]
  %s3 = inlined_call_operand.vmem [shape: f32[48,48], index: 3, kind: input, shape index: {}]
  %s4 = inlined_call_operand.vmem [shape: f32[2,48,144], index: 4, kind: input, shape index: {}]
  %s5 = inlined_call_operand.vmem [shape: f32[2,1,144], index: 5, kind: input, shape index: {}]
  %s6 = inlined_call_operand.vmem [shape: f32[2,48,48], index: 6, kind: input, shape index: {}]
  %s7 = inlined_call_operand.vmem [shape: f32[2,1,48], index: 7, kind: input, shape index: {}]
  %s8 = inlined_call_operand.vmem [shape: f32[2,1,48], index: 8, kind: input, shape index: {}]
  %s9 = inlined_call_operand.vmem [shape: f32[2,1,48], index: 9, kind: input, shape index: {}]
  %s10 = inlined_call_operand.vmem [shape: bf16[2,48,2048], index: 10, kind: input, shape index: {}]
  %s11 = inlined_call_operand.vmem [shape: f32[2,1,2048], index: 11, kind: input, shape index: {}]
  %s12 = inlined_call_operand.vmem [shape: bf16[2,2048,48], index: 12, kind: input, shape index: {}]
  %s13 = inlined_call_operand.vmem [shape: f32[2,1,48], index: 13, kind: input, shape index: {}]
  %s14 = inlined_call_operand.vmem [shape: f32[2,1,48], index: 14, kind: input, shape index: {}]
  %s15 = inlined_call_operand.vmem [shape: f32[2,1,48], index: 15, kind: input, shape index: {}]
  %s16 = inlined_call_operand.vmem [shape: f32[48,10], index: 16, kind: input, shape index: {}]
  %s17 = inlined_call_operand.vmem [shape: f32[1,10], index: 17, kind: input, shape index: {}]
  %s18 = inlined_call_operand.hbm [shape: f32[2,10], index: 18, kind: output, shape index: {}]
  %s19 = sld [smem:[#allocation0]]
  $region82: #{audio_trans_forward.1} parent=0
    _
  %s21 = ssub.s32 1, %s19
  %s22 = scalar_select 0, %s21, %s19
  $region1: #{audio_trans_forward.1} parent=0
    #allocation2 [shape = 'u8[1024]{0}', space=vmem, size = 0x400, scoped, tag = 'output window, operand 0, single buffered']
    #allocation3 [shape = 's32[1]{0}', space=sflag, size = 0x4, scoped, tag = 'scoped memory for audio_trans_forward.1']
    %23 = vsyncpa [#allocation3], 0
    // Predicated region
    $region2: #{audio_trans_forward.1} parent=1 // pred_check
      _
    $region3: #{audio_trans_forward.1} parent=1 // pred_check_branch
      %25 = sbr.rel (0) target = $region5
    $region4: #{audio_trans_forward.1} parent=1 // pred_region
      _
    $region5: #{audio_trans_forward.1} parent=1 // pred_fallthru
      _
    // Predicated region
    $region6: #{audio_trans_forward.1} parent=1 // pred_check
      _
    $region7: #{audio_trans_forward.1} parent=1 // pred_check_branch
      %27 = sbr.rel (0) target = $region9
    $region8: #{audio_trans_forward.1} parent=1 // pred_region
      _
    $region9: #{audio_trans_forward.1} parent=1 // pred_fallthru
      _
    // Predicated region
    $region10: #{audio_trans_forward.1} parent=1 // pred_check
      _
    $region11: #{audio_trans_forward.1} parent=1 // pred_check_branch
      %29 = sbr.rel (0) target = $region13
    $region12: #{audio_trans_forward.1} parent=1 // pred_region
      _
    $region13: #{audio_trans_forward.1} parent=1 // pred_fallthru
      _
    // Predicated region
    $region14: #{audio_trans_forward.1} parent=1 // pred_check
      _
    $region15: #{audio_trans_forward.1} parent=1 // pred_check_branch
      %31 = sbr.rel (0) target = $region17
    $region16: #{audio_trans_forward.1} parent=1 // pred_region
      _
    $region17: #{audio_trans_forward.1} parent=1 // pred_fallthru
      _
    // Predicated region
    $region18: #{audio_trans_forward.1} parent=1 // pred_check
      _
    $region19: #{audio_trans_forward.1} parent=1 // pred_check_branch
      %33 = sbr.rel (0) target = $region21
    $region20: #{audio_trans_forward.1} parent=1 // pred_region
      _
    $region21: #{audio_trans_forward.1} parent=1 // pred_fallthru
      _
    // Predicated region
    $region22: #{audio_trans_forward.1} parent=1 // pred_check
      _
    $region23: #{audio_trans_forward.1} parent=1 // pred_check_branch
      %35 = sbr.rel (0) target = $region25
    $region24: #{audio_trans_forward.1} parent=1 // pred_region
      _
    $region25: #{audio_trans_forward.1} parent=1 // pred_fallthru
      _
    // Predicated region
    $region26: #{audio_trans_forward.1} parent=1 // pred_check
      _
    $region27: #{audio_trans_forward.1} parent=1 // pred_check_branch
      %37 = sbr.rel (0) target = $region29
    $region28: #{audio_trans_forward.1} parent=1 // pred_region
      _
    $region29: #{audio_trans_forward.1} parent=1 // pred_fallthru
      _
    // Predicated region
    $region30: #{audio_trans_forward.1} parent=1 // pred_check
      _
    $region31: #{audio_trans_forward.1} parent=1 // pred_check_branch
      %39 = sbr.rel (0) target = $region33
    $region32: #{audio_trans_forward.1} parent=1 // pred_region
      _
    $region33: #{audio_trans_forward.1} parent=1 // pred_fallthru
      _
    // Predicated region
    $region34: #{audio_trans_forward.1} parent=1 // pred_check
      _
    $region35: #{audio_trans_forward.1} parent=1 // pred_check_branch
      %41 = sbr.rel (0) target = $region37
    $region36: #{audio_trans_forward.1} parent=1 // pred_region
      _
    $region37: #{audio_trans_forward.1} parent=1 // pred_fallthru
      _
    // Predicated region
    $region38: #{audio_trans_forward.1} parent=1 // pred_check
      _
    $region39: #{audio_trans_forward.1} parent=1 // pred_check_branch
      %43 = sbr.rel (0) target = $region41
    $region40: #{audio_trans_forward.1} parent=1 // pred_region
      _
    $region41: #{audio_trans_forward.1} parent=1 // pred_fallthru
      _
    // Predicated region
    $region42: #{audio_trans_forward.1} parent=1 // pred_check
      _
    $region43: #{audio_trans_forward.1} parent=1 // pred_check_branch
      %45 = sbr.rel (0) target = $region45
    $region44: #{audio_trans_forward.1} parent=1 // pred_region
      _
    $region45: #{audio_trans_forward.1} parent=1 // pred_fallthru
      _
    // Predicated region
    $region46: #{audio_trans_forward.1} parent=1 // pred_check
      _
    $region47: #{audio_trans_forward.1} parent=1 // pred_check_branch
      %47 = sbr.rel (0) target = $region49
    $region48: #{audio_trans_forward.1} parent=1 // pred_region
      _
    $region49: #{audio_trans_forward.1} parent=1 // pred_fallthru
      _
    // Predicated region
    $region50: #{audio_trans_forward.1} parent=1 // pred_check
      _
    $region51: #{audio_trans_forward.1} parent=1 // pred_check_branch
      %49 = sbr.rel (0) target = $region53
    $region52: #{audio_trans_forward.1} parent=1 // pred_region
      _
    $region53: #{audio_trans_forward.1} parent=1 // pred_fallthru
      _
    // Predicated region
    $region54: #{audio_trans_forward.1} parent=1 // pred_check
      _
    $region55: #{audio_trans_forward.1} parent=1 // pred_check_branch
      %51 = sbr.rel (0) target = $region57
    $region56: #{audio_trans_forward.1} parent=1 // pred_region
      _
    $region57: #{audio_trans_forward.1} parent=1 // pred_fallthru
      _
    // Predicated region
    $region58: #{audio_trans_forward.1} parent=1 // pred_check
      _
    $region59: #{audio_trans_forward.1} parent=1 // pred_check_branch
      %53 = sbr.rel (0) target = $region61
    $region60: #{audio_trans_forward.1} parent=1 // pred_region
      _
    $region61: #{audio_trans_forward.1} parent=1 // pred_fallthru
      _
    // Predicated region
    $region62: #{audio_trans_forward.1} parent=1 // pred_check
      _
    $region63: #{audio_trans_forward.1} parent=1 // pred_check_branch
      %55 = sbr.rel (0) target = $region65
    $region64: #{audio_trans_forward.1} parent=1 // pred_region
      _
    $region65: #{audio_trans_forward.1} parent=1 // pred_fallthru
      _
    // Predicated region
    $region66: #{audio_trans_forward.1} parent=1 // pred_check
      _
    $region67: #{audio_trans_forward.1} parent=1 // pred_check_branch
      %57 = sbr.rel (0) target = $region69
    $region68: #{audio_trans_forward.1} parent=1 // pred_region
      _
    $region69: #{audio_trans_forward.1} parent=1 // pred_fallthru
      _
    // Predicated region
    $region70: #{audio_trans_forward.1} parent=1 // pred_check
      _
    $region71: #{audio_trans_forward.1} parent=1 // pred_check_branch
      %59 = sbr.rel (0) target = $region73
    $region72: #{audio_trans_forward.1} parent=1 // pred_region
      _
    $region73: #{audio_trans_forward.1} parent=1 // pred_fallthru
      _
    %v61 = vld [vmem:[%s0] sm:$0xff]
    %v62 = vld [vmem:[%s0 + $0x8] sm:$0xff]
    %v63 = vld [vmem:[%s0 + $0x10] sm:$0xff]
    %v64 = vld [vmem:[%s0 + $0x18] sm:$0xff]
    %v65 = vld [vmem:[%s0 + $0x20] sm:$0xff]
    %v66 = vld [vmem:[%s0 + $0x28] sm:$0xff]
    %v67 = vld [vmem:[%s0 + $0x30] sm:$0xff]
    %v68 = vld [vmem:[%s0 + $0x38] sm:$0xff]
    %v69 = vld [vmem:[%s0 + $0x40] sm:$0xff]
    %v70 = vld [vmem:[%s0 + $0x48] sm:$0xff]
    %v71 = vld [vmem:[%s0 + $0x50] sm:$0xff]
    %v72 = vld [vmem:[%s0 + $0x58] sm:$0xff]
    %v73 = vld [vmem:[%s0 + $0x60] sm:$0xff]
    %v74 = vld [vmem:[%s0 + $0x68] sm:$0xff]
    %v75 = vld [vmem:[%s0 + $0x70] sm:$0xff]
    %v76 = vld [vmem:[%s0 + $0x78] sm:$0xff]
    %v77 = vld [vmem:[%s0 + $0x80] sm:$0xff]
    %v78 = vld [vmem:[%s0 + $0x88] sm:$0xff]
    %v79 = vld [vmem:[%s0 + $0x90] sm:$0xff]
    %v80 = vld [vmem:[%s0 + $0x98] sm:$0xff]
    %v81 = vld [vmem:[%s0 + $0xa0] sm:$0xff]
    %v82 = vld [vmem:[%s0 + $0xa8] sm:$0xff]
    %v83 = vld [vmem:[%s0 + $0xb0] sm:$0xff]
    %v84 = vld [vmem:[%s0 + $0xb8] sm:$0xff]
    %v85 = vld [vmem:[%s1] sm:$0xff]
    %v86 = vld [vmem:[%s1 + $0x8] sm:$0xff]
    %v87 = vld [vmem:[%s1 + $0x10] sm:$0xff]
    %v88 = vld [vmem:[%s1 + $0x18] sm:$0xff]
    %v89 = vld [vmem:[%s1 + $0x20] sm:$0xff]
    %v90 = vld [vmem:[%s1 + $0x28] sm:$0xff]
    %v91 = vld [vmem:[%s1 + $0x30] sm:$0xff]
    %v92 = vld [vmem:[%s1 + $0x38] sm:$0xff]
    %v93 = vld [vmem:[%s1 + $0x40] sm:$0xff]
    %v94 = vld [vmem:[%s1 + $0x48] sm:$0xff]
    %v95 = vld [vmem:[%s1 + $0x50] sm:$0xff]
    %v96 = vld [vmem:[%s1 + $0x58] sm:$0xff]
    %v97 = vld [vmem:[%s1 + $0x60] sm:$0xff]
    %v98 = vld [vmem:[%s1 + $0x68] sm:$0xff]
    %v99 = vld [vmem:[%s1 + $0x70] sm:$0xff]
    %v100 = vld [vmem:[%s1 + $0x78] sm:$0xff]
    %v101 = vld [vmem:[%s1 + $0x80] sm:$0xff]
    %v102 = vld [vmem:[%s1 + $0x88] sm:$0xff]
    %v103 = vld [vmem:[%s1 + $0x90] sm:$0xff]
    %v104 = vld [vmem:[%s1 + $0x98] sm:$0xff]
    %v105 = vld [vmem:[%s1 + $0xa0] sm:$0xff]
    %v106 = vld [vmem:[%s1 + $0xa8] sm:$0xff]
    %v107 = vld [vmem:[%s1 + $0xb0] sm:$0xff]
    %v108 = vld [vmem:[%s1 + $0xb8] sm:$0xff]
    %v109 = vld [vmem:[%s1 + $0xc0] sm:$0xff]
    %v110 = vld [vmem:[%s1 + $0xc8] sm:$0xff]
    %v111 = vld [vmem:[%s1 + $0xd0] sm:$0xff]
    %v112 = vld [vmem:[%s1 + $0xd8] sm:$0xff]
    %v113 = vld [vmem:[%s1 + $0xe0] sm:$0xff]
    %v114 = vld [vmem:[%s1 + $0xe8] sm:$0xff]
    %v115 = vld [vmem:[%s1 + $0xf0] sm:$0xff]
    %v116 = vld [vmem:[%s1 + $0xf8] sm:$0xff]
    %v117 = vld [vmem:[%s1 + $0x100] sm:$0xff]
    %v118 = vld [vmem:[%s1 + $0x108] sm:$0xff]
    %v119 = vld [vmem:[%s1 + $0x110] sm:$0xff]
    %v120 = vld [vmem:[%s1 + $0x118] sm:$0xff]
    %v121 = vld [vmem:[%s1 + $0x120] sm:$0xff]
    %v122 = vld [vmem:[%s1 + $0x128] sm:$0xff]
    %v123 = vld [vmem:[%s1 + $0x130] sm:$0xff]
    %v124 = vld [vmem:[%s1 + $0x138] sm:$0xff]
    %v125 = vld [vmem:[%s2] sm:$0x1]
    %v127 = vlaneseq
    %v128 = vshrl.u32 %v127, 7
    %v129 = vsub.s32 0, %v128
    %v130 = vrot.slane %v125, %v129
    %vm132 = vcmask 523264
    %v134 = vsel %vm132, %v63, 0
    %v137 = vsel %vm132, %v66, 0
    %v140 = vsel %vm132, %v69, 0
    %v143 = vsel %vm132, %v72, 0
    %v146 = vsel %vm132, %v75, 0
    %v149 = vsel %vm132, %v78, 0
    %v152 = vsel %vm132, %v81, 0
    %v155 = vsel %vm132, %v84, 0
    %157 = vmatprep.subr.mxu0 0.0
    %158 = vmatpush1.msra.mxu0 %v85
    %159 = vmatprep.subr.mxu0 0.0
    %160 = vmatpush1.msra.mxu0 %v86
    %161 = vmatprep.subr.mxu0 0.0
    %162 = vmatpush1.msra.mxu0 %v87
    %163 = vmatprep.subr.mxu0 0.0
    %164 = vmatpush1.msra.mxu0 %v88
    %165 = vmatprep.subr.mxu0 0.0
    %166 = vmatpush1.msra.mxu0 %v89
    %167 = vmatprep.subr.mxu0 0.0
    %168 = vmatpush1.msra.mxu0 %v90
    %169 = vmatprep.subr.mxu0 0.0
    %170 = vmatpush1.msra.mxu0 %v91
    %171 = vmatprep.subr.mxu0 0.0
    %172 = vmatpush1.msra.mxu0 %v92
    %173 = vmatprep.subr.mxu0 0.0
    %174 = vmatpush1.msra.mxu0 %v93
    %175 = vmatprep.subr.mxu0 0.0
    %176 = vmatpush1.msra.mxu0 %v94
    %177 = vmatprep.subr.mxu0 0.0
    %178 = vmatpush1.msra.mxu0 %v95
    %179 = vmatprep.subr.mxu0 0.0
    %180 = vmatpush1.msra.mxu0 %v96
    %181 = vmatprep.subr.mxu0 0.0
    %182 = vmatpush1.msra.mxu0 %v97
    %183 = vmatprep.subr.mxu0 0.0
    %184 = vmatpush1.msra.mxu0 %v98
    %185 = vmatprep.subr.mxu0 0.0
    %186 = vmatpush1.msra.mxu0 %v99
    %187 = vmatprep.subr.mxu0 0.0
    %188 = vmatpush1.msra.mxu0 %v100
    %189 = vmatprep.subr.mxu0 0.0
    %190 = vmatpush1.msra.mxu0 %v101
    %191 = vmatprep.subr.mxu0 0.0
    %192 = vmatpush1.msra.mxu0 %v102
    %193 = vmatprep.subr.mxu0 0.0
    %194 = vmatpush1.msra.mxu0 %v103
    %195 = vmatprep.subr.mxu0 0.0
    %196 = vmatpush1.msra.mxu0 %v104
    %197 = vmatprep.subr.mxu0 0.0
    %198 = vmatpush1.msra.mxu0 %v105
    %199 = vmatprep.subr.mxu0 0.0
    %200 = vmatpush1.msra.mxu0 %v106
    %201 = vmatprep.subr.mxu0 0.0
    %202 = vmatpush1.msra.mxu0 %v107
    %203 = vmatprep.subr.mxu0 0.0
    %204 = vmatpush1.msra.mxu0 %v108
    %205 = vmatprep.subr.mxu0 0.0
    %206 = vmatpush1.msra.mxu0 %v109
    %207 = vmatprep.subr.mxu0 0.0
    %208 = vmatpush1.msra.mxu0 %v110
    %209 = vmatprep.subr.mxu0 0.0
    %210 = vmatpush1.msra.mxu0 %v111
    %211 = vmatprep.subr.mxu0 0.0
    %212 = vmatpush1.msra.mxu0 %v112
    %213 = vmatprep.subr.mxu0 0.0
    %214 = vmatpush1.msra.mxu0 %v113
    %215 = vmatprep.subr.mxu0 0.0
    %216 = vmatpush1.msra.mxu0 %v114
    %217 = vmatprep.subr.mxu0 0.0
    %218 = vmatpush1.msra.mxu0 %v115
    %219 = vmatprep.subr.mxu0 0.0
    %220 = vmatpush1.msra.mxu0 %v116
    %221 = vmatprep.mubr.f32.mxu0 %v62
    %222 = vmatmul.mubr.f32.gmra.mrb[0].mxu0 %v61
    %v223 = vpop.f32.mrb[0].mxu0
    %v224 = vadd.f32 %v130, %v223
    %v225 = vpop.f32.mrb[0].mxu0
    %226 = vmatprep.mubr.f32.mxu0 %v65
    %227 = vmatmul.mubr.f32.gmra.mrb[0].mxu0 %v64
    %v228 = vpop.f32.mrb[0].mxu0
    %v229 = vadd.f32 %v130, %v228
    %v230 = vpop.f32.mrb[0].mxu0
    %231 = vmatprep.mubr.f32.mxu0 %v68
    %232 = vmatmul.mubr.f32.gmra.mrb[0].mxu0 %v67
    %v233 = vpop.f32.mrb[0].mxu0
    %v234 = vadd.f32 %v130, %v233
    %v235 = vpop.f32.mrb[0].mxu0
    %236 = vmatprep.mubr.f32.mxu0 %v71
    %237 = vmatmul.mubr.f32.gmra.mrb[0].mxu0 %v70
    %v238 = vpop.f32.mrb[0].mxu0
    %v239 = vadd.f32 %v130, %v238
    %v240 = vpop.f32.mrb[0].mxu0
    %241 = vmatprep.mubr.f32.mxu0 %v74
    %242 = vmatmul.mubr.f32.gmra.mrb[0].mxu0 %v73
    %v243 = vpop.f32.mrb[0].mxu0
    %v244 = vadd.f32 %v130, %v243
    %v245 = vpop.f32.mrb[0].mxu0
    %246 = vmatprep.mubr.f32.mxu0 %v77
    %247 = vmatmul.mubr.f32.gmra.mrb[0].mxu0 %v76
    %v248 = vpop.f32.mrb[0].mxu0
    %v249 = vadd.f32 %v130, %v248
    %v250 = vpop.f32.mrb[0].mxu0
    %251 = vmatprep.mubr.f32.mxu0 %v80
    %252 = vmatmul.mubr.f32.gmra.mrb[0].mxu0 %v79
    %v253 = vpop.f32.mrb[0].mxu0
    %v254 = vadd.f32 %v130, %v253
    %v255 = vpop.f32.mrb[0].mxu0
    %256 = vmatprep.mubr.f32.mxu0 %v83
    %257 = vmatmul.mubr.f32.gmra.mrb[0].mxu0 %v82
    %v258 = vpop.f32.mrb[0].mxu0
    %v259 = vadd.f32 %v130, %v258
    %v260 = vpop.f32.mrb[0].mxu0
    %261 = vdwg.mxu0
    %262 = vmatprep.subr.mxu0 0.0
    %263 = vmatpush1.msra.mxu0 %v117
    %264 = vmatprep.subr.mxu0 0.0
    %265 = vmatpush1.msra.mxu0 %v118
    %266 = vmatprep.subr.mxu0 0.0
    %267 = vmatpush1.msra.mxu0 %v119
    %268 = vmatprep.subr.mxu0 0.0
    %269 = vmatpush1.msra.mxu0 %v120
    %270 = vmatprep.subr.mxu0 0.0
    %271 = vmatpush1.msra.mxu0 %v121
    %272 = vmatprep.subr.mxu0 0.0
    %273 = vmatpush1.msra.mxu0 %v122
    %274 = vmatprep.subr.mxu0 0.0
    %275 = vmatpush1.msra.mxu0 %v123
    %276 = vmatprep.subr.mxu0 0.0
    %277 = vmatpush1.msra.mxu0 %v124
    %278 = vmatprep.subr.mxu0 0.0
    %279 = vmatpush1.msra.mxu0 0.0
    %280 = vmatprep.subr.mxu0 0.0
    %281 = vmatpush1.msra.mxu0 0.0
    %282 = vmatprep.subr.mxu0 0.0
    %283 = vmatpush1.msra.mxu0 0.0
    %284 = vmatprep.subr.mxu0 0.0
    %285 = vmatpush1.msra.mxu0 0.0
    %286 = vmatprep.subr.mxu0 0.0
    %287 = vmatpush1.msra.mxu0 0.0
    %288 = vmatprep.subr.mxu0 0.0
    %289 = vmatpush1.msra.mxu0 0.0
    %290 = vmatprep.subr.mxu0 0.0
    %291 = vmatpush1.msra.mxu0 0.0
    %292 = vmatprep.subr.mxu0 0.0
    %293 = vmatpush1.msra.mxu0 0.0
    %294 = vmatprep.subr.mxu0 0.0
    %295 = vmatpush1.msra.mxu0 0.0
    %296 = vmatprep.subr.mxu0 0.0
    %297 = vmatpush1.msra.mxu0 0.0
    %298 = vmatprep.subr.mxu0 0.0
    %299 = vmatpush1.msra.mxu0 0.0
    %300 = vmatprep.subr.mxu0 0.0
    %301 = vmatpush1.msra.mxu0 0.0
    %302 = vmatprep.subr.mxu0 0.0
    %303 = vmatpush1.msra.mxu0 0.0
    %304 = vmatprep.subr.mxu0 0.0
    %305 = vmatpush1.msra.mxu0 0.0
    %306 = vmatprep.subr.mxu0 0.0
    %307 = vmatpush1.msra.mxu0 0.0
    %308 = vmatprep.subr.mxu0 0.0
    %309 = vmatpush1.msra.mxu0 0.0
    %310 = vmatprep.subr.mxu0 0.0
    %311 = vmatpush1.msra.mxu0 0.0
    %312 = vmatprep.subr.mxu0 0.0
    %313 = vmatpush1.msra.mxu0 0.0
    %314 = vmatprep.subr.mxu0 0.0
    %315 = vmatpush1.msra.mxu0 0.0
    %316 = vmatprep.subr.mxu0 0.0
    %317 = vmatpush1.msra.mxu0 0.0
    %318 = vmatprep.subr.mxu0 0.0
    %319 = vmatpush1.msra.mxu0 0.0
    %320 = vmatprep.subr.mxu0 0.0
    %321 = vmatpush1.msra.mxu0 0.0
    %322 = vmatprep.subr.mxu0 0.0
    %323 = vmatpush1.msra.mxu0 0.0
    %324 = vmatprep.subr.mxu0 0.0
    %325 = vmatpush1.msra.mxu0 0.0
    %326 = vmatprep.mubr.f32.mxu0 0.0
    %327 = vmatmul.mubr.f32.gmra.mrb[0].mxu0 %v134
    %v328 = vpop.f32.mrb[0].mxu0
    %v329 = vadd.f32 %v224, %v328
    %v330 = vpop.f32.mrb[0].mxu0
    %331 = vmatprep.mubr.f32.mxu0 0.0
    %332 = vmatmul.mubr.f32.gmra.mrb[0].mxu0 %v137
    %v333 = vpop.f32.mrb[0].mxu0
    %v334 = vadd.f32 %v229, %v333
    %v335 = vpop.f32.mrb[0].mxu0
    %336 = vmatprep.mubr.f32.mxu0 0.0
    %337 = vmatmul.mubr.f32.gmra.mrb[0].mxu0 %v140
    %v338 = vpop.f32.mrb[0].mxu0
    %v339 = vadd.f32 %v234, %v338
    %v340 = vpop.f32.mrb[0].mxu0
    %341 = vmatprep.mubr.f32.mxu0 0.0
    %342 = vmatmul.mubr.f32.gmra.mrb[0].mxu0 %v143
    %v343 = vpop.f32.mrb[0].mxu0
    %v344 = vadd.f32 %v239, %v343
    %v345 = vpop.f32.mrb[0].mxu0
    %346 = vmatprep.mubr.f32.mxu0 0.0
    %347 = vmatmul.mubr.f32.gmra.mrb[0].mxu0 %v146
    %v348 = vpop.f32.mrb[0].mxu0
    %v349 = vadd.f32 %v244, %v348
    %v350 = vpop.f32.mrb[0].mxu0
    %351 = vmatprep.mubr.f32.mxu0 0.0
    %352 = vmatmul.mubr.f32.gmra.mrb[0].mxu0 %v149
    %v353 = vpop.f32.mrb[0].mxu0
    %v354 = vadd.f32 %v249, %v353
    %v355 = vpop.f32.mrb[0].mxu0
    %356 = vmatprep.mubr.f32.mxu0 0.0
    %357 = vmatmul.mubr.f32.gmra.mrb[0].mxu0 %v152
    %v358 = vpop.f32.mrb[0].mxu0
    %v359 = vadd.f32 %v254, %v358
    %v360 = vpop.f32.mrb[0].mxu0
    %361 = vmatprep.mubr.f32.mxu0 0.0
    %362 = vmatmul.mubr.f32.gmra.mrb[0].mxu0 %v155
    %v363 = vpop.f32.mrb[0].mxu0
    %v364 = vadd.f32 %v259, %v363
    %v365 = vpop.f32.mrb[0].mxu0
    %366 = vdwg.mxu0
    %v367 = vmax.f32 %v329, 0.0
    %v368 = vmax.f32 %v334, 0.0
    %v369 = vmax.f32 %v339, 0.0
    %v370 = vmax.f32 %v344, 0.0
    %v371 = vmax.f32 %v349, 0.0
    %v372 = vmax.f32 %v354, 0.0
    %v373 = vmax.f32 %v359, 0.0
    %v374 = vmax.f32 %v364, 0.0
    %v375 = vmax.f32 %v367, %v369
    %v376 = vmax.f32 %v368, %v370
    %v377 = vmax.f32 %v375, %v371
    %v378 = vmax.f32 %v376, %v372
    %v379 = vmax.f32 %v377, %v373
    %v380 = vmax.f32 %v378, %v374
    %v381 = vld [vmem:[%s3] sm:$0xff]
    %v382 = vld [vmem:[%s3 + $0x8] sm:$0xff]
    %v383 = vld [vmem:[%s3 + $0x10] sm:$0xff]
    %v384 = vld [vmem:[%s3 + $0x18] sm:$0xff]
    %v385 = vld [vmem:[%s3 + $0x20] sm:$0xff]
    %v386 = vld [vmem:[%s3 + $0x28] sm:$0xff]
    %v387 = vld [vmem:[%s4] sm:$0xff]
    %v388 = vld [vmem:[%s4 + $0x8] sm:$0xff]
    %v389 = vld [vmem:[%s4 + $0x10] sm:$0xff]
    %v390 = vld [vmem:[%s4 + $0x18] sm:$0xff]
    %v391 = vld [vmem:[%s4 + $0x20] sm:$0xff]
    %v392 = vld [vmem:[%s4 + $0x28] sm:$0xff]
    %v393 = vld [vmem:[%s4 + $0x30] sm:$0xff]
    %v394 = vld [vmem:[%s4 + $0x38] sm:$0xff]
    %v395 = vld [vmem:[%s4 + $0x40] sm:$0xff]
    %v396 = vld [vmem:[%s4 + $0x48] sm:$0xff]
    %v397 = vld [vmem:[%s4 + $0x50] sm:$0xff]
    %v398 = vld [vmem:[%s4 + $0x58] sm:$0xff]
    %v399 = vld [vmem:[%s5] sm:$0x3]
    %v401 = vlaneseq
    %v402 = vshrl.u32 %v401, 7
    %v403 = vsub.s32 0, %v402
    %v404 = vrot.slane %v399, %v403
    %v405 = vlaneseq
    %v406 = vshrl.u32 %v405, 7
    %v407 = vsub.s32 1, %v406
    %v408 = vrot.slane %v399, %v407
    %vm411 = vcmask 392192
    %v413 = vsel %vm411, %v379, 0
    %v416 = vsel %vm411, %v380, 0
    %418 = vmatprep.subr.mxu0 %v388
    %419 = vmatpush1.msra.mxu0 %v387
    %420 = vmatprep.subr.mxu0 %v390
    %421 = vmatpush1.msra.mxu0 %v389
    %422 = vmatprep.subr.mxu0 %v392
    %423 = vmatpush1.msra.mxu0 %v391
    %424 = vmatprep.subr.mxu0 %v394
    %425 = vmatpush1.msra.mxu0 %v393
    %426 = vmatprep.subr.mxu0 %v396
    %427 = vmatpush1.msra.mxu0 %v395
    %428 = vmatprep.subr.mxu0 %v398
    %429 = vmatpush1.msra.mxu0 %v397
    %430 = vmatprep.subr.mxu0 0.0
    %431 = vmatpush1.msra.mxu0 0.0
    %432 = vmatprep.subr.mxu0 0.0
    %433 = vmatpush1.msra.mxu0 0.0
    %434 = vmatprep.subr.mxu0 0.0
    %435 = vmatpush1.msra.mxu0 0.0
    %436 = vmatprep.subr.mxu0 0.0
    %437 = vmatpush1.msra.mxu0 0.0
    %438 = vmatprep.subr.mxu0 0.0
    %439 = vmatpush1.msra.mxu0 0.0
    %440 = vmatprep.subr.mxu0 0.0
    %441 = vmatpush1.msra.mxu0 0.0
    %442 = vmatprep.subr.mxu0 0.0
    %443 = vmatpush1.msra.mxu0 0.0
    %444 = vmatprep.subr.mxu0 0.0
    %445 = vmatpush1.msra.mxu0 0.0
    %446 = vmatprep.subr.mxu0 0.0
    %447 = vmatpush1.msra.mxu0 0.0
    %448 = vmatprep.subr.mxu0 0.0
    %449 = vmatpush1.msra.mxu0 0.0
    %450 = vmatprep.subr.mxu0 0.0
    %451 = vmatpush1.msra.mxu0 0.0
    %452 = vmatprep.subr.mxu0 0.0
    %453 = vmatpush1.msra.mxu0 0.0
    %454 = vmatprep.subr.mxu0 0.0
    %455 = vmatpush1.msra.mxu0 0.0
    %456 = vmatprep.subr.mxu0 0.0
    %457 = vmatpush1.msra.mxu0 0.0
    %458 = vmatprep.subr.mxu0 0.0
    %459 = vmatpush1.msra.mxu0 0.0
    %460 = vmatprep.subr.mxu0 0.0
    %461 = vmatpush1.msra.mxu0 0.0
    %462 = vmatprep.subr.mxu0 0.0
    %463 = vmatpush1.msra.mxu0 0.0
    %464 = vmatprep.subr.mxu0 0.0
    %465 = vmatpush1.msra.mxu0 0.0
    %466 = vmatprep.subr.mxu0 0.0
    %467 = vmatpush1.msra.mxu0 0.0
    %468 = vmatprep.subr.mxu0 0.0
    %469 = vmatpush1.msra.mxu0 0.0
    %470 = vmatprep.subr.mxu0 0.0
    %471 = vmatpush1.msra.mxu0 0.0
    %472 = vmatprep.subr.mxu0 0.0
    %473 = vmatpush1.msra.mxu0 0.0
    %474 = vmatprep.subr.mxu0 0.0
    %475 = vmatpush1.msra.mxu0 0.0
    %476 = vmatprep.subr.mxu0 0.0
    %477 = vmatpush1.msra.mxu0 0.0
    %478 = vmatprep.subr.mxu0 0.0
    %479 = vmatpush1.msra.mxu0 0.0
    %480 = vmatprep.subr.mxu0 0.0
    %481 = vmatpush1.msra.mxu0 0.0
    %482 = vmatprep.mubr.f32.mxu0 0.0
    %483 = vmatmul.mubr.f32.gmra.mrb[0].mxu0 %v413
    %v484 = vpop.f32.mrb[0].mxu0
    %v485 = vadd.f32 %v404, %v484
    %v486 = vpop.f32.mrb[0].mxu0
    %v487 = vadd.f32 %v408, %v486
    %488 = vmatprep.mubr.f32.mxu0 0.0
    %489 = vmatmul.mubr.f32.gmra.mrb[0].mxu0 %v416
    %v490 = vpop.f32.mrb[0].mxu0
    %v491 = vadd.f32 %v404, %v490
    %v492 = vpop.f32.mrb[0].mxu0
    %v493 = vadd.f32 %v408, %v492
    %494 = vdwg.mxu0
    %496 = vrot.lane.b32.xlu0 %v485, 80
    %v497 = vpop.permute.xlu0 %496
    %v499 = vmul.f32 %v485, %v497
    %501 = vrot.lane.b32.xlu0 %v491, 80
    %v502 = vpop.permute.xlu0 %501
    %v504 = vmul.f32 %v485, %v502
    %v505 = vmul.f32 %v491, %v497
    %v506 = vmul.f32 %v491, %v502
    %v508 = vsel %vm411, %v499, 0
    %v511 = vsel %vm411, %v504, 0
    %v514 = vsel %vm411, %v505, 0
    %v517 = vsel %vm411, %v506, 0
    %519 = vmatprep.subr.mxu0 0.0
    %520 = vmatpush1.msra.mxu0 %v381
    %521 = vmatprep.subr.mxu0 0.0
    %522 = vmatpush1.msra.mxu0 %v382
    %523 = vmatprep.subr.mxu0 0.0
    %524 = vmatpush1.msra.mxu0 %v383
    %525 = vmatprep.subr.mxu0 0.0
    %526 = vmatpush1.msra.mxu0 %v384
    %527 = vmatprep.subr.mxu0 0.0
    %528 = vmatpush1.msra.mxu0 %v385
    %529 = vmatprep.subr.mxu0 0.0
    %530 = vmatpush1.msra.mxu0 %v386
    %531 = vmatprep.subr.mxu0 0.0
    %532 = vmatpush1.msra.mxu0 0.0
    %533 = vmatprep.subr.mxu0 0.0
    %534 = vmatpush1.msra.mxu0 0.0
    %535 = vmatprep.subr.mxu0 0.0
    %536 = vmatpush1.msra.mxu0 0.0
    %537 = vmatprep.subr.mxu0 0.0
    %538 = vmatpush1.msra.mxu0 0.0
    %539 = vmatprep.subr.mxu0 0.0
    %540 = vmatpush1.msra.mxu0 0.0
    %541 = vmatprep.subr.mxu0 0.0
    %542 = vmatpush1.msra.mxu0 0.0
    %543 = vmatprep.subr.mxu0 0.0
    %544 = vmatpush1.msra.mxu0 0.0
    %545 = vmatprep.subr.mxu0 0.0
    %546 = vmatpush1.msra.mxu0 0.0
    %547 = vmatprep.subr.mxu0 0.0
    %548 = vmatpush1.msra.mxu0 0.0
    %549 = vmatprep.subr.mxu0 0.0
    %550 = vmatpush1.msra.mxu0 0.0
    %551 = vmatprep.subr.mxu0 0.0
    %552 = vmatpush1.msra.mxu0 0.0
    %553 = vmatprep.subr.mxu0 0.0
    %554 = vmatpush1.msra.mxu0 0.0
    %555 = vmatprep.subr.mxu0 0.0
    %556 = vmatpush1.msra.mxu0 0.0
    %557 = vmatprep.subr.mxu0 0.0
    %558 = vmatpush1.msra.mxu0 0.0
    %559 = vmatprep.subr.mxu0 0.0
    %560 = vmatpush1.msra.mxu0 0.0
    %561 = vmatprep.subr.mxu0 0.0
    %562 = vmatpush1.msra.mxu0 0.0
    %563 = vmatprep.subr.mxu0 0.0
    %564 = vmatpush1.msra.mxu0 0.0
    %565 = vmatprep.subr.mxu0 0.0
    %566 = vmatpush1.msra.mxu0 0.0
    %567 = vmatprep.subr.mxu0 0.0
    %568 = vmatpush1.msra.mxu0 0.0
    %569 = vmatprep.subr.mxu0 0.0
    %570 = vmatpush1.msra.mxu0 0.0
    %571 = vmatprep.subr.mxu0 0.0
    %572 = vmatpush1.msra.mxu0 0.0
    %573 = vmatprep.subr.mxu0 0.0
    %574 = vmatpush1.msra.mxu0 0.0
    %575 = vmatprep.subr.mxu0 0.0
    %576 = vmatpush1.msra.mxu0 0.0
    %577 = vmatprep.subr.mxu0 0.0
    %578 = vmatpush1.msra.mxu0 0.0
    %579 = vmatprep.subr.mxu0 0.0
    %580 = vmatpush1.msra.mxu0 0.0
    %581 = vmatprep.subr.mxu0 0.0
    %582 = vmatpush1.msra.mxu0 0.0
    %583 = vmatprep.mubr.f32.mxu0 0.0
    %584 = vmatmul.mubr.f32.gmra.mrb[0].mxu0 %v508
    %v585 = vpop.f32.mrb[0].mxu0
    %v586 = vadd.f32 0.0, %v585
    %v587 = vpop.f32.mrb[0].mxu0
    %588 = vmatprep.mubr.f32.mxu0 0.0
    %589 = vmatmul.mubr.f32.gmra.mrb[0].mxu0 %v511
    %v590 = vpop.f32.mrb[0].mxu0
    %v591 = vadd.f32 0.0, %v590
    %v592 = vpop.f32.mrb[0].mxu0
    %593 = vmatprep.mubr.f32.mxu0 0.0
    %594 = vmatmul.mubr.f32.gmra.mrb[0].mxu0 %v514
    %v595 = vpop.f32.mrb[0].mxu0
    %v596 = vadd.f32 0.0, %v595
    %v597 = vpop.f32.mrb[0].mxu0
    %598 = vmatprep.mubr.f32.mxu0 0.0
    %599 = vmatmul.mubr.f32.gmra.mrb[0].mxu0 %v517
    %v600 = vpop.f32.mrb[0].mxu0
    %v601 = vadd.f32 0.0, %v600
    %v602 = vpop.f32.mrb[0].mxu0
    %603 = vdwg.mxu0
    %v604 = vmax.f32 %v586, %v591
    %v605 = vmax.f32 %v596, %v601
    %v606 = vsub.f32 %v586, %v604
    %v607 = vmul.f32 %v606, 1.442695
    %v608 = vpow.pop %v607
    %v609 = vsub.f32 %v591, %v604
    %v610 = vmul.f32 %v609, 1.442695
    %v611 = vpow.pop %v610
    %v612 = vsub.f32 %v596, %v605
    %v613 = vmul.f32 %v612, 1.442695
    %v614 = vpow.pop %v613
    %v615 = vsub.f32 %v601, %v605
    %v616 = vmul.f32 %v615, 1.442695
    %v617 = vpow.pop %v616
    %v618 = vadd.f32 %v608, %v611
    %v619 = vrcp.pop %v618
    %v620 = vadd.f32 %v614, %v617
    %v621 = vrcp.pop %v620
    %v622 = vmul.f32 %v608, %v619
    %624 = vrot.lane.b32.xlu0 %v485, 32
    %v625 = vpop.permute.xlu0 %624
    %626 = vrot.lane.b32.xlu0 %v487, 32
    %v627 = vpop.permute.xlu0 %626
    %vm628 = vcmask 261120
    %v629 = vsel %vm628, %v625, %v627
    %v631 = vmul.f32 %v622, %v629
    %v632 = vmul.f32 %v611, %v619
    %634 = vrot.lane.b32.xlu0 %v491, 32
    %v635 = vpop.permute.xlu0 %634
    %636 = vrot.lane.b32.xlu0 %v493, 32
    %v637 = vpop.permute.xlu0 %636
    %v638 = vsel %vm628, %v635, %v637
    %v640 = vmul.f32 %v632, %v638
    %v641 = vadd.f32 %v631, %v640
    %v642 = vmul.f32 %v614, %v621
    %v643 = vmul.f32 %v642, %v629
    %v644 = vmul.f32 %v617, %v621
    %v645 = vmul.f32 %v644, %v638
    %v646 = vadd.f32 %v643, %v645
    %v647 = vld [vmem:[%s6] sm:$0xff]
    %v648 = vld [vmem:[%s6 + $0x8] sm:$0xff]
    %v649 = vld [vmem:[%s6 + $0x10] sm:$0xff]
    %v650 = vld [vmem:[%s6 + $0x18] sm:$0xff]
    %v651 = vld [vmem:[%s6 + $0x20] sm:$0xff]
    %v652 = vld [vmem:[%s6 + $0x28] sm:$0xff]
    %v653 = vld [vmem:[%s7] sm:$0x1]
    %v655 = vlaneseq
    %v656 = vshrl.u32 %v655, 7
    %v657 = vsub.s32 0, %v656
    %v658 = vrot.slane %v653, %v657
    %v661 = vsel %vm411, %v641, 0
    %v664 = vsel %vm411, %v646, 0
    %666 = vmatprep.subr.mxu0 0.0
    %667 = vmatpush1.msra.mxu0 %v647
    %668 = vmatprep.subr.mxu0 0.0
    %669 = vmatpush1.msra.mxu0 %v648
    %670 = vmatprep.subr.mxu0 0.0
    %671 = vmatpush1.msra.mxu0 %v649
    %672 = vmatprep.subr.mxu0 0.0
    %673 = vmatpush1.msra.mxu0 %v650
    %674 = vmatprep.subr.mxu0 0.0
    %675 = vmatpush1.msra.mxu0 %v651
    %676 = vmatprep.subr.mxu0 0.0
    %677 = vmatpush1.msra.mxu0 %v652
    %678 = vmatprep.subr.mxu0 0.0
    %679 = vmatpush1.msra.mxu0 0.0
    %680 = vmatprep.subr.mxu0 0.0
    %681 = vmatpush1.msra.mxu0 0.0
    %682 = vmatprep.subr.mxu0 0.0
    %683 = vmatpush1.msra.mxu0 0.0
    %684 = vmatprep.subr.mxu0 0.0
    %685 = vmatpush1.msra.mxu0 0.0
    %686 = vmatprep.subr.mxu0 0.0
    %687 = vmatpush1.msra.mxu0 0.0
    %688 = vmatprep.subr.mxu0 0.0
    %689 = vmatpush1.msra.mxu0 0.0
    %690 = vmatprep.subr.mxu0 0.0
    %691 = vmatpush1.msra.mxu0 0.0
    %692 = vmatprep.subr.mxu0 0.0
    %693 = vmatpush1.msra.mxu0 0.0
    %694 = vmatprep.subr.mxu0 0.0
    %695 = vmatpush1.msra.mxu0 0.0
    %696 = vmatprep.subr.mxu0 0.0
    %697 = vmatpush1.msra.mxu0 0.0
    %698 = vmatprep.subr.mxu0 0.0
    %699 = vmatpush1.msra.mxu0 0.0
    %700 = vmatprep.subr.mxu0 0.0
    %701 = vmatpush1.msra.mxu0 0.0
    %702 = vmatprep.subr.mxu0 0.0
    %703 = vmatpush1.msra.mxu0 0.0
    %704 = vmatprep.subr.mxu0 0.0
    %705 = vmatpush1.msra.mxu0 0.0
    %706 = vmatprep.subr.mxu0 0.0
    %707 = vmatpush1.msra.mxu0 0.0
    %708 = vmatprep.subr.mxu0 0.0
    %709 = vmatpush1.msra.mxu0 0.0
    %710 = vmatprep.subr.mxu0 0.0
    %711 = vmatpush1.msra.mxu0 0.0
    %712 = vmatprep.subr.mxu0 0.0
    %713 = vmatpush1.msra.mxu0 0.0
    %714 = vmatprep.subr.mxu0 0.0
    %715 = vmatpush1.msra.mxu0 0.0
    %716 = vmatprep.subr.mxu0 0.0
    %717 = vmatpush1.msra.mxu0 0.0
    %718 = vmatprep.subr.mxu0 0.0
    %719 = vmatpush1.msra.mxu0 0.0
    %720 = vmatprep.subr.mxu0 0.0
    %721 = vmatpush1.msra.mxu0 0.0
    %722 = vmatprep.subr.mxu0 0.0
    %723 = vmatpush1.msra.mxu0 0.0
    %724 = vmatprep.subr.mxu0 0.0
    %725 = vmatpush1.msra.mxu0 0.0
    %726 = vmatprep.subr.mxu0 0.0
    %727 = vmatpush1.msra.mxu0 0.0
    %728 = vmatprep.subr.mxu0 0.0
    %729 = vmatpush1.msra.mxu0 0.0
    %730 = vmatprep.mubr.f32.mxu0 0.0
    %731 = vmatmul.mubr.f32.gmra.mrb[0].mxu0 %v661
    %v732 = vpop.f32.mrb[0].mxu0
    %v733 = vadd.f32 %v658, %v732
    %v734 = vpop.f32.mrb[0].mxu0
    %735 = vmatprep.mubr.f32.mxu0 0.0
    %736 = vmatmul.mubr.f32.gmra.mrb[0].mxu0 %v664
    %v737 = vpop.f32.mrb[0].mxu0
    %v738 = vadd.f32 %v658, %v737
    %v739 = vpop.f32.mrb[0].mxu0
    %740 = vdwg.mxu0
    %v741 = vadd.f32 %v379, %v733
    %v742 = vadd.f32 %v380, %v738
    %v743 = vld [vmem:[%s8] sm:$0x1]
    %v744 = vld [vmem:[%s9] sm:$0x1]
    %v745 = vsel %vm411, %v741, 0.0
    %746 = vadd.xlane.f32.xlu0 %v745
    %v747 = vpop.xlane.xlu0 %746
    %v748 = vsel %vm411, %v742, 0.0
    %749 = vadd.xlane.f32.xlu0 %v748
    %v750 = vpop.xlane.xlu0 %749
    %v751 = vrcp.pop 48.0
    %v752 = vmul.f32 %v747, %v751
    %v753 = vmul.f32 %v750, %v751
    %v754 = vsub.f32 %v741, %v752
    %v755 = vsub.f32 %v742, %v753
    %v756 = vmul.f32 %v754, %v754
    %v757 = vmul.f32 %v755, %v755
    %v758 = vsel %vm411, %v756, 0.0
    %759 = vadd.xlane.f32.xlu0 %v758
    %v760 = vpop.xlane.xlu0 %759
    %v761 = vsel %vm411, %v757, 0.0
    %762 = vadd.xlane.f32.xlu0 %v761
    %v763 = vpop.xlane.xlu0 %762
    %v764 = vmul.f32 %v760, %v751
    %v765 = vmul.f32 %v763, %v751
    %v766 = vadd.f32 %v764, 1e-05
    %v767 = vadd.f32 %v765, 1e-05
    %v768 = vrsqrt.pop %v766
    %v769 = vrsqrt.pop %v767
    %v770 = vmul.f32 %v754, %v768
    %v771 = vmul.f32 %v755, %v769
    %v773 = vlaneseq
    %v774 = vshrl.u32 %v773, 7
    %v775 = vsub.s32 0, %v774
    %v776 = vrot.slane %v743, %v775
    %v778 = vmul.f32 %v770, %v776
    %v779 = vmul.f32 %v771, %v776
    %v781 = vlaneseq
    %v782 = vshrl.u32 %v781, 7
    %v783 = vsub.s32 0, %v782
    %v784 = vrot.slane %v744, %v783
    %v786 = vadd.f32 %v778, %v784
    %v787 = vadd.f32 %v779, %v784
    %v788 = vpack.c.bf16 %v787, %v786
    %v789 = vld [vmem:[%s10] sm:$0xff]
    %v790 = vld [vmem:[%s10 + $0x8] sm:$0xff]
    %v791 = vld [vmem:[%s10 + $0x10] sm:$0xff]
    %v792 = vld [vmem:[%s10 + $0x18] sm:$0xff]
    %v793 = vld [vmem:[%s10 + $0x20] sm:$0xff]
    %v794 = vld [vmem:[%s10 + $0x28] sm:$0xff]
    %v795 = vld [vmem:[%s10 + $0x30] sm:$0xff]
    %v796 = vld [vmem:[%s10 + $0x38] sm:$0xff]
    %v797 = vld [vmem:[%s10 + $0x40] sm:$0xff]
    %v798 = vld [vmem:[%s10 + $0x48] sm:$0xff]
    %v799 = vld [vmem:[%s10 + $0x50] sm:$0xff]
    %v800 = vld [vmem:[%s10 + $0x58] sm:$0xff]
    %v801 = vld [vmem:[%s10 + $0x60] sm:$0xff]
    %v802 = vld [vmem:[%s10 + $0x68] sm:$0xff]
    %v803 = vld [vmem:[%s10 + $0x70] sm:$0xff]
    %v804 = vld [vmem:[%s10 + $0x78] sm:$0xff]
    %v805 = vld [vmem:[%s10 + $0x80] sm:$0xff]
    %v806 = vld [vmem:[%s10 + $0x88] sm:$0xff]
    %v807 = vld [vmem:[%s10 + $0x90] sm:$0xff]
    %v808 = vld [vmem:[%s10 + $0x98] sm:$0xff]
    %v809 = vld [vmem:[%s10 + $0xa0] sm:$0xff]
    %v810 = vld [vmem:[%s10 + $0xa8] sm:$0xff]
    %v811 = vld [vmem:[%s10 + $0xb0] sm:$0xff]
    %v812 = vld [vmem:[%s10 + $0xb8] sm:$0xff]
    %v813 = vld [vmem:[%s10 + $0xc0] sm:$0xff]
    %v814 = vld [vmem:[%s10 + $0xc8] sm:$0xff]
    %v815 = vld [vmem:[%s10 + $0xd0] sm:$0xff]
    %v816 = vld [vmem:[%s10 + $0xd8] sm:$0xff]
    %v817 = vld [vmem:[%s10 + $0xe0] sm:$0xff]
    %v818 = vld [vmem:[%s10 + $0xe8] sm:$0xff]
    %v819 = vld [vmem:[%s10 + $0xf0] sm:$0xff]
    %v820 = vld [vmem:[%s10 + $0xf8] sm:$0xff]
    %v821 = vld [vmem:[%s10 + $0x100] sm:$0xff]
    %v822 = vld [vmem:[%s10 + $0x108] sm:$0xff]
    %v823 = vld [vmem:[%s10 + $0x110] sm:$0xff]
    %v824 = vld [vmem:[%s10 + $0x118] sm:$0xff]
    %v825 = vld [vmem:[%s10 + $0x120] sm:$0xff]
    %v826 = vld [vmem:[%s10 + $0x128] sm:$0xff]
    %v827 = vld [vmem:[%s10 + $0x130] sm:$0xff]
    %v828 = vld [vmem:[%s10 + $0x138] sm:$0xff]
    %v829 = vld [vmem:[%s10 + $0x140] sm:$0xff]
    %v830 = vld [vmem:[%s10 + $0x148] sm:$0xff]
    %v831 = vld [vmem:[%s10 + $0x150] sm:$0xff]
    %v832 = vld [vmem:[%s10 + $0x158] sm:$0xff]
    %v833 = vld [vmem:[%s10 + $0x160] sm:$0xff]
    %v834 = vld [vmem:[%s10 + $0x168] sm:$0xff]
    %v835 = vld [vmem:[%s10 + $0x170] sm:$0xff]
    %v836 = vld [vmem:[%s10 + $0x178] sm:$0xff]
    %v837 = vld [vmem:[%s11] sm:$0xff]
    %v838 = vld [vmem:[%s11 + $0x8] sm:$0xff]
    %v841 = vlaneseq
    %v842 = vshrl.u32 %v841, 7
    %v843 = vsub.s32 0, %v842
    %v844 = vrot.slane %v837, %v843
    %v845 = vlaneseq
    %v846 = vshrl.u32 %v845, 7
    %v847 = vsub.s32 1, %v846
    %v848 = vrot.slane %v837, %v847
    %v849 = vlaneseq
    %v850 = vshrl.u32 %v849, 7
    %v851 = vsub.s32 2, %v850
    %v852 = vrot.slane %v837, %v851
    %v853 = vlaneseq
    %v854 = vshrl.u32 %v853, 7
    %v855 = vsub.s32 3, %v854
    %v856 = vrot.slane %v837, %v855
    %v857 = vlaneseq
    %v858 = vshrl.u32 %v857, 7
    %v859 = vsub.s32 4, %v858
    %v860 = vrot.slane %v837, %v859
    %v861 = vlaneseq
    %v862 = vshrl.u32 %v861, 7
    %v863 = vsub.s32 5, %v862
    %v864 = vrot.slane %v837, %v863
    %v865 = vlaneseq
    %v866 = vshrl.u32 %v865, 7
    %v867 = vsub.s32 6, %v866
    %v868 = vrot.slane %v837, %v867
    %v869 = vlaneseq
    %v870 = vshrl.u32 %v869, 7
    %v871 = vsub.s32 7, %v870
    %v872 = vrot.slane %v837, %v871
    %v873 = vlaneseq
    %v874 = vshrl.u32 %v873, 7
    %v875 = vsub.s32 0, %v874
    %v876 = vrot.slane %v838, %v875
    %v877 = vlaneseq
    %v878 = vshrl.u32 %v877, 7
    %v879 = vsub.s32 1, %v878
    %v880 = vrot.slane %v838, %v879
    %v881 = vlaneseq
    %v882 = vshrl.u32 %v881, 7
    %v883 = vsub.s32 2, %v882
    %v884 = vrot.slane %v838, %v883
    %v885 = vlaneseq
    %v886 = vshrl.u32 %v885, 7
    %v887 = vsub.s32 3, %v886
    %v888 = vrot.slane %v838, %v887
    %v889 = vlaneseq
    %v890 = vshrl.u32 %v889, 7
    %v891 = vsub.s32 4, %v890
    %v892 = vrot.slane %v838, %v891
    %v893 = vlaneseq
    %v894 = vshrl.u32 %v893, 7
    %v895 = vsub.s32 5, %v894
    %v896 = vrot.slane %v838, %v895
    %v897 = vlaneseq
    %v898 = vshrl.u32 %v897, 7
    %v899 = vsub.s32 6, %v898
    %v900 = vrot.slane %v838, %v899
    %v901 = vlaneseq
    %v902 = vshrl.u32 %v901, 7
    %v903 = vsub.s32 7, %v902
    %v904 = vrot.slane %v838, %v903
    %v969 = vunpack.c.l.b16 %v789
    %v970 = vunpack.c.h.b16 %v789
    %v971 = vunpack.c.l.b16 %v790
    %v972 = vunpack.c.h.b16 %v790
    %v973 = vunpack.c.l.b16 %v791
    %v974 = vunpack.c.h.b16 %v791
    %v975 = vunpack.c.l.b16 %v792
    %v976 = vunpack.c.h.b16 %v792
    %v977 = vunpack.c.l.b16 %v793
    %v978 = vunpack.c.h.b16 %v793
    %v979 = vunpack.c.l.b16 %v794
    %v980 = vunpack.c.h.b16 %v794
    %v981 = vunpack.c.l.b16 %v795
    %v982 = vunpack.c.h.b16 %v795
    %v983 = vunpack.c.l.b16 %v796
    %v984 = vunpack.c.h.b16 %v796
    %v985 = vunpack.c.l.b16 %v797
    %v986 = vunpack.c.h.b16 %v797
    %v987 = vunpack.c.l.b16 %v798
    %v988 = vunpack.c.h.b16 %v798
    %v989 = vunpack.c.l.b16 %v799
    %v990 = vunpack.c.h.b16 %v799
    %v991 = vunpack.c.l.b16 %v800
    %v992 = vunpack.c.h.b16 %v800
    %v993 = vunpack.c.l.b16 %v801
    %v994 = vunpack.c.h.b16 %v801
    %v995 = vunpack.c.l.b16 %v802
    %v996 = vunpack.c.h.b16 %v802
    %v997 = vunpack.c.l.b16 %v803
    %v998 = vunpack.c.h.b16 %v803
    %v999 = vunpack.c.l.b16 %v804
    %v1000 = vunpack.c.h.b16 %v804
    %v1001 = vunpack.c.l.b16 %v805
    %v1002 = vunpack.c.h.b16 %v805
    %v1003 = vunpack.c.l.b16 %v806
    %v1004 = vunpack.c.h.b16 %v806
    %v1005 = vunpack.c.l.b16 %v807
    %v1006 = vunpack.c.h.b16 %v807
    %v1007 = vunpack.c.l.b16 %v808
    %v1008 = vunpack.c.h.b16 %v808
    %v1009 = vunpack.c.l.b16 %v809
    %v1010 = vunpack.c.h.b16 %v809
    %v1011 = vunpack.c.l.b16 %v810
    %v1012 = vunpack.c.h.b16 %v810
    %v1013 = vunpack.c.l.b16 %v811
    %v1014 = vunpack.c.h.b16 %v811
    %v1015 = vunpack.c.l.b16 %v812
    %v1016 = vunpack.c.h.b16 %v812
    %v1017 = vunpack.c.l.b16 %v813
    %v1018 = vunpack.c.h.b16 %v813
    %v1019 = vunpack.c.l.b16 %v814
    %v1020 = vunpack.c.h.b16 %v814
    %v1021 = vunpack.c.l.b16 %v815
    %v1022 = vunpack.c.h.b16 %v815
    %v1023 = vunpack.c.l.b16 %v816
    %v1024 = vunpack.c.h.b16 %v816
    %v1025 = vunpack.c.l.b16 %v817
    %v1026 = vunpack.c.h.b16 %v817
    %v1027 = vunpack.c.l.b16 %v818
    %v1028 = vunpack.c.h.b16 %v818
    %v1029 = vunpack.c.l.b16 %v819
    %v1030 = vunpack.c.h.b16 %v819
    %v1031 = vunpack.c.l.b16 %v820
    %v1032 = vunpack.c.h.b16 %v820
    %v1033 = vunpack.c.l.b16 %v821
    %v1034 = vunpack.c.h.b16 %v821
    %v1035 = vunpack.c.l.b16 %v822
    %v1036 = vunpack.c.h.b16 %v822
    %v1037 = vunpack.c.l.b16 %v823
    %v1038 = vunpack.c.h.b16 %v823
    %v1039 = vunpack.c.l.b16 %v824
    %v1040 = vunpack.c.h.b16 %v824
    %v1041 = vunpack.c.l.b16 %v825
    %v1042 = vunpack.c.h.b16 %v825
    %v1043 = vunpack.c.l.b16 %v826
    %v1044 = vunpack.c.h.b16 %v826
    %v1045 = vunpack.c.l.b16 %v827
    %v1046 = vunpack.c.h.b16 %v827
    %v1047 = vunpack.c.l.b16 %v828
    %v1048 = vunpack.c.h.b16 %v828
    %v1049 = vunpack.c.l.b16 %v829
    %v1050 = vunpack.c.h.b16 %v829
    %v1051 = vunpack.c.l.b16 %v830
    %v1052 = vunpack.c.h.b16 %v830
    %v1053 = vunpack.c.l.b16 %v831
    %v1054 = vunpack.c.h.b16 %v831
    %v1055 = vunpack.c.l.b16 %v832
    %v1056 = vunpack.c.h.b16 %v832
    %v1057 = vunpack.c.l.b16 %v833
    %v1058 = vunpack.c.h.b16 %v833
    %v1059 = vunpack.c.l.b16 %v834
    %v1060 = vunpack.c.h.b16 %v834
    %v1061 = vunpack.c.l.b16 %v835
    %v1062 = vunpack.c.h.b16 %v835
    %v1063 = vunpack.c.l.b16 %v836
    %v1064 = vunpack.c.h.b16 %v836
    %v1065 = vpack.c.b16 %v985, %v969
    %v1066 = vpack.c.b16 %v986, %v970
    %v1067 = vpack.c.b16 %v987, %v971
    %v1068 = vpack.c.b16 %v988, %v972
    %v1069 = vpack.c.b16 %v989, %v973
    %v1070 = vpack.c.b16 %v990, %v974
    %v1071 = vpack.c.b16 %v991, %v975
    %v1072 = vpack.c.b16 %v992, %v976
    %v1073 = vpack.c.b16 %v993, %v977
    %v1074 = vpack.c.b16 %v994, %v978
    %v1075 = vpack.c.b16 %v995, %v979
    %v1076 = vpack.c.b16 %v996, %v980
    %v1077 = vpack.c.b16 %v997, %v981
    %v1078 = vpack.c.b16 %v998, %v982
    %v1079 = vpack.c.b16 %v999, %v983
    %v1080 = vpack.c.b16 %v1000, %v984
    %v1081 = vpack.c.b16 %v1017, %v1001
    %v1082 = vpack.c.b16 %v1018, %v1002
    %v1083 = vpack.c.b16 %v1019, %v1003
    %v1084 = vpack.c.b16 %v1020, %v1004
    %v1085 = vpack.c.b16 %v1021, %v1005
    %v1086 = vpack.c.b16 %v1022, %v1006
    %v1087 = vpack.c.b16 %v1023, %v1007
    %v1088 = vpack.c.b16 %v1024, %v1008
    %v1089 = vpack.c.b16 %v1025, %v1009
    %v1090 = vpack.c.b16 %v1026, %v1010
    %v1091 = vpack.c.b16 %v1027, %v1011
    %v1092 = vpack.c.b16 %v1028, %v1012
    %v1093 = vpack.c.b16 %v1029, %v1013
    %v1094 = vpack.c.b16 %v1030, %v1014
    %v1095 = vpack.c.b16 %v1031, %v1015
    %v1096 = vpack.c.b16 %v1032, %v1016
    %v1097 = vpack.c.b16 %v1049, %v1033
    %v1098 = vpack.c.b16 %v1050, %v1034
    %v1099 = vpack.c.b16 %v1051, %v1035
    %v1100 = vpack.c.b16 %v1052, %v1036
    %v1101 = vpack.c.b16 %v1053, %v1037
    %v1102 = vpack.c.b16 %v1054, %v1038
    %v1103 = vpack.c.b16 %v1055, %v1039
    %v1104 = vpack.c.b16 %v1056, %v1040
    %v1105 = vpack.c.b16 %v1057, %v1041
    %v1106 = vpack.c.b16 %v1058, %v1042
    %v1107 = vpack.c.b16 %v1059, %v1043
    %v1108 = vpack.c.b16 %v1060, %v1044
    %v1109 = vpack.c.b16 %v1061, %v1045
    %v1110 = vpack.c.b16 %v1062, %v1046
    %v1111 = vpack.c.b16 %v1063, %v1047
    %v1112 = vpack.c.b16 %v1064, %v1048
    %v1162 = vsel %vm411, %v788, 0
    %1164 = vmatprep.subr.bf16.mxu0 %v1066
    %1165 = vmatpush1.bf16.msra.mxu0 %v1065
    %1166 = vmatprep.subr.bf16.mxu0 %v1082
    %1167 = vmatpush1.bf16.msra.mxu0 %v1081
    %1168 = vmatprep.subr.bf16.mxu0 %v1098
    %1169 = vmatpush1.bf16.msra.mxu0 %v1097
    %1170 = vmatprep.subr.bf16.mxu0 0
    %1171 = vmatpush1.bf16.msra.mxu0 0
    %1172 = vmatprep.subr.bf16.mxu0 0
    %1173 = vmatpush1.bf16.msra.mxu0 0
    %1174 = vmatprep.subr.bf16.mxu0 0
    %1175 = vmatpush1.bf16.msra.mxu0 0
    %1176 = vmatprep.subr.bf16.mxu0 0
    %1177 = vmatpush1.bf16.msra.mxu0 0
    %1178 = vmatprep.subr.bf16.mxu0 0
    %1179 = vmatpush1.bf16.msra.mxu0 0
    %1180 = vmatprep.subr.bf16.mxu0 0
    %1181 = vmatpush1.bf16.msra.mxu0 0
    %1182 = vmatprep.subr.bf16.mxu0 0
    %1183 = vmatpush1.bf16.msra.mxu0 0
    %1184 = vmatprep.subr.bf16.mxu0 0
    %1185 = vmatpush1.bf16.msra.mxu0 0
    %1186 = vmatprep.subr.bf16.mxu0 0
    %1187 = vmatpush1.bf16.msra.mxu0 0
    %1188 = vmatprep.subr.bf16.mxu0 0
    %1189 = vmatpush1.bf16.msra.mxu0 0
    %1190 = vmatprep.subr.bf16.mxu0 0
    %1191 = vmatpush1.bf16.msra.mxu0 0
    %1192 = vmatprep.subr.bf16.mxu0 0
    %1193 = vmatpush1.bf16.msra.mxu0 0
    %1194 = vmatprep.subr.bf16.mxu0 0
    %1195 = vmatpush1.bf16.msra.mxu0 0
    %1196 = vmatprep.mubr.bf16.mxu0 0
    %1197 = vmatmul.mubr.bf16.gmra.mrb[0].mxu0 %v1162
    %v1198 = vpop.f32.mrb[0].mxu0
    %v1199 = vadd.f32 %v844, %v1198
    %v1200 = vpop.f32.mrb[0].mxu0
    %v1201 = vadd.f32 %v848, %v1200
    %v1202 = vpop.f32.mrb[0].mxu0
    %v1203 = vadd.f32 %v844, %v1202
    %v1204 = vpop.f32.mrb[0].mxu0
    %v1205 = vadd.f32 %v848, %v1204
    %1206 = vdwg.mxu0
    %1207 = vmatprep.subr.bf16.mxu0 %v1068
    %1208 = vmatpush1.bf16.msra.mxu0 %v1067
    %1209 = vmatprep.subr.bf16.mxu0 %v1084
    %1210 = vmatpush1.bf16.msra.mxu0 %v1083
    %1211 = vmatprep.subr.bf16.mxu0 %v1100
    %1212 = vmatpush1.bf16.msra.mxu0 %v1099
    %1213 = vmatprep.subr.bf16.mxu0 0
    %1214 = vmatpush1.bf16.msra.mxu0 0
    %1215 = vmatprep.subr.bf16.mxu0 0
    %1216 = vmatpush1.bf16.msra.mxu0 0
    %1217 = vmatprep.subr.bf16.mxu0 0
    %1218 = vmatpush1.bf16.msra.mxu0 0
    %1219 = vmatprep.subr.bf16.mxu0 0
    %1220 = vmatpush1.bf16.msra.mxu0 0
    %1221 = vmatprep.subr.bf16.mxu0 0
    %1222 = vmatpush1.bf16.msra.mxu0 0
    %1223 = vmatprep.subr.bf16.mxu0 0
    %1224 = vmatpush1.bf16.msra.mxu0 0
    %1225 = vmatprep.subr.bf16.mxu0 0
    %1226 = vmatpush1.bf16.msra.mxu0 0
    %1227 = vmatprep.subr.bf16.mxu0 0
    %1228 = vmatpush1.bf16.msra.mxu0 0
    %1229 = vmatprep.subr.bf16.mxu0 0
    %1230 = vmatpush1.bf16.msra.mxu0 0
    %1231 = vmatprep.subr.bf16.mxu0 0
    %1232 = vmatpush1.bf16.msra.mxu0 0
    %1233 = vmatprep.subr.bf16.mxu0 0
    %1234 = vmatpush1.bf16.msra.mxu0 0
    %1235 = vmatprep.subr.bf16.mxu0 0
    %1236 = vmatpush1.bf16.msra.mxu0 0
    %1237 = vmatprep.subr.bf16.mxu0 0
    %1238 = vmatpush1.bf16.msra.mxu0 0
    %1239 = vmatprep.mubr.bf16.mxu0 0
    %1240 = vmatmul.mubr.bf16.gmra.mrb[0].mxu0 %v1162
    %v1241 = vpop.f32.mrb[0].mxu0
    %v1242 = vadd.f32 %v852, %v1241
    %v1243 = vpop.f32.mrb[0].mxu0
    %v1244 = vadd.f32 %v856, %v1243
    %v1245 = vpop.f32.mrb[0].mxu0
    %v1246 = vadd.f32 %v852, %v1245
    %v1247 = vpop.f32.mrb[0].mxu0
    %v1248 = vadd.f32 %v856, %v1247
    %1249 = vdwg.mxu0
    %1250 = vmatprep.subr.bf16.mxu0 %v1070
    %1251 = vmatpush1.bf16.msra.mxu0 %v1069
    %1252 = vmatprep.subr.bf16.mxu0 %v1086
    %1253 = vmatpush1.bf16.msra.mxu0 %v1085
    %1254 = vmatprep.subr.bf16.mxu0 %v1102
    %1255 = vmatpush1.bf16.msra.mxu0 %v1101
    %1256 = vmatprep.subr.bf16.mxu0 0
    %1257 = vmatpush1.bf16.msra.mxu0 0
    %1258 = vmatprep.subr.bf16.mxu0 0
    %1259 = vmatpush1.bf16.msra.mxu0 0
    %1260 = vmatprep.subr.bf16.mxu0 0
    %1261 = vmatpush1.bf16.msra.mxu0 0
    %1262 = vmatprep.subr.bf16.mxu0 0
    %1263 = vmatpush1.bf16.msra.mxu0 0
    %1264 = vmatprep.subr.bf16.mxu0 0
    %1265 = vmatpush1.bf16.msra.mxu0 0
    %1266 = vmatprep.subr.bf16.mxu0 0
    %1267 = vmatpush1.bf16.msra.mxu0 0
    %1268 = vmatprep.subr.bf16.mxu0 0
    %1269 = vmatpush1.bf16.msra.mxu0 0
    %1270 = vmatprep.subr.bf16.mxu0 0
    %1271 = vmatpush1.bf16.msra.mxu0 0
    %1272 = vmatprep.subr.bf16.mxu0 0
    %1273 = vmatpush1.bf16.msra.mxu0 0
    %1274 = vmatprep.subr.bf16.mxu0 0
    %1275 = vmatpush1.bf16.msra.mxu0 0
    %1276 = vmatprep.subr.bf16.mxu0 0
    %1277 = vmatpush1.bf16.msra.mxu0 0
    %1278 = vmatprep.subr.bf16.mxu0 0
    %1279 = vmatpush1.bf16.msra.mxu0 0
    %1280 = vmatprep.subr.bf16.mxu0 0
    %1281 = vmatpush1.bf16.msra.mxu0 0
    %1282 = vmatprep.mubr.bf16.mxu0 0
    %1283 = vmatmul.mubr.bf16.gmra.mrb[0].mxu0 %v1162
    %v1284 = vpop.f32.mrb[0].mxu0
    %v1285 = vadd.f32 %v860, %v1284
    %v1286 = vpop.f32.mrb[0].mxu0
    %v1287 = vadd.f32 %v864, %v1286
    %v1288 = vpop.f32.mrb[0].mxu0
    %v1289 = vadd.f32 %v860, %v1288
    %v1290 = vpop.f32.mrb[0].mxu0
    %v1291 = vadd.f32 %v864, %v1290
    %1292 = vdwg.mxu0
    %1293 = vmatprep.subr.bf16.mxu0 %v1072
    %1294 = vmatpush1.bf16.msra.mxu0 %v1071
    %1295 = vmatprep.subr.bf16.mxu0 %v1088
    %1296 = vmatpush1.bf16.msra.mxu0 %v1087
    %1297 = vmatprep.subr.bf16.mxu0 %v1104
    %1298 = vmatpush1.bf16.msra.mxu0 %v1103
    %1299 = vmatprep.subr.bf16.mxu0 0
    %1300 = vmatpush1.bf16.msra.mxu0 0
    %1301 = vmatprep.subr.bf16.mxu0 0
    %1302 = vmatpush1.bf16.msra.mxu0 0
    %1303 = vmatprep.subr.bf16.mxu0 0
    %1304 = vmatpush1.bf16.msra.mxu0 0
    %1305 = vmatprep.subr.bf16.mxu0 0
    %1306 = vmatpush1.bf16.msra.mxu0 0
    %1307 = vmatprep.subr.bf16.mxu0 0
    %1308 = vmatpush1.bf16.msra.mxu0 0
    %1309 = vmatprep.subr.bf16.mxu0 0
    %1310 = vmatpush1.bf16.msra.mxu0 0
    %1311 = vmatprep.subr.bf16.mxu0 0
    %1312 = vmatpush1.bf16.msra.mxu0 0
    %1313 = vmatprep.subr.bf16.mxu0 0
    %1314 = vmatpush1.bf16.msra.mxu0 0
    %1315 = vmatprep.subr.bf16.mxu0 0
    %1316 = vmatpush1.bf16.msra.mxu0 0
    %1317 = vmatprep.subr.bf16.mxu0 0
    %1318 = vmatpush1.bf16.msra.mxu0 0
    %1319 = vmatprep.subr.bf16.mxu0 0
    %1320 = vmatpush1.bf16.msra.mxu0 0
    %1321 = vmatprep.subr.bf16.mxu0 0
    %1322 = vmatpush1.bf16.msra.mxu0 0
    %1323 = vmatprep.subr.bf16.mxu0 0
    %1324 = vmatpush1.bf16.msra.mxu0 0
    %1325 = vmatprep.mubr.bf16.mxu0 0
    %1326 = vmatmul.mubr.bf16.gmra.mrb[0].mxu0 %v1162
    %v1327 = vpop.f32.mrb[0].mxu0
    %v1328 = vadd.f32 %v868, %v1327
    %v1329 = vpop.f32.mrb[0].mxu0
    %v1330 = vadd.f32 %v872, %v1329
    %v1331 = vpop.f32.mrb[0].mxu0
    %v1332 = vadd.f32 %v868, %v1331
    %v1333 = vpop.f32.mrb[0].mxu0
    %v1334 = vadd.f32 %v872, %v1333
    %1335 = vdwg.mxu0
    %1336 = vmatprep.subr.bf16.mxu0 %v1074
    %1337 = vmatpush1.bf16.msra.mxu0 %v1073
    %1338 = vmatprep.subr.bf16.mxu0 %v1090
    %1339 = vmatpush1.bf16.msra.mxu0 %v1089
    %1340 = vmatprep.subr.bf16.mxu0 %v1106
    %1341 = vmatpush1.bf16.msra.mxu0 %v1105
    %1342 = vmatprep.subr.bf16.mxu0 0
    %1343 = vmatpush1.bf16.msra.mxu0 0
    %1344 = vmatprep.subr.bf16.mxu0 0
    %1345 = vmatpush1.bf16.msra.mxu0 0
    %1346 = vmatprep.subr.bf16.mxu0 0
    %1347 = vmatpush1.bf16.msra.mxu0 0
    %1348 = vmatprep.subr.bf16.mxu0 0
    %1349 = vmatpush1.bf16.msra.mxu0 0
    %1350 = vmatprep.subr.bf16.mxu0 0
    %1351 = vmatpush1.bf16.msra.mxu0 0
    %1352 = vmatprep.subr.bf16.mxu0 0
    %1353 = vmatpush1.bf16.msra.mxu0 0
    %1354 = vmatprep.subr.bf16.mxu0 0
    %1355 = vmatpush1.bf16.msra.mxu0 0
    %1356 = vmatprep.subr.bf16.mxu0 0
    %1357 = vmatpush1.bf16.msra.mxu0 0
    %1358 = vmatprep.subr.bf16.mxu0 0
    %1359 = vmatpush1.bf16.msra.mxu0 0
    %1360 = vmatprep.subr.bf16.mxu0 0
    %1361 = vmatpush1.bf16.msra.mxu0 0
    %1362 = vmatprep.subr.bf16.mxu0 0
    %1363 = vmatpush1.bf16.msra.mxu0 0
    %1364 = vmatprep.subr.bf16.mxu0 0
    %1365 = vmatpush1.bf16.msra.mxu0 0
    %1366 = vmatprep.subr.bf16.mxu0 0
    %1367 = vmatpush1.bf16.msra.mxu0 0
    %1368 = vmatprep.mubr.bf16.mxu0 0
    %1369 = vmatmul.mubr.bf16.gmra.mrb[0].mxu0 %v1162
    %v1370 = vpop.f32.mrb[0].mxu0
    %v1371 = vadd.f32 %v876, %v1370
    %v1372 = vpop.f32.mrb[0].mxu0
    %v1373 = vadd.f32 %v880, %v1372
    %v1374 = vpop.f32.mrb[0].mxu0
    %v1375 = vadd.f32 %v876, %v1374
    %v1376 = vpop.f32.mrb[0].mxu0
    %v1377 = vadd.f32 %v880, %v1376
    %1378 = vdwg.mxu0
    %1379 = vmatprep.subr.bf16.mxu0 %v1076
    %1380 = vmatpush1.bf16.msra.mxu0 %v1075
    %1381 = vmatprep.subr.bf16.mxu0 %v1092
    %1382 = vmatpush1.bf16.msra.mxu0 %v1091
    %1383 = vmatprep.subr.bf16.mxu0 %v1108
    %1384 = vmatpush1.bf16.msra.mxu0 %v1107
    %1385 = vmatprep.subr.bf16.mxu0 0
    %1386 = vmatpush1.bf16.msra.mxu0 0
    %1387 = vmatprep.subr.bf16.mxu0 0
    %1388 = vmatpush1.bf16.msra.mxu0 0
    %1389 = vmatprep.subr.bf16.mxu0 0
    %1390 = vmatpush1.bf16.msra.mxu0 0
    %1391 = vmatprep.subr.bf16.mxu0 0
    %1392 = vmatpush1.bf16.msra.mxu0 0
    %1393 = vmatprep.subr.bf16.mxu0 0
    %1394 = vmatpush1.bf16.msra.mxu0 0
    %1395 = vmatprep.subr.bf16.mxu0 0
    %1396 = vmatpush1.bf16.msra.mxu0 0
    %1397 = vmatprep.subr.bf16.mxu0 0
    %1398 = vmatpush1.bf16.msra.mxu0 0
    %1399 = vmatprep.subr.bf16.mxu0 0
    %1400 = vmatpush1.bf16.msra.mxu0 0
    %1401 = vmatprep.subr.bf16.mxu0 0
    %1402 = vmatpush1.bf16.msra.mxu0 0
    %1403 = vmatprep.subr.bf16.mxu0 0
    %1404 = vmatpush1.bf16.msra.mxu0 0
    %1405 = vmatprep.subr.bf16.mxu0 0
    %1406 = vmatpush1.bf16.msra.mxu0 0
    %1407 = vmatprep.subr.bf16.mxu0 0
    %1408 = vmatpush1.bf16.msra.mxu0 0
    %1409 = vmatprep.subr.bf16.mxu0 0
    %1410 = vmatpush1.bf16.msra.mxu0 0
    %1411 = vmatprep.mubr.bf16.mxu0 0
    %1412 = vmatmul.mubr.bf16.gmra.mrb[0].mxu0 %v1162
    %v1413 = vpop.f32.mrb[0].mxu0
    %v1414 = vadd.f32 %v884, %v1413
    %v1415 = vpop.f32.mrb[0].mxu0
    %v1416 = vadd.f32 %v888, %v1415
    %v1417 = vpop.f32.mrb[0].mxu0
    %v1418 = vadd.f32 %v884, %v1417
    %v1419 = vpop.f32.mrb[0].mxu0
    %v1420 = vadd.f32 %v888, %v1419
    %1421 = vdwg.mxu0
    %1422 = vmatprep.subr.bf16.mxu0 %v1078
    %1423 = vmatpush1.bf16.msra.mxu0 %v1077
    %1424 = vmatprep.subr.bf16.mxu0 %v1094
    %1425 = vmatpush1.bf16.msra.mxu0 %v1093
    %1426 = vmatprep.subr.bf16.mxu0 %v1110
    %1427 = vmatpush1.bf16.msra.mxu0 %v1109
    %1428 = vmatprep.subr.bf16.mxu0 0
    %1429 = vmatpush1.bf16.msra.mxu0 0
    %1430 = vmatprep.subr.bf16.mxu0 0
    %1431 = vmatpush1.bf16.msra.mxu0 0
    %1432 = vmatprep.subr.bf16.mxu0 0
    %1433 = vmatpush1.bf16.msra.mxu0 0
    %1434 = vmatprep.subr.bf16.mxu0 0
    %1435 = vmatpush1.bf16.msra.mxu0 0
    %1436 = vmatprep.subr.bf16.mxu0 0
    %1437 = vmatpush1.bf16.msra.mxu0 0
    %1438 = vmatprep.subr.bf16.mxu0 0
    %1439 = vmatpush1.bf16.msra.mxu0 0
    %1440 = vmatprep.subr.bf16.mxu0 0
    %1441 = vmatpush1.bf16.msra.mxu0 0
    %1442 = vmatprep.subr.bf16.mxu0 0
    %1443 = vmatpush1.bf16.msra.mxu0 0
    %1444 = vmatprep.subr.bf16.mxu0 0
    %1445 = vmatpush1.bf16.msra.mxu0 0
    %1446 = vmatprep.subr.bf16.mxu0 0
    %1447 = vmatpush1.bf16.msra.mxu0 0
    %1448 = vmatprep.subr.bf16.mxu0 0
    %1449 = vmatpush1.bf16.msra.mxu0 0
    %1450 = vmatprep.subr.bf16.mxu0 0
    %1451 = vmatpush1.bf16.msra.mxu0 0
    %1452 = vmatprep.subr.bf16.mxu0 0
    %1453 = vmatpush1.bf16.msra.mxu0 0
    %1454 = vmatprep.mubr.bf16.mxu0 0
    %1455 = vmatmul.mubr.bf16.gmra.mrb[0].mxu0 %v1162
    %v1456 = vpop.f32.mrb[0].mxu0
    %v1457 = vadd.f32 %v892, %v1456
    %v1458 = vpop.f32.mrb[0].mxu0
    %v1459 = vadd.f32 %v896, %v1458
    %v1460 = vpop.f32.mrb[0].mxu0
    %v1461 = vadd.f32 %v892, %v1460
    %v1462 = vpop.f32.mrb[0].mxu0
    %v1463 = vadd.f32 %v896, %v1462
    %1464 = vdwg.mxu0
    %1465 = vmatprep.subr.bf16.mxu0 %v1080
    %1466 = vmatpush1.bf16.msra.mxu0 %v1079
    %1467 = vmatprep.subr.bf16.mxu0 %v1096
    %1468 = vmatpush1.bf16.msra.mxu0 %v1095
    %1469 = vmatprep.subr.bf16.mxu0 %v1112
    %1470 = vmatpush1.bf16.msra.mxu0 %v1111
    %1471 = vmatprep.subr.bf16.mxu0 0
    %1472 = vmatpush1.bf16.msra.mxu0 0
    %1473 = vmatprep.subr.bf16.mxu0 0
    %1474 = vmatpush1.bf16.msra.mxu0 0
    %1475 = vmatprep.subr.bf16.mxu0 0
    %1476 = vmatpush1.bf16.msra.mxu0 0
    %1477 = vmatprep.subr.bf16.mxu0 0
    %1478 = vmatpush1.bf16.msra.mxu0 0
    %1479 = vmatprep.subr.bf16.mxu0 0
    %1480 = vmatpush1.bf16.msra.mxu0 0
    %1481 = vmatprep.subr.bf16.mxu0 0
    %1482 = vmatpush1.bf16.msra.mxu0 0
    %1483 = vmatprep.subr.bf16.mxu0 0
    %1484 = vmatpush1.bf16.msra.mxu0 0
    %1485 = vmatprep.subr.bf16.mxu0 0
    %1486 = vmatpush1.bf16.msra.mxu0 0
    %1487 = vmatprep.subr.bf16.mxu0 0
    %1488 = vmatpush1.bf16.msra.mxu0 0
    %1489 = vmatprep.subr.bf16.mxu0 0
    %1490 = vmatpush1.bf16.msra.mxu0 0
    %1491 = vmatprep.subr.bf16.mxu0 0
    %1492 = vmatpush1.bf16.msra.mxu0 0
    %1493 = vmatprep.subr.bf16.mxu0 0
    %1494 = vmatpush1.bf16.msra.mxu0 0
    %1495 = vmatprep.subr.bf16.mxu0 0
    %1496 = vmatpush1.bf16.msra.mxu0 0
    %1497 = vmatprep.mubr.bf16.mxu0 0
    %1498 = vmatmul.mubr.bf16.gmra.mrb[0].mxu0 %v1162
    %v1499 = vpop.f32.mrb[0].mxu0
    %v1500 = vadd.f32 %v900, %v1499
    %v1501 = vpop.f32.mrb[0].mxu0
    %v1502 = vadd.f32 %v904, %v1501
    %v1503 = vpop.f32.mrb[0].mxu0
    %v1504 = vadd.f32 %v900, %v1503
    %v1505 = vpop.f32.mrb[0].mxu0
    %v1506 = vadd.f32 %v904, %v1505
    %1507 = vdwg.mxu0
    %v1508 = vmax.f32 %v1199, 0.0
    %v1509 = vmax.f32 %v1201, 0.0
    %v1510 = vmax.f32 %v1242, 0.0
    %v1511 = vmax.f32 %v1244, 0.0
    %v1512 = vmax.f32 %v1285, 0.0
    %v1513 = vmax.f32 %v1287, 0.0
    %v1514 = vmax.f32 %v1328, 0.0
    %v1515 = vmax.f32 %v1330, 0.0
    %v1516 = vmax.f32 %v1371, 0.0
    %v1517 = vmax.f32 %v1373, 0.0
    %v1518 = vmax.f32 %v1414, 0.0
    %v1519 = vmax.f32 %v1416, 0.0
    %v1520 = vmax.f32 %v1457, 0.0
    %v1521 = vmax.f32 %v1459, 0.0
    %v1522 = vmax.f32 %v1500, 0.0
    %v1523 = vmax.f32 %v1502, 0.0
    %v1524 = vmax.f32 %v1203, 0.0
    %v1525 = vmax.f32 %v1205, 0.0
    %v1526 = vmax.f32 %v1246, 0.0
    %v1527 = vmax.f32 %v1248, 0.0
    %v1528 = vmax.f32 %v1289, 0.0
    %v1529 = vmax.f32 %v1291, 0.0
    %v1530 = vmax.f32 %v1332, 0.0
    %v1531 = vmax.f32 %v1334, 0.0
    %v1532 = vmax.f32 %v1375, 0.0
    %v1533 = vmax.f32 %v1377, 0.0
    %v1534 = vmax.f32 %v1418, 0.0
    %v1535 = vmax.f32 %v1420, 0.0
    %v1536 = vmax.f32 %v1461, 0.0
    %v1537 = vmax.f32 %v1463, 0.0
    %v1538 = vmax.f32 %v1504, 0.0
    %v1539 = vmax.f32 %v1506, 0.0
    %v1540 = vpack.c.bf16 %v1524, %v1508
    %v1541 = vpack.c.bf16 %v1525, %v1509
    %v1542 = vpack.c.bf16 %v1526, %v1510
    %v1543 = vpack.c.bf16 %v1527, %v1511
    %v1544 = vpack.c.bf16 %v1528, %v1512
    %v1545 = vpack.c.bf16 %v1529, %v1513
    %v1546 = vpack.c.bf16 %v1530, %v1514
    %v1547 = vpack.c.bf16 %v1531, %v1515
    %v1548 = vpack.c.bf16 %v1532, %v1516
    %v1549 = vpack.c.bf16 %v1533, %v1517
    %v1550 = vpack.c.bf16 %v1534, %v1518
    %v1551 = vpack.c.bf16 %v1535, %v1519
    %v1552 = vpack.c.bf16 %v1536, %v1520
    %v1553 = vpack.c.bf16 %v1537, %v1521
    %v1554 = vpack.c.bf16 %v1538, %v1522
    %v1555 = vpack.c.bf16 %v1539, %v1523
    %v1556 = vld [vmem:[%s12] sm:$0xf]
    %v1557 = vld [vmem:[%s12 + $0x4] sm:$0xf]
    %v1558 = vld [vmem:[%s12 + $0x8] sm:$0xf]
    %v1559 = vld [vmem:[%s12 + $0xc] sm:$0xf]
    %v1560 = vld [vmem:[%s12 + $0x10] sm:$0xf]
    %v1561 = vld [vmem:[%s12 + $0x14] sm:$0xf]
    %v1562 = vld [vmem:[%s12 + $0x18] sm:$0xf]
    %v1563 = vld [vmem:[%s12 + $0x1c] sm:$0xf]
    %v1564 = vld [vmem:[%s12 + $0x20] sm:$0xf]
    %v1565 = vld [vmem:[%s12 + $0x24] sm:$0xf]
    %v1566 = vld [vmem:[%s12 + $0x28] sm:$0xf]
    %v1567 = vld [vmem:[%s12 + $0x2c] sm:$0xf]
    %v1568 = vld [vmem:[%s12 + $0x30] sm:$0xf]
    %v1569 = vld [vmem:[%s12 + $0x34] sm:$0xf]
    %v1570 = vld [vmem:[%s12 + $0x38] sm:$0xf]
    %v1571 = vld [vmem:[%s12 + $0x3c] sm:$0xf]
    %v1572 = vld [vmem:[%s12 + $0x40] sm:$0xf]
    %v1573 = vld [vmem:[%s12 + $0x44] sm:$0xf]
    %v1574 = vld [vmem:[%s12 + $0x48] sm:$0xf]
    %v1575 = vld [vmem:[%s12 + $0x4c] sm:$0xf]
    %v1576 = vld [vmem:[%s12 + $0x50] sm:$0xf]
    %v1577 = vld [vmem:[%s12 + $0x54] sm:$0xf]
    %v1578 = vld [vmem:[%s12 + $0x58] sm:$0xf]
    %v1579 = vld [vmem:[%s12 + $0x5c] sm:$0xf]
    %v1580 = vld [vmem:[%s12 + $0x60] sm:$0xf]
    %v1581 = vld [vmem:[%s12 + $0x64] sm:$0xf]
    %v1582 = vld [vmem:[%s12 + $0x68] sm:$0xf]
    %v1583 = vld [vmem:[%s12 + $0x6c] sm:$0xf]
    %v1584 = vld [vmem:[%s12 + $0x70] sm:$0xf]
    %v1585 = vld [vmem:[%s12 + $0x74] sm:$0xf]
    %v1586 = vld [vmem:[%s12 + $0x78] sm:$0xf]
    %v1587 = vld [vmem:[%s12 + $0x7c] sm:$0xf]
    %v1588 = vld [vmem:[%s12 + $0x80] sm:$0xf]
    %v1589 = vld [vmem:[%s12 + $0x84] sm:$0xf]
    %v1590 = vld [vmem:[%s12 + $0x88] sm:$0xf]
    %v1591 = vld [vmem:[%s12 + $0x8c] sm:$0xf]
    %v1592 = vld [vmem:[%s12 + $0x90] sm:$0xf]
    %v1593 = vld [vmem:[%s12 + $0x94] sm:$0xf]
    %v1594 = vld [vmem:[%s12 + $0x98] sm:$0xf]
    %v1595 = vld [vmem:[%s12 + $0x9c] sm:$0xf]
    %v1596 = vld [vmem:[%s12 + $0xa0] sm:$0xf]
    %v1597 = vld [vmem:[%s12 + $0xa4] sm:$0xf]
    %v1598 = vld [vmem:[%s12 + $0xa8] sm:$0xf]
    %v1599 = vld [vmem:[%s12 + $0xac] sm:$0xf]
    %v1600 = vld [vmem:[%s12 + $0xb0] sm:$0xf]
    %v1601 = vld [vmem:[%s12 + $0xb4] sm:$0xf]
    %v1602 = vld [vmem:[%s12 + $0xb8] sm:$0xf]
    %v1603 = vld [vmem:[%s12 + $0xbc] sm:$0xf]
    %v1604 = vld [vmem:[%s12 + $0xc0] sm:$0xf]
    %v1605 = vld [vmem:[%s12 + $0xc4] sm:$0xf]
    %v1606 = vld [vmem:[%s12 + $0xc8] sm:$0xf]
    %v1607 = vld [vmem:[%s12 + $0xcc] sm:$0xf]
    %v1608 = vld [vmem:[%s12 + $0xd0] sm:$0xf]
    %v1609 = vld [vmem:[%s12 + $0xd4] sm:$0xf]
    %v1610 = vld [vmem:[%s12 + $0xd8] sm:$0xf]
    %v1611 = vld [vmem:[%s12 + $0xdc] sm:$0xf]
    %v1612 = vld [vmem:[%s12 + $0xe0] sm:$0xf]
    %v1613 = vld [vmem:[%s12 + $0xe4] sm:$0xf]
    %v1614 = vld [vmem:[%s12 + $0xe8] sm:$0xf]
    %v1615 = vld [vmem:[%s12 + $0xec] sm:$0xf]
    %v1616 = vld [vmem:[%s12 + $0xf0] sm:$0xf]
    %v1617 = vld [vmem:[%s12 + $0xf4] sm:$0xf]
    %v1618 = vld [vmem:[%s12 + $0xf8] sm:$0xf]
    %v1619 = vld [vmem:[%s12 + $0xfc] sm:$0xf]
    %v1620 = vld [vmem:[%s12 + $0x100] sm:$0xf]
    %v1621 = vld [vmem:[%s12 + $0x104] sm:$0xf]
    %v1622 = vld [vmem:[%s12 + $0x108] sm:$0xf]
    %v1623 = vld [vmem:[%s12 + $0x10c] sm:$0xf]
    %v1624 = vld [vmem:[%s12 + $0x110] sm:$0xf]
    %v1625 = vld [vmem:[%s12 + $0x114] sm:$0xf]
    %v1626 = vld [vmem:[%s12 + $0x118] sm:$0xf]
    %v1627 = vld [vmem:[%s12 + $0x11c] sm:$0xf]
    %v1628 = vld [vmem:[%s12 + $0x120] sm:$0xf]
    %v1629 = vld [vmem:[%s12 + $0x124] sm:$0xf]
    %v1630 = vld [vmem:[%s12 + $0x128] sm:$0xf]
    %v1631 = vld [vmem:[%s12 + $0x12c] sm:$0xf]
    %v1632 = vld [vmem:[%s12 + $0x130] sm:$0xf]
    %v1633 = vld [vmem:[%s12 + $0x134] sm:$0xf]
    %v1634 = vld [vmem:[%s12 + $0x138] sm:$0xf]
    %v1635 = vld [vmem:[%s12 + $0x13c] sm:$0xf]
    %v1636 = vld [vmem:[%s12 + $0x140] sm:$0xf]
    %v1637 = vld [vmem:[%s12 + $0x144] sm:$0xf]
    %v1638 = vld [vmem:[%s12 + $0x148] sm:$0xf]
    %v1639 = vld [vmem:[%s12 + $0x14c] sm:$0xf]
    %v1640 = vld [vmem:[%s12 + $0x150] sm:$0xf]
    %v1641 = vld [vmem:[%s12 + $0x154] sm:$0xf]
    %v1642 = vld [vmem:[%s12 + $0x158] sm:$0xf]
    %v1643 = vld [vmem:[%s12 + $0x15c] sm:$0xf]
    %v1644 = vld [vmem:[%s12 + $0x160] sm:$0xf]
    %v1645 = vld [vmem:[%s12 + $0x164] sm:$0xf]
    %v1646 = vld [vmem:[%s12 + $0x168] sm:$0xf]
    %v1647 = vld [vmem:[%s12 + $0x16c] sm:$0xf]
    %v1648 = vld [vmem:[%s12 + $0x170] sm:$0xf]
    %v1649 = vld [vmem:[%s12 + $0x174] sm:$0xf]
    %v1650 = vld [vmem:[%s12 + $0x178] sm:$0xf]
    %v1651 = vld [vmem:[%s12 + $0x17c] sm:$0xf]
    %v1652 = vld [vmem:[%s12 + $0x180] sm:$0xf]
    %v1653 = vld [vmem:[%s12 + $0x184] sm:$0xf]
    %v1654 = vld [vmem:[%s12 + $0x188] sm:$0xf]
    %v1655 = vld [vmem:[%s12 + $0x18c] sm:$0xf]
    %v1656 = vld [vmem:[%s12 + $0x190] sm:$0xf]
    %v1657 = vld [vmem:[%s12 + $0x194] sm:$0xf]
    %v1658 = vld [vmem:[%s12 + $0x198] sm:$0xf]
    %v1659 = vld [vmem:[%s12 + $0x19c] sm:$0xf]
    %v1660 = vld [vmem:[%s12 + $0x1a0] sm:$0xf]
    %v1661 = vld [vmem:[%s12 + $0x1a4] sm:$0xf]
    %v1662 = vld [vmem:[%s12 + $0x1a8] sm:$0xf]
    %v1663 = vld [vmem:[%s12 + $0x1ac] sm:$0xf]
    %v1664 = vld [vmem:[%s12 + $0x1b0] sm:$0xf]
    %v1665 = vld [vmem:[%s12 + $0x1b4] sm:$0xf]
    %v1666 = vld [vmem:[%s12 + $0x1b8] sm:$0xf]
    %v1667 = vld [vmem:[%s12 + $0x1bc] sm:$0xf]
    %v1668 = vld [vmem:[%s12 + $0x1c0] sm:$0xf]
    %v1669 = vld [vmem:[%s12 + $0x1c4] sm:$0xf]
    %v1670 = vld [vmem:[%s12 + $0x1c8] sm:$0xf]
    %v1671 = vld [vmem:[%s12 + $0x1cc] sm:$0xf]
    %v1672 = vld [vmem:[%s12 + $0x1d0] sm:$0xf]
    %v1673 = vld [vmem:[%s12 + $0x1d4] sm:$0xf]
    %v1674 = vld [vmem:[%s12 + $0x1d8] sm:$0xf]
    %v1675 = vld [vmem:[%s12 + $0x1dc] sm:$0xf]
    %v1676 = vld [vmem:[%s12 + $0x1e0] sm:$0xf]
    %v1677 = vld [vmem:[%s12 + $0x1e4] sm:$0xf]
    %v1678 = vld [vmem:[%s12 + $0x1e8] sm:$0xf]
    %v1679 = vld [vmem:[%s12 + $0x1ec] sm:$0xf]
    %v1680 = vld [vmem:[%s12 + $0x1f0] sm:$0xf]
    %v1681 = vld [vmem:[%s12 + $0x1f4] sm:$0xf]
    %v1682 = vld [vmem:[%s12 + $0x1f8] sm:$0xf]
    %v1683 = vld [vmem:[%s12 + $0x1fc] sm:$0xf]
    %v1684 = vld [vmem:[%s12 + $0x200] sm:$0xf]
    %v1685 = vld [vmem:[%s12 + $0x204] sm:$0xf]
    %v1686 = vld [vmem:[%s12 + $0x208] sm:$0xf]
    %v1687 = vld [vmem:[%s12 + $0x20c] sm:$0xf]
    %v1688 = vld [vmem:[%s12 + $0x210] sm:$0xf]
    %v1689 = vld [vmem:[%s12 + $0x214] sm:$0xf]
    %v1690 = vld [vmem:[%s12 + $0x218] sm:$0xf]
    %v1691 = vld [vmem:[%s12 + $0x21c] sm:$0xf]
    %v1692 = vld [vmem:[%s12 + $0x220] sm:$0xf]
    %v1693 = vld [vmem:[%s12 + $0x224] sm:$0xf]
    %v1694 = vld [vmem:[%s12 + $0x228] sm:$0xf]
    %v1695 = vld [vmem:[%s12 + $0x22c] sm:$0xf]
    %v1696 = vld [vmem:[%s12 + $0x230] sm:$0xf]
    %v1697 = vld [vmem:[%s12 + $0x234] sm:$0xf]
    %v1698 = vld [vmem:[%s12 + $0x238] sm:$0xf]
    %v1699 = vld [vmem:[%s12 + $0x23c] sm:$0xf]
    %v1700 = vld [vmem:[%s12 + $0x240] sm:$0xf]
    %v1701 = vld [vmem:[%s12 + $0x244] sm:$0xf]
    %v1702 = vld [vmem:[%s12 + $0x248] sm:$0xf]
    %v1703 = vld [vmem:[%s12 + $0x24c] sm:$0xf]
    %v1704 = vld [vmem:[%s12 + $0x250] sm:$0xf]
    %v1705 = vld [vmem:[%s12 + $0x254] sm:$0xf]
    %v1706 = vld [vmem:[%s12 + $0x258] sm:$0xf]
    %v1707 = vld [vmem:[%s12 + $0x25c] sm:$0xf]
    %v1708 = vld [vmem:[%s12 + $0x260] sm:$0xf]
    %v1709 = vld [vmem:[%s12 + $0x264] sm:$0xf]
    %v1710 = vld [vmem:[%s12 + $0x268] sm:$0xf]
    %v1711 = vld [vmem:[%s12 + $0x26c] sm:$0xf]
    %v1712 = vld [vmem:[%s12 + $0x270] sm:$0xf]
    %v1713 = vld [vmem:[%s12 + $0x274] sm:$0xf]
    %v1714 = vld [vmem:[%s12 + $0x278] sm:$0xf]
    %v1715 = vld [vmem:[%s12 + $0x27c] sm:$0xf]
    %v1716 = vld [vmem:[%s12 + $0x280] sm:$0xf]
    %v1717 = vld [vmem:[%s12 + $0x284] sm:$0xf]
    %v1718 = vld [vmem:[%s12 + $0x288] sm:$0xf]
    %v1719 = vld [vmem:[%s12 + $0x28c] sm:$0xf]
    %v1720 = vld [vmem:[%s12 + $0x290] sm:$0xf]
    %v1721 = vld [vmem:[%s12 + $0x294] sm:$0xf]
    %v1722 = vld [vmem:[%s12 + $0x298] sm:$0xf]
    %v1723 = vld [vmem:[%s12 + $0x29c] sm:$0xf]
    %v1724 = vld [vmem:[%s12 + $0x2a0] sm:$0xf]
    %v1725 = vld [vmem:[%s12 + $0x2a4] sm:$0xf]
    %v1726 = vld [vmem:[%s12 + $0x2a8] sm:$0xf]
    %v1727 = vld [vmem:[%s12 + $0x2ac] sm:$0xf]
    %v1728 = vld [vmem:[%s12 + $0x2b0] sm:$0xf]
    %v1729 = vld [vmem:[%s12 + $0x2b4] sm:$0xf]
    %v1730 = vld [vmem:[%s12 + $0x2b8] sm:$0xf]
    %v1731 = vld [vmem:[%s12 + $0x2bc] sm:$0xf]
    %v1732 = vld [vmem:[%s12 + $0x2c0] sm:$0xf]
    %v1733 = vld [vmem:[%s12 + $0x2c4] sm:$0xf]
    %v1734 = vld [vmem:[%s12 + $0x2c8] sm:$0xf]
    %v1735 = vld [vmem:[%s12 + $0x2cc] sm:$0xf]
    %v1736 = vld [vmem:[%s12 + $0x2d0] sm:$0xf]
    %v1737 = vld [vmem:[%s12 + $0x2d4] sm:$0xf]
    %v1738 = vld [vmem:[%s12 + $0x2d8] sm:$0xf]
    %v1739 = vld [vmem:[%s12 + $0x2dc] sm:$0xf]
    %v1740 = vld [vmem:[%s12 + $0x2e0] sm:$0xf]
    %v1741 = vld [vmem:[%s12 + $0x2e4] sm:$0xf]
    %v1742 = vld [vmem:[%s12 + $0x2e8] sm:$0xf]
    %v1743 = vld [vmem:[%s12 + $0x2ec] sm:$0xf]
    %v1744 = vld [vmem:[%s12 + $0x2f0] sm:$0xf]
    %v1745 = vld [vmem:[%s12 + $0x2f4] sm:$0xf]
    %v1746 = vld [vmem:[%s12 + $0x2f8] sm:$0xf]
    %v1747 = vld [vmem:[%s12 + $0x2fc] sm:$0xf]
    %v1748 = vld [vmem:[%s12 + $0x300] sm:$0xf]
    %v1749 = vld [vmem:[%s12 + $0x304] sm:$0xf]
    %v1750 = vld [vmem:[%s12 + $0x308] sm:$0xf]
    %v1751 = vld [vmem:[%s12 + $0x30c] sm:$0xf]
    %v1752 = vld [vmem:[%s12 + $0x310] sm:$0xf]
    %v1753 = vld [vmem:[%s12 + $0x314] sm:$0xf]
    %v1754 = vld [vmem:[%s12 + $0x318] sm:$0xf]
    %v1755 = vld [vmem:[%s12 + $0x31c] sm:$0xf]
    %v1756 = vld [vmem:[%s12 + $0x320] sm:$0xf]
    %v1757 = vld [vmem:[%s12 + $0x324] sm:$0xf]
    %v1758 = vld [vmem:[%s12 + $0x328] sm:$0xf]
    %v1759 = vld [vmem:[%s12 + $0x32c] sm:$0xf]
    %v1760 = vld [vmem:[%s12 + $0x330] sm:$0xf]
    %v1761 = vld [vmem:[%s12 + $0x334] sm:$0xf]
    %v1762 = vld [vmem:[%s12 + $0x338] sm:$0xf]
    %v1763 = vld [vmem:[%s12 + $0x33c] sm:$0xf]
    %v1764 = vld [vmem:[%s12 + $0x340] sm:$0xf]
    %v1765 = vld [vmem:[%s12 + $0x344] sm:$0xf]
    %v1766 = vld [vmem:[%s12 + $0x348] sm:$0xf]
    %v1767 = vld [vmem:[%s12 + $0x34c] sm:$0xf]
    %v1768 = vld [vmem:[%s12 + $0x350] sm:$0xf]
    %v1769 = vld [vmem:[%s12 + $0x354] sm:$0xf]
    %v1770 = vld [vmem:[%s12 + $0x358] sm:$0xf]
    %v1771 = vld [vmem:[%s12 + $0x35c] sm:$0xf]
    %v1772 = vld [vmem:[%s12 + $0x360] sm:$0xf]
    %v1773 = vld [vmem:[%s12 + $0x364] sm:$0xf]
    %v1774 = vld [vmem:[%s12 + $0x368] sm:$0xf]
    %v1775 = vld [vmem:[%s12 + $0x36c] sm:$0xf]
    %v1776 = vld [vmem:[%s12 + $0x370] sm:$0xf]
    %v1777 = vld [vmem:[%s12 + $0x374] sm:$0xf]
    %v1778 = vld [vmem:[%s12 + $0x378] sm:$0xf]
    %v1779 = vld [vmem:[%s12 + $0x37c] sm:$0xf]
    %v1780 = vld [vmem:[%s12 + $0x380] sm:$0xf]
    %v1781 = vld [vmem:[%s12 + $0x384] sm:$0xf]
    %v1782 = vld [vmem:[%s12 + $0x388] sm:$0xf]
    %v1783 = vld [vmem:[%s12 + $0x38c] sm:$0xf]
    %v1784 = vld [vmem:[%s12 + $0x390] sm:$0xf]
    %v1785 = vld [vmem:[%s12 + $0x394] sm:$0xf]
    %v1786 = vld [vmem:[%s12 + $0x398] sm:$0xf]
    %v1787 = vld [vmem:[%s12 + $0x39c] sm:$0xf]
    %v1788 = vld [vmem:[%s12 + $0x3a0] sm:$0xf]
    %v1789 = vld [vmem:[%s12 + $0x3a4] sm:$0xf]
    %v1790 = vld [vmem:[%s12 + $0x3a8] sm:$0xf]
    %v1791 = vld [vmem:[%s12 + $0x3ac] sm:$0xf]
    %v1792 = vld [vmem:[%s12 + $0x3b0] sm:$0xf]
    %v1793 = vld [vmem:[%s12 + $0x3b4] sm:$0xf]
    %v1794 = vld [vmem:[%s12 + $0x3b8] sm:$0xf]
    %v1795 = vld [vmem:[%s12 + $0x3bc] sm:$0xf]
    %v1796 = vld [vmem:[%s12 + $0x3c0] sm:$0xf]
    %v1797 = vld [vmem:[%s12 + $0x3c4] sm:$0xf]
    %v1798 = vld [vmem:[%s12 + $0x3c8] sm:$0xf]
    %v1799 = vld [vmem:[%s12 + $0x3cc] sm:$0xf]
    %v1800 = vld [vmem:[%s12 + $0x3d0] sm:$0xf]
    %v1801 = vld [vmem:[%s12 + $0x3d4] sm:$0xf]
    %v1802 = vld [vmem:[%s12 + $0x3d8] sm:$0xf]
    %v1803 = vld [vmem:[%s12 + $0x3dc] sm:$0xf]
    %v1804 = vld [vmem:[%s12 + $0x3e0] sm:$0xf]
    %v1805 = vld [vmem:[%s12 + $0x3e4] sm:$0xf]
    %v1806 = vld [vmem:[%s12 + $0x3e8] sm:$0xf]
    %v1807 = vld [vmem:[%s12 + $0x3ec] sm:$0xf]
    %v1808 = vld [vmem:[%s12 + $0x3f0] sm:$0xf]
    %v1809 = vld [vmem:[%s12 + $0x3f4] sm:$0xf]
    %v1810 = vld [vmem:[%s12 + $0x3f8] sm:$0xf]
    %v1811 = vld [vmem:[%s12 + $0x3fc] sm:$0xf]
    %v1812 = vld [vmem:[%s13] sm:$0x1]
    %v1814 = vlaneseq
    %v1815 = vshrl.u32 %v1814, 7
    %v1816 = vsub.s32 0, %v1815
    %v1817 = vrot.slane %v1812, %v1816
    %v2075 = vunpack.c.l.b16 %v1556
    %v2076 = vunpack.c.l.b16 %v1557
    %v2077 = vunpack.c.l.b16 %v1558
    %v2078 = vunpack.c.l.b16 %v1559
    %v2079 = vunpack.c.l.b16 %v1560
    %v2080 = vunpack.c.l.b16 %v1561
    %v2081 = vunpack.c.l.b16 %v1562
    %v2082 = vunpack.c.l.b16 %v1563
    %v2083 = vunpack.c.l.b16 %v1564
    %v2084 = vunpack.c.l.b16 %v1565
    %v2085 = vunpack.c.l.b16 %v1566
    %v2086 = vunpack.c.l.b16 %v1567
    %v2087 = vunpack.c.l.b16 %v1568
    %v2088 = vunpack.c.l.b16 %v1569
    %v2089 = vunpack.c.l.b16 %v1570
    %v2090 = vunpack.c.l.b16 %v1571
    %v2091 = vunpack.c.l.b16 %v1572
    %v2092 = vunpack.c.l.b16 %v1573
    %v2093 = vunpack.c.l.b16 %v1574
    %v2094 = vunpack.c.l.b16 %v1575
    %v2095 = vunpack.c.l.b16 %v1576
    %v2096 = vunpack.c.l.b16 %v1577
    %v2097 = vunpack.c.l.b16 %v1578
    %v2098 = vunpack.c.l.b16 %v1579
    %v2099 = vunpack.c.l.b16 %v1580
    %v2100 = vunpack.c.l.b16 %v1581
    %v2101 = vunpack.c.l.b16 %v1582
    %v2102 = vunpack.c.l.b16 %v1583
    %v2103 = vunpack.c.l.b16 %v1584
    %v2104 = vunpack.c.l.b16 %v1585
    %v2105 = vunpack.c.l.b16 %v1586
    %v2106 = vunpack.c.l.b16 %v1587
    %v2107 = vunpack.c.l.b16 %v1588
    %v2108 = vunpack.c.l.b16 %v1589
    %v2109 = vunpack.c.l.b16 %v1590
    %v2110 = vunpack.c.l.b16 %v1591
    %v2111 = vunpack.c.l.b16 %v1592
    %v2112 = vunpack.c.l.b16 %v1593
    %v2113 = vunpack.c.l.b16 %v1594
    %v2114 = vunpack.c.l.b16 %v1595
    %v2115 = vunpack.c.l.b16 %v1596
    %v2116 = vunpack.c.l.b16 %v1597
    %v2117 = vunpack.c.l.b16 %v1598
    %v2118 = vunpack.c.l.b16 %v1599
    %v2119 = vunpack.c.l.b16 %v1600
    %v2120 = vunpack.c.l.b16 %v1601
    %v2121 = vunpack.c.l.b16 %v1602
    %v2122 = vunpack.c.l.b16 %v1603
    %v2123 = vunpack.c.l.b16 %v1604
    %v2124 = vunpack.c.l.b16 %v1605
    %v2125 = vunpack.c.l.b16 %v1606
    %v2126 = vunpack.c.l.b16 %v1607
    %v2127 = vunpack.c.l.b16 %v1608
    %v2128 = vunpack.c.l.b16 %v1609
    %v2129 = vunpack.c.l.b16 %v1610
    %v2130 = vunpack.c.l.b16 %v1611
    %v2131 = vunpack.c.l.b16 %v1612
    %v2132 = vunpack.c.l.b16 %v1613
    %v2133 = vunpack.c.l.b16 %v1614
    %v2134 = vunpack.c.l.b16 %v1615
    %v2135 = vunpack.c.l.b16 %v1616
    %v2136 = vunpack.c.l.b16 %v1617
    %v2137 = vunpack.c.l.b16 %v1618
    %v2138 = vunpack.c.l.b16 %v1619
    %v2139 = vunpack.c.l.b16 %v1620
    %v2140 = vunpack.c.l.b16 %v1621
    %v2141 = vunpack.c.l.b16 %v1622
    %v2142 = vunpack.c.l.b16 %v1623
    %v2143 = vunpack.c.l.b16 %v1624
    %v2144 = vunpack.c.l.b16 %v1625
    %v2145 = vunpack.c.l.b16 %v1626
    %v2146 = vunpack.c.l.b16 %v1627
    %v2147 = vunpack.c.l.b16 %v1628
    %v2148 = vunpack.c.l.b16 %v1629
    %v2149 = vunpack.c.l.b16 %v1630
    %v2150 = vunpack.c.l.b16 %v1631
    %v2151 = vunpack.c.l.b16 %v1632
    %v2152 = vunpack.c.l.b16 %v1633
    %v2153 = vunpack.c.l.b16 %v1634
    %v2154 = vunpack.c.l.b16 %v1635
    %v2155 = vunpack.c.l.b16 %v1636
    %v2156 = vunpack.c.l.b16 %v1637
    %v2157 = vunpack.c.l.b16 %v1638
    %v2158 = vunpack.c.l.b16 %v1639
    %v2159 = vunpack.c.l.b16 %v1640
    %v2160 = vunpack.c.l.b16 %v1641
    %v2161 = vunpack.c.l.b16 %v1642
    %v2162 = vunpack.c.l.b16 %v1643
    %v2163 = vunpack.c.l.b16 %v1644
    %v2164 = vunpack.c.l.b16 %v1645
    %v2165 = vunpack.c.l.b16 %v1646
    %v2166 = vunpack.c.l.b16 %v1647
    %v2167 = vunpack.c.l.b16 %v1648
    %v2168 = vunpack.c.l.b16 %v1649
    %v2169 = vunpack.c.l.b16 %v1650
    %v2170 = vunpack.c.l.b16 %v1651
    %v2171 = vunpack.c.l.b16 %v1652
    %v2172 = vunpack.c.l.b16 %v1653
    %v2173 = vunpack.c.l.b16 %v1654
    %v2174 = vunpack.c.l.b16 %v1655
    %v2175 = vunpack.c.l.b16 %v1656
    %v2176 = vunpack.c.l.b16 %v1657
    %v2177 = vunpack.c.l.b16 %v1658
    %v2178 = vunpack.c.l.b16 %v1659
    %v2179 = vunpack.c.l.b16 %v1660
    %v2180 = vunpack.c.l.b16 %v1661
    %v2181 = vunpack.c.l.b16 %v1662
    %v2182 = vunpack.c.l.b16 %v1663
    %v2183 = vunpack.c.l.b16 %v1664
    %v2184 = vunpack.c.l.b16 %v1665
    %v2185 = vunpack.c.l.b16 %v1666
    %v2186 = vunpack.c.l.b16 %v1667
    %v2187 = vunpack.c.l.b16 %v1668
    %v2188 = vunpack.c.l.b16 %v1669
    %v2189 = vunpack.c.l.b16 %v1670
    %v2190 = vunpack.c.l.b16 %v1671
    %v2191 = vunpack.c.l.b16 %v1672
    %v2192 = vunpack.c.l.b16 %v1673
    %v2193 = vunpack.c.l.b16 %v1674
    %v2194 = vunpack.c.l.b16 %v1675
    %v2195 = vunpack.c.l.b16 %v1676
    %v2196 = vunpack.c.l.b16 %v1677
    %v2197 = vunpack.c.l.b16 %v1678
    %v2198 = vunpack.c.l.b16 %v1679
    %v2199 = vunpack.c.l.b16 %v1680
    %v2200 = vunpack.c.l.b16 %v1681
    %v2201 = vunpack.c.l.b16 %v1682
    %v2202 = vunpack.c.l.b16 %v1683
    %v2203 = vunpack.c.l.b16 %v1684
    %v2204 = vunpack.c.l.b16 %v1685
    %v2205 = vunpack.c.l.b16 %v1686
    %v2206 = vunpack.c.l.b16 %v1687
    %v2207 = vunpack.c.l.b16 %v1688
    %v2208 = vunpack.c.l.b16 %v1689
    %v2209 = vunpack.c.l.b16 %v1690
    %v2210 = vunpack.c.l.b16 %v1691
    %v2211 = vunpack.c.l.b16 %v1692
    %v2212 = vunpack.c.l.b16 %v1693
    %v2213 = vunpack.c.l.b16 %v1694
    %v2214 = vunpack.c.l.b16 %v1695
    %v2215 = vunpack.c.l.b16 %v1696
    %v2216 = vunpack.c.l.b16 %v1697
    %v2217 = vunpack.c.l.b16 %v1698
    %v2218 = vunpack.c.l.b16 %v1699
    %v2219 = vunpack.c.l.b16 %v1700
    %v2220 = vunpack.c.l.b16 %v1701
    %v2221 = vunpack.c.l.b16 %v1702
    %v2222 = vunpack.c.l.b16 %v1703
    %v2223 = vunpack.c.l.b16 %v1704
    %v2224 = vunpack.c.l.b16 %v1705
    %v2225 = vunpack.c.l.b16 %v1706
    %v2226 = vunpack.c.l.b16 %v1707
    %v2227 = vunpack.c.l.b16 %v1708
    %v2228 = vunpack.c.l.b16 %v1709
    %v2229 = vunpack.c.l.b16 %v1710
    %v2230 = vunpack.c.l.b16 %v1711
    %v2231 = vunpack.c.l.b16 %v1712
    %v2232 = vunpack.c.l.b16 %v1713
    %v2233 = vunpack.c.l.b16 %v1714
    %v2234 = vunpack.c.l.b16 %v1715
    %v2235 = vunpack.c.l.b16 %v1716
    %v2236 = vunpack.c.l.b16 %v1717
    %v2237 = vunpack.c.l.b16 %v1718
    %v2238 = vunpack.c.l.b16 %v1719
    %v2239 = vunpack.c.l.b16 %v1720
    %v2240 = vunpack.c.l.b16 %v1721
    %v2241 = vunpack.c.l.b16 %v1722
    %v2242 = vunpack.c.l.b16 %v1723
    %v2243 = vunpack.c.l.b16 %v1724
    %v2244 = vunpack.c.l.b16 %v1725
    %v2245 = vunpack.c.l.b16 %v1726
    %v2246 = vunpack.c.l.b16 %v1727
    %v2247 = vunpack.c.l.b16 %v1728
    %v2248 = vunpack.c.l.b16 %v1729
    %v2249 = vunpack.c.l.b16 %v1730
    %v2250 = vunpack.c.l.b16 %v1731
    %v2251 = vunpack.c.l.b16 %v1732
    %v2252 = vunpack.c.l.b16 %v1733
    %v2253 = vunpack.c.l.b16 %v1734
    %v2254 = vunpack.c.l.b16 %v1735
    %v2255 = vunpack.c.l.b16 %v1736
    %v2256 = vunpack.c.l.b16 %v1737
    %v2257 = vunpack.c.l.b16 %v1738
    %v2258 = vunpack.c.l.b16 %v1739
    %v2259 = vunpack.c.l.b16 %v1740
    %v2260 = vunpack.c.l.b16 %v1741
    %v2261 = vunpack.c.l.b16 %v1742
    %v2262 = vunpack.c.l.b16 %v1743
    %v2263 = vunpack.c.l.b16 %v1744
    %v2264 = vunpack.c.l.b16 %v1745
    %v2265 = vunpack.c.l.b16 %v1746
    %v2266 = vunpack.c.l.b16 %v1747
    %v2267 = vunpack.c.l.b16 %v1748
    %v2268 = vunpack.c.l.b16 %v1749
    %v2269 = vunpack.c.l.b16 %v1750
    %v2270 = vunpack.c.l.b16 %v1751
    %v2271 = vunpack.c.l.b16 %v1752
    %v2272 = vunpack.c.l.b16 %v1753
    %v2273 = vunpack.c.l.b16 %v1754
    %v2274 = vunpack.c.l.b16 %v1755
    %v2275 = vunpack.c.l.b16 %v1756
    %v2276 = vunpack.c.l.b16 %v1757
    %v2277 = vunpack.c.l.b16 %v1758
    %v2278 = vunpack.c.l.b16 %v1759
    %v2279 = vunpack.c.l.b16 %v1760
    %v2280 = vunpack.c.l.b16 %v1761
    %v2281 = vunpack.c.l.b16 %v1762
    %v2282 = vunpack.c.l.b16 %v1763
    %v2283 = vunpack.c.l.b16 %v1764
    %v2284 = vunpack.c.l.b16 %v1765
    %v2285 = vunpack.c.l.b16 %v1766
    %v2286 = vunpack.c.l.b16 %v1767
    %v2287 = vunpack.c.l.b16 %v1768
    %v2288 = vunpack.c.l.b16 %v1769
    %v2289 = vunpack.c.l.b16 %v1770
    %v2290 = vunpack.c.l.b16 %v1771
    %v2291 = vunpack.c.l.b16 %v1772
    %v2292 = vunpack.c.l.b16 %v1773
    %v2293 = vunpack.c.l.b16 %v1774
    %v2294 = vunpack.c.l.b16 %v1775
    %v2295 = vunpack.c.l.b16 %v1776
    %v2296 = vunpack.c.l.b16 %v1777
    %v2297 = vunpack.c.l.b16 %v1778
    %v2298 = vunpack.c.l.b16 %v1779
    %v2299 = vunpack.c.l.b16 %v1780
    %v2300 = vunpack.c.l.b16 %v1781
    %v2301 = vunpack.c.l.b16 %v1782
    %v2302 = vunpack.c.l.b16 %v1783
    %v2303 = vunpack.c.l.b16 %v1784
    %v2304 = vunpack.c.l.b16 %v1785
    %v2305 = vunpack.c.l.b16 %v1786
    %v2306 = vunpack.c.l.b16 %v1787
    %v2307 = vunpack.c.l.b16 %v1788
    %v2308 = vunpack.c.l.b16 %v1789
    %v2309 = vunpack.c.l.b16 %v1790
    %v2310 = vunpack.c.l.b16 %v1791
    %v2311 = vunpack.c.l.b16 %v1792
    %v2312 = vunpack.c.l.b16 %v1793
    %v2313 = vunpack.c.l.b16 %v1794
    %v2314 = vunpack.c.l.b16 %v1795
    %v2315 = vunpack.c.l.b16 %v1796
    %v2316 = vunpack.c.l.b16 %v1797
    %v2317 = vunpack.c.l.b16 %v1798
    %v2318 = vunpack.c.l.b16 %v1799
    %v2319 = vunpack.c.l.b16 %v1800
    %v2320 = vunpack.c.l.b16 %v1801
    %v2321 = vunpack.c.l.b16 %v1802
    %v2322 = vunpack.c.l.b16 %v1803
    %v2323 = vunpack.c.l.b16 %v1804
    %v2324 = vunpack.c.l.b16 %v1805
    %v2325 = vunpack.c.l.b16 %v1806
    %v2326 = vunpack.c.l.b16 %v1807
    %v2327 = vunpack.c.l.b16 %v1808
    %v2328 = vunpack.c.l.b16 %v1809
    %v2329 = vunpack.c.l.b16 %v1810
    %v2330 = vunpack.c.l.b16 %v1811
    %v2331 = vpack.c.b16 %v2076, %v2075
    %v2332 = vpack.c.b16 %v2078, %v2077
    %v2333 = vpack.c.b16 %v2080, %v2079
    %v2334 = vpack.c.b16 %v2082, %v2081
    %v2335 = vpack.c.b16 %v2084, %v2083
    %v2336 = vpack.c.b16 %v2086, %v2085
    %v2337 = vpack.c.b16 %v2088, %v2087
    %v2338 = vpack.c.b16 %v2090, %v2089
    %v2339 = vpack.c.b16 %v2092, %v2091
    %v2340 = vpack.c.b16 %v2094, %v2093
    %v2341 = vpack.c.b16 %v2096, %v2095
    %v2342 = vpack.c.b16 %v2098, %v2097
    %v2343 = vpack.c.b16 %v2100, %v2099
    %v2344 = vpack.c.b16 %v2102, %v2101
    %v2345 = vpack.c.b16 %v2104, %v2103
    %v2346 = vpack.c.b16 %v2106, %v2105
    %v2347 = vpack.c.b16 %v2108, %v2107
    %v2348 = vpack.c.b16 %v2110, %v2109
    %v2349 = vpack.c.b16 %v2112, %v2111
    %v2350 = vpack.c.b16 %v2114, %v2113
    %v2351 = vpack.c.b16 %v2116, %v2115
    %v2352 = vpack.c.b16 %v2118, %v2117
    %v2353 = vpack.c.b16 %v2120, %v2119
    %v2354 = vpack.c.b16 %v2122, %v2121
    %v2355 = vpack.c.b16 %v2124, %v2123
    %v2356 = vpack.c.b16 %v2126, %v2125
    %v2357 = vpack.c.b16 %v2128, %v2127
    %v2358 = vpack.c.b16 %v2130, %v2129
    %v2359 = vpack.c.b16 %v2132, %v2131
    %v2360 = vpack.c.b16 %v2134, %v2133
    %v2361 = vpack.c.b16 %v2136, %v2135
    %v2362 = vpack.c.b16 %v2138, %v2137
    %v2363 = vpack.c.b16 %v2140, %v2139
    %v2364 = vpack.c.b16 %v2142, %v2141
    %v2365 = vpack.c.b16 %v2144, %v2143
    %v2366 = vpack.c.b16 %v2146, %v2145
    %v2367 = vpack.c.b16 %v2148, %v2147
    %v2368 = vpack.c.b16 %v2150, %v2149
    %v2369 = vpack.c.b16 %v2152, %v2151
    %v2370 = vpack.c.b16 %v2154, %v2153
    %v2371 = vpack.c.b16 %v2156, %v2155
    %v2372 = vpack.c.b16 %v2158, %v2157
    %v2373 = vpack.c.b16 %v2160, %v2159
    %v2374 = vpack.c.b16 %v2162, %v2161
    %v2375 = vpack.c.b16 %v2164, %v2163
    %v2376 = vpack.c.b16 %v2166, %v2165
    %v2377 = vpack.c.b16 %v2168, %v2167
    %v2378 = vpack.c.b16 %v2170, %v2169
    %v2379 = vpack.c.b16 %v2172, %v2171
    %v2380 = vpack.c.b16 %v2174, %v2173
    %v2381 = vpack.c.b16 %v2176, %v2175
    %v2382 = vpack.c.b16 %v2178, %v2177
    %v2383 = vpack.c.b16 %v2180, %v2179
    %v2384 = vpack.c.b16 %v2182, %v2181
    %v2385 = vpack.c.b16 %v2184, %v2183
    %v2386 = vpack.c.b16 %v2186, %v2185
    %v2387 = vpack.c.b16 %v2188, %v2187
    %v2388 = vpack.c.b16 %v2190, %v2189
    %v2389 = vpack.c.b16 %v2192, %v2191
    %v2390 = vpack.c.b16 %v2194, %v2193
    %v2391 = vpack.c.b16 %v2196, %v2195
    %v2392 = vpack.c.b16 %v2198, %v2197
    %v2393 = vpack.c.b16 %v2200, %v2199
    %v2394 = vpack.c.b16 %v2202, %v2201
    %v2395 = vpack.c.b16 %v2204, %v2203
    %v2396 = vpack.c.b16 %v2206, %v2205
    %v2397 = vpack.c.b16 %v2208, %v2207
    %v2398 = vpack.c.b16 %v2210, %v2209
    %v2399 = vpack.c.b16 %v2212, %v2211
    %v2400 = vpack.c.b16 %v2214, %v2213
    %v2401 = vpack.c.b16 %v2216, %v2215
    %v2402 = vpack.c.b16 %v2218, %v2217
    %v2403 = vpack.c.b16 %v2220, %v2219
    %v2404 = vpack.c.b16 %v2222, %v2221
    %v2405 = vpack.c.b16 %v2224, %v2223
    %v2406 = vpack.c.b16 %v2226, %v2225
    %v2407 = vpack.c.b16 %v2228, %v2227
    %v2408 = vpack.c.b16 %v2230, %v2229
    %v2409 = vpack.c.b16 %v2232, %v2231
    %v2410 = vpack.c.b16 %v2234, %v2233
    %v2411 = vpack.c.b16 %v2236, %v2235
    %v2412 = vpack.c.b16 %v2238, %v2237
    %v2413 = vpack.c.b16 %v2240, %v2239
    %v2414 = vpack.c.b16 %v2242, %v2241
    %v2415 = vpack.c.b16 %v2244, %v2243
    %v2416 = vpack.c.b16 %v2246, %v2245
    %v2417 = vpack.c.b16 %v2248, %v2247
    %v2418 = vpack.c.b16 %v2250, %v2249
    %v2419 = vpack.c.b16 %v2252, %v2251
    %v2420 = vpack.c.b16 %v2254, %v2253
    %v2421 = vpack.c.b16 %v2256, %v2255
    %v2422 = vpack.c.b16 %v2258, %v2257
    %v2423 = vpack.c.b16 %v2260, %v2259
    %v2424 = vpack.c.b16 %v2262, %v2261
    %v2425 = vpack.c.b16 %v2264, %v2263
    %v2426 = vpack.c.b16 %v2266, %v2265
    %v2427 = vpack.c.b16 %v2268, %v2267
    %v2428 = vpack.c.b16 %v2270, %v2269
    %v2429 = vpack.c.b16 %v2272, %v2271
    %v2430 = vpack.c.b16 %v2274, %v2273
    %v2431 = vpack.c.b16 %v2276, %v2275
    %v2432 = vpack.c.b16 %v2278, %v2277
    %v2433 = vpack.c.b16 %v2280, %v2279
    %v2434 = vpack.c.b16 %v2282, %v2281
    %v2435 = vpack.c.b16 %v2284, %v2283
    %v2436 = vpack.c.b16 %v2286, %v2285
    %v2437 = vpack.c.b16 %v2288, %v2287
    %v2438 = vpack.c.b16 %v2290, %v2289
    %v2439 = vpack.c.b16 %v2292, %v2291
    %v2440 = vpack.c.b16 %v2294, %v2293
    %v2441 = vpack.c.b16 %v2296, %v2295
    %v2442 = vpack.c.b16 %v2298, %v2297
    %v2443 = vpack.c.b16 %v2300, %v2299
    %v2444 = vpack.c.b16 %v2302, %v2301
    %v2445 = vpack.c.b16 %v2304, %v2303
    %v2446 = vpack.c.b16 %v2306, %v2305
    %v2447 = vpack.c.b16 %v2308, %v2307
    %v2448 = vpack.c.b16 %v2310, %v2309
    %v2449 = vpack.c.b16 %v2312, %v2311
    %v2450 = vpack.c.b16 %v2314, %v2313
    %v2451 = vpack.c.b16 %v2316, %v2315
    %v2452 = vpack.c.b16 %v2318, %v2317
    %v2453 = vpack.c.b16 %v2320, %v2319
    %v2454 = vpack.c.b16 %v2322, %v2321
    %v2455 = vpack.c.b16 %v2324, %v2323
    %v2456 = vpack.c.b16 %v2326, %v2325
    %v2457 = vpack.c.b16 %v2328, %v2327
    %v2458 = vpack.c.b16 %v2330, %v2329
    %2587 = vmatprep.subr.bf16.mxu0 0
    %2588 = vmatpush1.bf16.msra.mxu0 %v2331
    %2589 = vmatprep.subr.bf16.mxu0 0
    %2590 = vmatpush1.bf16.msra.mxu0 %v2332
    %2591 = vmatprep.subr.bf16.mxu0 0
    %2592 = vmatpush1.bf16.msra.mxu0 %v2333
    %2593 = vmatprep.subr.bf16.mxu0 0
    %2594 = vmatpush1.bf16.msra.mxu0 %v2334
    %2595 = vmatprep.subr.bf16.mxu0 0
    %2596 = vmatpush1.bf16.msra.mxu0 %v2335
    %2597 = vmatprep.subr.bf16.mxu0 0
    %2598 = vmatpush1.bf16.msra.mxu0 %v2336
    %2599 = vmatprep.subr.bf16.mxu0 0
    %2600 = vmatpush1.bf16.msra.mxu0 %v2337
    %2601 = vmatprep.subr.bf16.mxu0 0
    %2602 = vmatpush1.bf16.msra.mxu0 %v2338
    %2603 = vmatprep.subr.bf16.mxu0 0
    %2604 = vmatpush1.bf16.msra.mxu0 %v2339
    %2605 = vmatprep.subr.bf16.mxu0 0
    %2606 = vmatpush1.bf16.msra.mxu0 %v2340
    %2607 = vmatprep.subr.bf16.mxu0 0
    %2608 = vmatpush1.bf16.msra.mxu0 %v2341
    %2609 = vmatprep.subr.bf16.mxu0 0
    %2610 = vmatpush1.bf16.msra.mxu0 %v2342
    %2611 = vmatprep.subr.bf16.mxu0 0
    %2612 = vmatpush1.bf16.msra.mxu0 %v2343
    %2613 = vmatprep.subr.bf16.mxu0 0
    %2614 = vmatpush1.bf16.msra.mxu0 %v2344
    %2615 = vmatprep.subr.bf16.mxu0 0
    %2616 = vmatpush1.bf16.msra.mxu0 %v2345
    %2617 = vmatprep.subr.bf16.mxu0 0
    %2618 = vmatpush1.bf16.msra.mxu0 %v2346
    %2619 = vmatprep.mubr.bf16.mxu0 %v1541
    %2620 = vmatmul.mubr.bf16.gmra.mrb[0].mxu0 %v1540
    %v2621 = vpop.f32.mrb[0].mxu0
    %v2622 = vadd.f32 %v1817, %v2621
    %v2623 = vpop.f32.mrb[0].mxu0
    %v2624 = vpop.f32.mrb[0].mxu0
    %v2625 = vadd.f32 %v1817, %v2624
    %v2626 = vpop.f32.mrb[0].mxu0
    %2627 = vdwg.mxu0
    %2628 = vmatprep.subr.bf16.mxu0 0
    %2629 = vmatpush1.bf16.msra.mxu0 %v2347
    %2630 = vmatprep.subr.bf16.mxu0 0
    %2631 = vmatpush1.bf16.msra.mxu0 %v2348
    %2632 = vmatprep.subr.bf16.mxu0 0
    %2633 = vmatpush1.bf16.msra.mxu0 %v2349
    %2634 = vmatprep.subr.bf16.mxu0 0
    %2635 = vmatpush1.bf16.msra.mxu0 %v2350
    %2636 = vmatprep.subr.bf16.mxu0 0
    %2637 = vmatpush1.bf16.msra.mxu0 %v2351
    %2638 = vmatprep.subr.bf16.mxu0 0
    %2639 = vmatpush1.bf16.msra.mxu0 %v2352
    %2640 = vmatprep.subr.bf16.mxu0 0
    %2641 = vmatpush1.bf16.msra.mxu0 %v2353
    %2642 = vmatprep.subr.bf16.mxu0 0
    %2643 = vmatpush1.bf16.msra.mxu0 %v2354
    %2644 = vmatprep.subr.bf16.mxu0 0
    %2645 = vmatpush1.bf16.msra.mxu0 %v2355
    %2646 = vmatprep.subr.bf16.mxu0 0
    %2647 = vmatpush1.bf16.msra.mxu0 %v2356
    %2648 = vmatprep.subr.bf16.mxu0 0
    %2649 = vmatpush1.bf16.msra.mxu0 %v2357
    %2650 = vmatprep.subr.bf16.mxu0 0
    %2651 = vmatpush1.bf16.msra.mxu0 %v2358
    %2652 = vmatprep.subr.bf16.mxu0 0
    %2653 = vmatpush1.bf16.msra.mxu0 %v2359
    %2654 = vmatprep.subr.bf16.mxu0 0
    %2655 = vmatpush1.bf16.msra.mxu0 %v2360
    %2656 = vmatprep.subr.bf16.mxu0 0
    %2657 = vmatpush1.bf16.msra.mxu0 %v2361
    %2658 = vmatprep.subr.bf16.mxu0 0
    %2659 = vmatpush1.bf16.msra.mxu0 %v2362
    %2660 = vmatprep.mubr.bf16.mxu0 %v1543
    %2661 = vmatmul.mubr.bf16.gmra.mrb[0].mxu0 %v1542
    %v2662 = vpop.f32.mrb[0].mxu0
    %v2663 = vadd.f32 %v2622, %v2662
    %v2664 = vpop.f32.mrb[0].mxu0
    %v2665 = vpop.f32.mrb[0].mxu0
    %v2666 = vadd.f32 %v2625, %v2665
    %v2667 = vpop.f32.mrb[0].mxu0
    %2668 = vdwg.mxu0
    %2669 = vmatprep.subr.bf16.mxu0 0
    %2670 = vmatpush1.bf16.msra.mxu0 %v2363
    %2671 = vmatprep.subr.bf16.mxu0 0
    %2672 = vmatpush1.bf16.msra.mxu0 %v2364
    %2673 = vmatprep.subr.bf16.mxu0 0
    %2674 = vmatpush1.bf16.msra.mxu0 %v2365
    %2675 = vmatprep.subr.bf16.mxu0 0
    %2676 = vmatpush1.bf16.msra.mxu0 %v2366
    %2677 = vmatprep.subr.bf16.mxu0 0
    %2678 = vmatpush1.bf16.msra.mxu0 %v2367
    %2679 = vmatprep.subr.bf16.mxu0 0
    %2680 = vmatpush1.bf16.msra.mxu0 %v2368
    %2681 = vmatprep.subr.bf16.mxu0 0
    %2682 = vmatpush1.bf16.msra.mxu0 %v2369
    %2683 = vmatprep.subr.bf16.mxu0 0
    %2684 = vmatpush1.bf16.msra.mxu0 %v2370
    %2685 = vmatprep.subr.bf16.mxu0 0
    %2686 = vmatpush1.bf16.msra.mxu0 %v2371
    %2687 = vmatprep.subr.bf16.mxu0 0
    %2688 = vmatpush1.bf16.msra.mxu0 %v2372
    %2689 = vmatprep.subr.bf16.mxu0 0
    %2690 = vmatpush1.bf16.msra.mxu0 %v2373
    %2691 = vmatprep.subr.bf16.mxu0 0
    %2692 = vmatpush1.bf16.msra.mxu0 %v2374
    %2693 = vmatprep.subr.bf16.mxu0 0
    %2694 = vmatpush1.bf16.msra.mxu0 %v2375
    %2695 = vmatprep.subr.bf16.mxu0 0
    %2696 = vmatpush1.bf16.msra.mxu0 %v2376
    %2697 = vmatprep.subr.bf16.mxu0 0
    %2698 = vmatpush1.bf16.msra.mxu0 %v2377
    %2699 = vmatprep.subr.bf16.mxu0 0
    %2700 = vmatpush1.bf16.msra.mxu0 %v2378
    %2701 = vmatprep.mubr.bf16.mxu0 %v1545
    %2702 = vmatmul.mubr.bf16.gmra.mrb[0].mxu0 %v1544
    %v2703 = vpop.f32.mrb[0].mxu0
    %v2704 = vadd.f32 %v2663, %v2703
    %v2705 = vpop.f32.mrb[0].mxu0
    %v2706 = vpop.f32.mrb[0].mxu0
    %v2707 = vadd.f32 %v2666, %v2706
    %v2708 = vpop.f32.mrb[0].mxu0
    %2709 = vdwg.mxu0
    %2710 = vmatprep.subr.bf16.mxu0 0
    %2711 = vmatpush1.bf16.msra.mxu0 %v2379
    %2712 = vmatprep.subr.bf16.mxu0 0
    %2713 = vmatpush1.bf16.msra.mxu0 %v2380
    %2714 = vmatprep.subr.bf16.mxu0 0
    %2715 = vmatpush1.bf16.msra.mxu0 %v2381
    %2716 = vmatprep.subr.bf16.mxu0 0
    %2717 = vmatpush1.bf16.msra.mxu0 %v2382
    %2718 = vmatprep.subr.bf16.mxu0 0
    %2719 = vmatpush1.bf16.msra.mxu0 %v2383
    %2720 = vmatprep.subr.bf16.mxu0 0
    %2721 = vmatpush1.bf16.msra.mxu0 %v2384
    %2722 = vmatprep.subr.bf16.mxu0 0
    %2723 = vmatpush1.bf16.msra.mxu0 %v2385
    %2724 = vmatprep.subr.bf16.mxu0 0
    %2725 = vmatpush1.bf16.msra.mxu0 %v2386
    %2726 = vmatprep.subr.bf16.mxu0 0
    %2727 = vmatpush1.bf16.msra.mxu0 %v2387
    %2728 = vmatprep.subr.bf16.mxu0 0
    %2729 = vmatpush1.bf16.msra.mxu0 %v2388
    %2730 = vmatprep.subr.bf16.mxu0 0
    %2731 = vmatpush1.bf16.msra.mxu0 %v2389
    %2732 = vmatprep.subr.bf16.mxu0 0
    %2733 = vmatpush1.bf16.msra.mxu0 %v2390
    %2734 = vmatprep.subr.bf16.mxu0 0
    %2735 = vmatpush1.bf16.msra.mxu0 %v2391
    %2736 = vmatprep.subr.bf16.mxu0 0
    %2737 = vmatpush1.bf16.msra.mxu0 %v2392
    %2738 = vmatprep.subr.bf16.mxu0 0
    %2739 = vmatpush1.bf16.msra.mxu0 %v2393
    %2740 = vmatprep.subr.bf16.mxu0 0
    %2741 = vmatpush1.bf16.msra.mxu0 %v2394
    %2742 = vmatprep.mubr.bf16.mxu0 %v1547
    %2743 = vmatmul.mubr.bf16.gmra.mrb[0].mxu0 %v1546
    %v2744 = vpop.f32.mrb[0].mxu0
    %v2745 = vadd.f32 %v2704, %v2744
    %v2746 = vpop.f32.mrb[0].mxu0
    %v2747 = vpop.f32.mrb[0].mxu0
    %v2748 = vadd.f32 %v2707, %v2747
    %v2749 = vpop.f32.mrb[0].mxu0
    %2750 = vdwg.mxu0
    %2751 = vmatprep.subr.bf16.mxu0 0
    %2752 = vmatpush1.bf16.msra.mxu0 %v2395
    %2753 = vmatprep.subr.bf16.mxu0 0
    %2754 = vmatpush1.bf16.msra.mxu0 %v2396
    %2755 = vmatprep.subr.bf16.mxu0 0
    %2756 = vmatpush1.bf16.msra.mxu0 %v2397
    %2757 = vmatprep.subr.bf16.mxu0 0
    %2758 = vmatpush1.bf16.msra.mxu0 %v2398
    %2759 = vmatprep.subr.bf16.mxu0 0
    %2760 = vmatpush1.bf16.msra.mxu0 %v2399
    %2761 = vmatprep.subr.bf16.mxu0 0
    %2762 = vmatpush1.bf16.msra.mxu0 %v2400
    %2763 = vmatprep.subr.bf16.mxu0 0
    %2764 = vmatpush1.bf16.msra.mxu0 %v2401
    %2765 = vmatprep.subr.bf16.mxu0 0
    %2766 = vmatpush1.bf16.msra.mxu0 %v2402
    %2767 = vmatprep.subr.bf16.mxu0 0
    %2768 = vmatpush1.bf16.msra.mxu0 %v2403
    %2769 = vmatprep.subr.bf16.mxu0 0
    %2770 = vmatpush1.bf16.msra.mxu0 %v2404
    %2771 = vmatprep.subr.bf16.mxu0 0
    %2772 = vmatpush1.bf16.msra.mxu0 %v2405
    %2773 = vmatprep.subr.bf16.mxu0 0
    %2774 = vmatpush1.bf16.msra.mxu0 %v2406
    %2775 = vmatprep.subr.bf16.mxu0 0
    %2776 = vmatpush1.bf16.msra.mxu0 %v2407
    %2777 = vmatprep.subr.bf16.mxu0 0
    %2778 = vmatpush1.bf16.msra.mxu0 %v2408
    %2779 = vmatprep.subr.bf16.mxu0 0
    %2780 = vmatpush1.bf16.msra.mxu0 %v2409
    %2781 = vmatprep.subr.bf16.mxu0 0
    %2782 = vmatpush1.bf16.msra.mxu0 %v2410
    %2783 = vmatprep.mubr.bf16.mxu0 %v1549
    %2784 = vmatmul.mubr.bf16.gmra.mrb[0].mxu0 %v1548
    %v2785 = vpop.f32.mrb[0].mxu0
    %v2786 = vadd.f32 %v2745, %v2785
    %v2787 = vpop.f32.mrb[0].mxu0
    %v2788 = vpop.f32.mrb[0].mxu0
    %v2789 = vadd.f32 %v2748, %v2788
    %v2790 = vpop.f32.mrb[0].mxu0
    %2791 = vdwg.mxu0
    %2792 = vmatprep.subr.bf16.mxu0 0
    %2793 = vmatpush1.bf16.msra.mxu0 %v2411
    %2794 = vmatprep.subr.bf16.mxu0 0
    %2795 = vmatpush1.bf16.msra.mxu0 %v2412
    %2796 = vmatprep.subr.bf16.mxu0 0
    %2797 = vmatpush1.bf16.msra.mxu0 %v2413
    %2798 = vmatprep.subr.bf16.mxu0 0
    %2799 = vmatpush1.bf16.msra.mxu0 %v2414
    %2800 = vmatprep.subr.bf16.mxu0 0
    %2801 = vmatpush1.bf16.msra.mxu0 %v2415
    %2802 = vmatprep.subr.bf16.mxu0 0
    %2803 = vmatpush1.bf16.msra.mxu0 %v2416
    %2804 = vmatprep.subr.bf16.mxu0 0
    %2805 = vmatpush1.bf16.msra.mxu0 %v2417
    %2806 = vmatprep.subr.bf16.mxu0 0
    %2807 = vmatpush1.bf16.msra.mxu0 %v2418
    %2808 = vmatprep.subr.bf16.mxu0 0
    %2809 = vmatpush1.bf16.msra.mxu0 %v2419
    %2810 = vmatprep.subr.bf16.mxu0 0
    %2811 = vmatpush1.bf16.msra.mxu0 %v2420
    %2812 = vmatprep.subr.bf16.mxu0 0
    %2813 = vmatpush1.bf16.msra.mxu0 %v2421
    %2814 = vmatprep.subr.bf16.mxu0 0
    %2815 = vmatpush1.bf16.msra.mxu0 %v2422
    %2816 = vmatprep.subr.bf16.mxu0 0
    %2817 = vmatpush1.bf16.msra.mxu0 %v2423
    %2818 = vmatprep.subr.bf16.mxu0 0
    %2819 = vmatpush1.bf16.msra.mxu0 %v2424
    %2820 = vmatprep.subr.bf16.mxu0 0
    %2821 = vmatpush1.bf16.msra.mxu0 %v2425
    %2822 = vmatprep.subr.bf16.mxu0 0
    %2823 = vmatpush1.bf16.msra.mxu0 %v2426
    %2824 = vmatprep.mubr.bf16.mxu0 %v1551
    %2825 = vmatmul.mubr.bf16.gmra.mrb[0].mxu0 %v1550
    %v2826 = vpop.f32.mrb[0].mxu0
    %v2827 = vadd.f32 %v2786, %v2826
    %v2828 = vpop.f32.mrb[0].mxu0
    %v2829 = vpop.f32.mrb[0].mxu0
    %v2830 = vadd.f32 %v2789, %v2829
    %v2831 = vpop.f32.mrb[0].mxu0
    %2832 = vdwg.mxu0
    %2833 = vmatprep.subr.bf16.mxu0 0
    %2834 = vmatpush1.bf16.msra.mxu0 %v2427
    %2835 = vmatprep.subr.bf16.mxu0 0
    %2836 = vmatpush1.bf16.msra.mxu0 %v2428
    %2837 = vmatprep.subr.bf16.mxu0 0
    %2838 = vmatpush1.bf16.msra.mxu0 %v2429
    %2839 = vmatprep.subr.bf16.mxu0 0
    %2840 = vmatpush1.bf16.msra.mxu0 %v2430
    %2841 = vmatprep.subr.bf16.mxu0 0
    %2842 = vmatpush1.bf16.msra.mxu0 %v2431
    %2843 = vmatprep.subr.bf16.mxu0 0
    %2844 = vmatpush1.bf16.msra.mxu0 %v2432
    %2845 = vmatprep.subr.bf16.mxu0 0
    %2846 = vmatpush1.bf16.msra.mxu0 %v2433
    %2847 = vmatprep.subr.bf16.mxu0 0
    %2848 = vmatpush1.bf16.msra.mxu0 %v2434
    %2849 = vmatprep.subr.bf16.mxu0 0
    %2850 = vmatpush1.bf16.msra.mxu0 %v2435
    %2851 = vmatprep.subr.bf16.mxu0 0
    %2852 = vmatpush1.bf16.msra.mxu0 %v2436
    %2853 = vmatprep.subr.bf16.mxu0 0
    %2854 = vmatpush1.bf16.msra.mxu0 %v2437
    %2855 = vmatprep.subr.bf16.mxu0 0
    %2856 = vmatpush1.bf16.msra.mxu0 %v2438
    %2857 = vmatprep.subr.bf16.mxu0 0
    %2858 = vmatpush1.bf16.msra.mxu0 %v2439
    %2859 = vmatprep.subr.bf16.mxu0 0
    %2860 = vmatpush1.bf16.msra.mxu0 %v2440
    %2861 = vmatprep.subr.bf16.mxu0 0
    %2862 = vmatpush1.bf16.msra.mxu0 %v2441
    %2863 = vmatprep.subr.bf16.mxu0 0
    %2864 = vmatpush1.bf16.msra.mxu0 %v2442
    %2865 = vmatprep.mubr.bf16.mxu0 %v1553
    %2866 = vmatmul.mubr.bf16.gmra.mrb[0].mxu0 %v1552
    %v2867 = vpop.f32.mrb[0].mxu0
    %v2868 = vadd.f32 %v2827, %v2867
    %v2869 = vpop.f32.mrb[0].mxu0
    %v2870 = vpop.f32.mrb[0].mxu0
    %v2871 = vadd.f32 %v2830, %v2870
    %v2872 = vpop.f32.mrb[0].mxu0
    %2873 = vdwg.mxu0
    %2874 = vmatprep.subr.bf16.mxu0 0
    %2875 = vmatpush1.bf16.msra.mxu0 %v2443
    %2876 = vmatprep.subr.bf16.mxu0 0
    %2877 = vmatpush1.bf16.msra.mxu0 %v2444
    %2878 = vmatprep.subr.bf16.mxu0 0
    %2879 = vmatpush1.bf16.msra.mxu0 %v2445
    %2880 = vmatprep.subr.bf16.mxu0 0
    %2881 = vmatpush1.bf16.msra.mxu0 %v2446
    %2882 = vmatprep.subr.bf16.mxu0 0
    %2883 = vmatpush1.bf16.msra.mxu0 %v2447
    %2884 = vmatprep.subr.bf16.mxu0 0
    %2885 = vmatpush1.bf16.msra.mxu0 %v2448
    %2886 = vmatprep.subr.bf16.mxu0 0
    %2887 = vmatpush1.bf16.msra.mxu0 %v2449
    %2888 = vmatprep.subr.bf16.mxu0 0
    %2889 = vmatpush1.bf16.msra.mxu0 %v2450
    %2890 = vmatprep.subr.bf16.mxu0 0
    %2891 = vmatpush1.bf16.msra.mxu0 %v2451
    %2892 = vmatprep.subr.bf16.mxu0 0
    %2893 = vmatpush1.bf16.msra.mxu0 %v2452
    %2894 = vmatprep.subr.bf16.mxu0 0
    %2895 = vmatpush1.bf16.msra.mxu0 %v2453
    %2896 = vmatprep.subr.bf16.mxu0 0
    %2897 = vmatpush1.bf16.msra.mxu0 %v2454
    %2898 = vmatprep.subr.bf16.mxu0 0
    %2899 = vmatpush1.bf16.msra.mxu0 %v2455
    %2900 = vmatprep.subr.bf16.mxu0 0
    %2901 = vmatpush1.bf16.msra.mxu0 %v2456
    %2902 = vmatprep.subr.bf16.mxu0 0
    %2903 = vmatpush1.bf16.msra.mxu0 %v2457
    %2904 = vmatprep.subr.bf16.mxu0 0
    %2905 = vmatpush1.bf16.msra.mxu0 %v2458
    %2906 = vmatprep.mubr.bf16.mxu0 %v1555
    %2907 = vmatmul.mubr.bf16.gmra.mrb[0].mxu0 %v1554
    %v2908 = vpop.f32.mrb[0].mxu0
    %v2909 = vadd.f32 %v2868, %v2908
    %v2910 = vpop.f32.mrb[0].mxu0
    %v2911 = vpop.f32.mrb[0].mxu0
    %v2912 = vadd.f32 %v2871, %v2911
    %v2913 = vpop.f32.mrb[0].mxu0
    %2914 = vdwg.mxu0
    %v2915 = vadd.f32 %v786, %v2909
    %v2916 = vadd.f32 %v787, %v2912
    %v2917 = vld [vmem:[%s14] sm:$0x1]
    %v2918 = vld [vmem:[%s15] sm:$0x1]
    %v2919 = vsel %vm411, %v2915, 0.0
    %2920 = vadd.xlane.f32.xlu0 %v2919
    %v2921 = vpop.xlane.xlu0 %2920
    %v2922 = vsel %vm411, %v2916, 0.0
    %2923 = vadd.xlane.f32.xlu0 %v2922
    %v2924 = vpop.xlane.xlu0 %2923
    %v2925 = vmul.f32 %v2921, %v751
    %v2926 = vmul.f32 %v2924, %v751
    %v2927 = vsub.f32 %v2915, %v2925
    %v2928 = vsub.f32 %v2916, %v2926
    %v2929 = vmul.f32 %v2927, %v2927
    %v2930 = vmul.f32 %v2928, %v2928
    %v2931 = vsel %vm411, %v2929, 0.0
    %2932 = vadd.xlane.f32.xlu0 %v2931
    %v2933 = vpop.xlane.xlu0 %2932
    %v2934 = vsel %vm411, %v2930, 0.0
    %2935 = vadd.xlane.f32.xlu0 %v2934
    %v2936 = vpop.xlane.xlu0 %2935
    %v2937 = vmul.f32 %v2933, %v751
    %v2938 = vmul.f32 %v2936, %v751
    %v2939 = vadd.f32 %v2937, 1e-05
    %v2940 = vadd.f32 %v2938, 1e-05
    %v2941 = vrsqrt.pop %v2939
    %v2942 = vrsqrt.pop %v2940
    %v2943 = vmul.f32 %v2927, %v2941
    %v2944 = vmul.f32 %v2928, %v2942
    %v2946 = vlaneseq
    %v2947 = vshrl.u32 %v2946, 7
    %v2948 = vsub.s32 0, %v2947
    %v2949 = vrot.slane %v2917, %v2948
    %v2951 = vmul.f32 %v2943, %v2949
    %v2952 = vmul.f32 %v2944, %v2949
    %v2954 = vlaneseq
    %v2955 = vshrl.u32 %v2954, 7
    %v2956 = vsub.s32 0, %v2955
    %v2957 = vrot.slane %v2918, %v2956
    %v2959 = vadd.f32 %v2951, %v2957
    %v2960 = vadd.f32 %v2952, %v2957
    %s2961 = scalar_lea.vmem %s4, 96
    %v2962 = vld [vmem:[%s2961] sm:$0xff]
    %v2963 = vld [vmem:[%s2961 + $0x8] sm:$0xff]
    %v2964 = vld [vmem:[%s2961 + $0x10] sm:$0xff]
    %v2965 = vld [vmem:[%s2961 + $0x18] sm:$0xff]
    %v2966 = vld [vmem:[%s2961 + $0x20] sm:$0xff]
    %v2967 = vld [vmem:[%s2961 + $0x28] sm:$0xff]
    %v2968 = vld [vmem:[%s2961 + $0x30] sm:$0xff]
    %v2969 = vld [vmem:[%s2961 + $0x38] sm:$0xff]
    %v2970 = vld [vmem:[%s2961 + $0x40] sm:$0xff]
    %v2971 = vld [vmem:[%s2961 + $0x48] sm:$0xff]
    %v2972 = vld [vmem:[%s2961 + $0x50] sm:$0xff]
    %v2973 = vld [vmem:[%s2961 + $0x58] sm:$0xff]
    %s2974 = scalar_lea.vmem %s5, 2
    %v2975 = vld [vmem:[%s2974] sm:$0x3]
    %v2977 = vlaneseq
    %v2978 = vshrl.u32 %v2977, 7
    %v2979 = vsub.s32 0, %v2978
    %v2980 = vrot.slane %v2975, %v2979
    %v2981 = vlaneseq
    %v2982 = vshrl.u32 %v2981, 7
    %v2983 = vsub.s32 1, %v2982
    %v2984 = vrot.slane %v2975, %v2983
    %v2988 = vsel %vm411, %v2959, 0
    %v2991 = vsel %vm411, %v2960, 0
    %2993 = vmatprep.subr.mxu0 %v2963
    %2994 = vmatpush1.msra.mxu0 %v2962
    %2995 = vmatprep.subr.mxu0 %v2965
    %2996 = vmatpush1.msra.mxu0 %v2964
    %2997 = vmatprep.subr.mxu0 %v2967
    %2998 = vmatpush1.msra.mxu0 %v2966
    %2999 = vmatprep.subr.mxu0 %v2969
    %3000 = vmatpush1.msra.mxu0 %v2968
    %3001 = vmatprep.subr.mxu0 %v2971
    %3002 = vmatpush1.msra.mxu0 %v2970
    %3003 = vmatprep.subr.mxu0 %v2973
    %3004 = vmatpush1.msra.mxu0 %v2972
    %3005 = vmatprep.subr.mxu0 0.0
    %3006 = vmatpush1.msra.mxu0 0.0
    %3007 = vmatprep.subr.mxu0 0.0
    %3008 = vmatpush1.msra.mxu0 0.0
    %3009 = vmatprep.subr.mxu0 0.0
    %3010 = vmatpush1.msra.mxu0 0.0
    %3011 = vmatprep.subr.mxu0 0.0
    %3012 = vmatpush1.msra.mxu0 0.0
    %3013 = vmatprep.subr.mxu0 0.0
    %3014 = vmatpush1.msra.mxu0 0.0
    %3015 = vmatprep.subr.mxu0 0.0
    %3016 = vmatpush1.msra.mxu0 0.0
    %3017 = vmatprep.subr.mxu0 0.0
    %3018 = vmatpush1.msra.mxu0 0.0
    %3019 = vmatprep.subr.mxu0 0.0
    %3020 = vmatpush1.msra.mxu0 0.0
    %3021 = vmatprep.subr.mxu0 0.0
    %3022 = vmatpush1.msra.mxu0 0.0
    %3023 = vmatprep.subr.mxu0 0.0
    %3024 = vmatpush1.msra.mxu0 0.0
    %3025 = vmatprep.subr.mxu0 0.0
    %3026 = vmatpush1.msra.mxu0 0.0
    %3027 = vmatprep.subr.mxu0 0.0
    %3028 = vmatpush1.msra.mxu0 0.0
    %3029 = vmatprep.subr.mxu0 0.0
    %3030 = vmatpush1.msra.mxu0 0.0
    %3031 = vmatprep.subr.mxu0 0.0
    %3032 = vmatpush1.msra.mxu0 0.0
    %3033 = vmatprep.subr.mxu0 0.0
    %3034 = vmatpush1.msra.mxu0 0.0
    %3035 = vmatprep.subr.mxu0 0.0
    %3036 = vmatpush1.msra.mxu0 0.0
    %3037 = vmatprep.subr.mxu0 0.0
    %3038 = vmatpush1.msra.mxu0 0.0
    %3039 = vmatprep.subr.mxu0 0.0
    %3040 = vmatpush1.msra.mxu0 0.0
    %3041 = vmatprep.subr.mxu0 0.0
    %3042 = vmatpush1.msra.mxu0 0.0
    %3043 = vmatprep.subr.mxu0 0.0
    %3044 = vmatpush1.msra.mxu0 0.0
    %3045 = vmatprep.subr.mxu0 0.0
    %3046 = vmatpush1.msra.mxu0 0.0
    %3047 = vmatprep.subr.mxu0 0.0
    %3048 = vmatpush1.msra.mxu0 0.0
    %3049 = vmatprep.subr.mxu0 0.0
    %3050 = vmatpush1.msra.mxu0 0.0
    %3051 = vmatprep.subr.mxu0 0.0
    %3052 = vmatpush1.msra.mxu0 0.0
    %3053 = vmatprep.subr.mxu0 0.0
    %3054 = vmatpush1.msra.mxu0 0.0
    %3055 = vmatprep.subr.mxu0 0.0
    %3056 = vmatpush1.msra.mxu0 0.0
    %3057 = vmatprep.mubr.f32.mxu0 0.0
    %3058 = vmatmul.mubr.f32.gmra.mrb[0].mxu0 %v2988
    %v3059 = vpop.f32.mrb[0].mxu0
    %v3060 = vadd.f32 %v2980, %v3059
    %v3061 = vpop.f32.mrb[0].mxu0
    %v3062 = vadd.f32 %v2984, %v3061
    %3063 = vmatprep.mubr.f32.mxu0 0.0
    %3064 = vmatmul.mubr.f32.gmra.mrb[0].mxu0 %v2991
    %v3065 = vpop.f32.mrb[0].mxu0
    %v3066 = vadd.f32 %v2980, %v3065
    %v3067 = vpop.f32.mrb[0].mxu0
    %v3068 = vadd.f32 %v2984, %v3067
    %3069 = vdwg.mxu0
    %3071 = vrot.lane.b32.xlu0 %v3060, 80
    %v3072 = vpop.permute.xlu0 %3071
    %v3074 = vmul.f32 %v3060, %v3072
    %3076 = vrot.lane.b32.xlu0 %v3066, 80
    %v3077 = vpop.permute.xlu0 %3076
    %v3079 = vmul.f32 %v3060, %v3077
    %v3080 = vmul.f32 %v3066, %v3072
    %v3081 = vmul.f32 %v3066, %v3077
    %v3083 = vsel %vm411, %v3074, 0
    %v3086 = vsel %vm411, %v3079, 0
    %v3089 = vsel %vm411, %v3080, 0
    %v3092 = vsel %vm411, %v3081, 0
    %3094 = vmatprep.subr.mxu0 0.0
    %3095 = vmatpush1.msra.mxu0 %v381
    %3096 = vmatprep.subr.mxu0 0.0
    %3097 = vmatpush1.msra.mxu0 %v382
    %3098 = vmatprep.subr.mxu0 0.0
    %3099 = vmatpush1.msra.mxu0 %v383
    %3100 = vmatprep.subr.mxu0 0.0
    %3101 = vmatpush1.msra.mxu0 %v384
    %3102 = vmatprep.subr.mxu0 0.0
    %3103 = vmatpush1.msra.mxu0 %v385
    %3104 = vmatprep.subr.mxu0 0.0
    %3105 = vmatpush1.msra.mxu0 %v386
    %3106 = vmatprep.subr.mxu0 0.0
    %3107 = vmatpush1.msra.mxu0 0.0
    %3108 = vmatprep.subr.mxu0 0.0
    %3109 = vmatpush1.msra.mxu0 0.0
    %3110 = vmatprep.subr.mxu0 0.0
    %3111 = vmatpush1.msra.mxu0 0.0
    %3112 = vmatprep.subr.mxu0 0.0
    %3113 = vmatpush1.msra.mxu0 0.0
    %3114 = vmatprep.subr.mxu0 0.0
    %3115 = vmatpush1.msra.mxu0 0.0
    %3116 = vmatprep.subr.mxu0 0.0
    %3117 = vmatpush1.msra.mxu0 0.0
    %3118 = vmatprep.subr.mxu0 0.0
    %3119 = vmatpush1.msra.mxu0 0.0
    %3120 = vmatprep.subr.mxu0 0.0
    %3121 = vmatpush1.msra.mxu0 0.0
    %3122 = vmatprep.subr.mxu0 0.0
    %3123 = vmatpush1.msra.mxu0 0.0
    %3124 = vmatprep.subr.mxu0 0.0
    %3125 = vmatpush1.msra.mxu0 0.0
    %3126 = vmatprep.subr.mxu0 0.0
    %3127 = vmatpush1.msra.mxu0 0.0
    %3128 = vmatprep.subr.mxu0 0.0
    %3129 = vmatpush1.msra.mxu0 0.0
    %3130 = vmatprep.subr.mxu0 0.0
    %3131 = vmatpush1.msra.mxu0 0.0
    %3132 = vmatprep.subr.mxu0 0.0
    %3133 = vmatpush1.msra.mxu0 0.0
    %3134 = vmatprep.subr.mxu0 0.0
    %3135 = vmatpush1.msra.mxu0 0.0
    %3136 = vmatprep.subr.mxu0 0.0
    %3137 = vmatpush1.msra.mxu0 0.0
    %3138 = vmatprep.subr.mxu0 0.0
    %3139 = vmatpush1.msra.mxu0 0.0
    %3140 = vmatprep.subr.mxu0 0.0
    %3141 = vmatpush1.msra.mxu0 0.0
    %3142 = vmatprep.subr.mxu0 0.0
    %3143 = vmatpush1.msra.mxu0 0.0
    %3144 = vmatprep.subr.mxu0 0.0
    %3145 = vmatpush1.msra.mxu0 0.0
    %3146 = vmatprep.subr.mxu0 0.0
    %3147 = vmatpush1.msra.mxu0 0.0
    %3148 = vmatprep.subr.mxu0 0.0
    %3149 = vmatpush1.msra.mxu0 0.0
    %3150 = vmatprep.subr.mxu0 0.0
    %3151 = vmatpush1.msra.mxu0 0.0
    %3152 = vmatprep.subr.mxu0 0.0
    %3153 = vmatpush1.msra.mxu0 0.0
    %3154 = vmatprep.subr.mxu0 0.0
    %3155 = vmatpush1.msra.mxu0 0.0
    %3156 = vmatprep.subr.mxu0 0.0
    %3157 = vmatpush1.msra.mxu0 0.0
    %3158 = vmatprep.mubr.f32.mxu0 0.0
    %3159 = vmatmul.mubr.f32.gmra.mrb[0].mxu0 %v3083
    %v3160 = vpop.f32.mrb[0].mxu0
    %v3161 = vadd.f32 0.0, %v3160
    %v3162 = vpop.f32.mrb[0].mxu0
    %3163 = vmatprep.mubr.f32.mxu0 0.0
    %3164 = vmatmul.mubr.f32.gmra.mrb[0].mxu0 %v3086
    %v3165 = vpop.f32.mrb[0].mxu0
    %v3166 = vadd.f32 0.0, %v3165
    %v3167 = vpop.f32.mrb[0].mxu0
    %3168 = vmatprep.mubr.f32.mxu0 0.0
    %3169 = vmatmul.mubr.f32.gmra.mrb[0].mxu0 %v3089
    %v3170 = vpop.f32.mrb[0].mxu0
    %v3171 = vadd.f32 0.0, %v3170
    %v3172 = vpop.f32.mrb[0].mxu0
    %3173 = vmatprep.mubr.f32.mxu0 0.0
    %3174 = vmatmul.mubr.f32.gmra.mrb[0].mxu0 %v3092
    %v3175 = vpop.f32.mrb[0].mxu0
    %v3176 = vadd.f32 0.0, %v3175
    %v3177 = vpop.f32.mrb[0].mxu0
    %3178 = vdwg.mxu0
    %v3179 = vmax.f32 %v3161, %v3166
    %v3180 = vmax.f32 %v3171, %v3176
    %v3181 = vsub.f32 %v3161, %v3179
    %v3182 = vmul.f32 %v3181, 1.442695
    %v3183 = vpow.pop %v3182
    %v3184 = vsub.f32 %v3166, %v3179
    %v3185 = vmul.f32 %v3184, 1.442695
    %v3186 = vpow.pop %v3185
    %v3187 = vsub.f32 %v3171, %v3180
    %v3188 = vmul.f32 %v3187, 1.442695
    %v3189 = vpow.pop %v3188
    %v3190 = vsub.f32 %v3176, %v3180
    %v3191 = vmul.f32 %v3190, 1.442695
    %v3192 = vpow.pop %v3191
    %v3193 = vadd.f32 %v3183, %v3186
    %v3194 = vrcp.pop %v3193
    %v3195 = vadd.f32 %v3189, %v3192
    %v3196 = vrcp.pop %v3195
    %v3197 = vmul.f32 %v3183, %v3194
    %3199 = vrot.lane.b32.xlu0 %v3060, 32
    %v3200 = vpop.permute.xlu0 %3199
    %3201 = vrot.lane.b32.xlu0 %v3062, 32
    %v3202 = vpop.permute.xlu0 %3201
    %v3203 = vsel %vm628, %v3200, %v3202
    %v3205 = vmul.f32 %v3197, %v3203
    %v3206 = vmul.f32 %v3186, %v3194
    %3208 = vrot.lane.b32.xlu0 %v3066, 32
    %v3209 = vpop.permute.xlu0 %3208
    %3210 = vrot.lane.b32.xlu0 %v3068, 32
    %v3211 = vpop.permute.xlu0 %3210
    %v3212 = vsel %vm628, %v3209, %v3211
    %v3214 = vmul.f32 %v3206, %v3212
    %v3215 = vadd.f32 %v3205, %v3214
    %v3216 = vmul.f32 %v3189, %v3196
    %v3217 = vmul.f32 %v3216, %v3203
    %v3218 = vmul.f32 %v3192, %v3196
    %v3219 = vmul.f32 %v3218, %v3212
    %v3220 = vadd.f32 %v3217, %v3219
    %s3221 = scalar_lea.vmem %s6, 48
    %v3222 = vld [vmem:[%s3221] sm:$0xff]
    %v3223 = vld [vmem:[%s3221 + $0x8] sm:$0xff]
    %v3224 = vld [vmem:[%s3221 + $0x10] sm:$0xff]
    %v3225 = vld [vmem:[%s3221 + $0x18] sm:$0xff]
    %v3226 = vld [vmem:[%s3221 + $0x20] sm:$0xff]
    %v3227 = vld [vmem:[%s3221 + $0x28] sm:$0xff]
    %s3228 = scalar_lea.vmem %s7, 1
    %v3229 = vld [vmem:[%s3228] sm:$0x1]
    %v3231 = vlaneseq
    %v3232 = vshrl.u32 %v3231, 7
    %v3233 = vsub.s32 0, %v3232
    %v3234 = vrot.slane %v3229, %v3233
    %v3237 = vsel %vm411, %v3215, 0
    %v3240 = vsel %vm411, %v3220, 0
    %3242 = vmatprep.subr.mxu0 0.0
    %3243 = vmatpush1.msra.mxu0 %v3222
    %3244 = vmatprep.subr.mxu0 0.0
    %3245 = vmatpush1.msra.mxu0 %v3223
    %3246 = vmatprep.subr.mxu0 0.0
    %3247 = vmatpush1.msra.mxu0 %v3224
    %3248 = vmatprep.subr.mxu0 0.0
    %3249 = vmatpush1.msra.mxu0 %v3225
    %3250 = vmatprep.subr.mxu0 0.0
    %3251 = vmatpush1.msra.mxu0 %v3226
    %3252 = vmatprep.subr.mxu0 0.0
    %3253 = vmatpush1.msra.mxu0 %v3227
    %3254 = vmatprep.subr.mxu0 0.0
    %3255 = vmatpush1.msra.mxu0 0.0
    %3256 = vmatprep.subr.mxu0 0.0
    %3257 = vmatpush1.msra.mxu0 0.0
    %3258 = vmatprep.subr.mxu0 0.0
    %3259 = vmatpush1.msra.mxu0 0.0
    %3260 = vmatprep.subr.mxu0 0.0
    %3261 = vmatpush1.msra.mxu0 0.0
    %3262 = vmatprep.subr.mxu0 0.0
    %3263 = vmatpush1.msra.mxu0 0.0
    %3264 = vmatprep.subr.mxu0 0.0
    %3265 = vmatpush1.msra.mxu0 0.0
    %3266 = vmatprep.subr.mxu0 0.0
    %3267 = vmatpush1.msra.mxu0 0.0
    %3268 = vmatprep.subr.mxu0 0.0
    %3269 = vmatpush1.msra.mxu0 0.0
    %3270 = vmatprep.subr.mxu0 0.0
    %3271 = vmatpush1.msra.mxu0 0.0
    %3272 = vmatprep.subr.mxu0 0.0
    %3273 = vmatpush1.msra.mxu0 0.0
    %3274 = vmatprep.subr.mxu0 0.0
    %3275 = vmatpush1.msra.mxu0 0.0
    %3276 = vmatprep.subr.mxu0 0.0
    %3277 = vmatpush1.msra.mxu0 0.0
    %3278 = vmatprep.subr.mxu0 0.0
    %3279 = vmatpush1.msra.mxu0 0.0
    %3280 = vmatprep.subr.mxu0 0.0
    %3281 = vmatpush1.msra.mxu0 0.0
    %3282 = vmatprep.subr.mxu0 0.0
    %3283 = vmatpush1.msra.mxu0 0.0
    %3284 = vmatprep.subr.mxu0 0.0
    %3285 = vmatpush1.msra.mxu0 0.0
    %3286 = vmatprep.subr.mxu0 0.0
    %3287 = vmatpush1.msra.mxu0 0.0
    %3288 = vmatprep.subr.mxu0 0.0
    %3289 = vmatpush1.msra.mxu0 0.0
    %3290 = vmatprep.subr.mxu0 0.0
    %3291 = vmatpush1.msra.mxu0 0.0
    %3292 = vmatprep.subr.mxu0 0.0
    %3293 = vmatpush1.msra.mxu0 0.0
    %3294 = vmatprep.subr.mxu0 0.0
    %3295 = vmatpush1.msra.mxu0 0.0
    %3296 = vmatprep.subr.mxu0 0.0
    %3297 = vmatpush1.msra.mxu0 0.0
    %3298 = vmatprep.subr.mxu0 0.0
    %3299 = vmatpush1.msra.mxu0 0.0
    %3300 = vmatprep.subr.mxu0 0.0
    %3301 = vmatpush1.msra.mxu0 0.0
    %3302 = vmatprep.subr.mxu0 0.0
    %3303 = vmatpush1.msra.mxu0 0.0
    %3304 = vmatprep.subr.mxu0 0.0
    %3305 = vmatpush1.msra.mxu0 0.0
    %3306 = vmatprep.mubr.f32.mxu0 0.0
    %3307 = vmatmul.mubr.f32.gmra.mrb[0].mxu0 %v3237
    %v3308 = vpop.f32.mrb[0].mxu0
    %v3309 = vadd.f32 %v3234, %v3308
    %v3310 = vpop.f32.mrb[0].mxu0
    %3311 = vmatprep.mubr.f32.mxu0 0.0
    %3312 = vmatmul.mubr.f32.gmra.mrb[0].mxu0 %v3240
    %v3313 = vpop.f32.mrb[0].mxu0
    %v3314 = vadd.f32 %v3234, %v3313
    %v3315 = vpop.f32.mrb[0].mxu0
    %3316 = vdwg.mxu0
    %v3317 = vadd.f32 %v2959, %v3309
    %v3318 = vadd.f32 %v2960, %v3314
    %s3319 = scalar_lea.vmem %s8, 1
    %v3320 = vld [vmem:[%s3319] sm:$0x1]
    %s3321 = scalar_lea.vmem %s9, 1
    %v3322 = vld [vmem:[%s3321] sm:$0x1]
    %v3323 = vsel %vm411, %v3317, 0.0
    %3324 = vadd.xlane.f32.xlu0 %v3323
    %v3325 = vpop.xlane.xlu0 %3324
    %v3326 = vsel %vm411, %v3318, 0.0
    %3327 = vadd.xlane.f32.xlu0 %v3326
    %v3328 = vpop.xlane.xlu0 %3327
    %v3329 = vmul.f32 %v3325, %v751
    %v3330 = vmul.f32 %v3328, %v751
    %v3331 = vsub.f32 %v3317, %v3329
    %v3332 = vsub.f32 %v3318, %v3330
    %v3333 = vmul.f32 %v3331, %v3331
    %v3334 = vmul.f32 %v3332, %v3332
    %v3335 = vsel %vm411, %v3333, 0.0
    %3336 = vadd.xlane.f32.xlu0 %v3335
    %v3337 = vpop.xlane.xlu0 %3336
    %v3338 = vsel %vm411, %v3334, 0.0
    %3339 = vadd.xlane.f32.xlu0 %v3338
    %v3340 = vpop.xlane.xlu0 %3339
    %v3341 = vmul.f32 %v3337, %v751
    %v3342 = vmul.f32 %v3340, %v751
    %v3343 = vadd.f32 %v3341, 1e-05
    %v3344 = vadd.f32 %v3342, 1e-05
    %v3345 = vrsqrt.pop %v3343
    %v3346 = vrsqrt.pop %v3344
    %v3347 = vmul.f32 %v3331, %v3345
    %v3348 = vmul.f32 %v3332, %v3346
    %v3350 = vlaneseq
    %v3351 = vshrl.u32 %v3350, 7
    %v3352 = vsub.s32 0, %v3351
    %v3353 = vrot.slane %v3320, %v3352
    %v3355 = vmul.f32 %v3347, %v3353
    %v3356 = vmul.f32 %v3348, %v3353
    %v3358 = vlaneseq
    %v3359 = vshrl.u32 %v3358, 7
    %v3360 = vsub.s32 0, %v3359
    %v3361 = vrot.slane %v3322, %v3360
    %v3363 = vadd.f32 %v3355, %v3361
    %v3364 = vadd.f32 %v3356, %v3361
    %v3365 = vpack.c.bf16 %v3364, %v3363
    %s3366 = scalar_lea.vmem %s10, 384
    %v3367 = vld [vmem:[%s3366] sm:$0xff]
    %v3368 = vld [vmem:[%s3366 + $0x8] sm:$0xff]
    %v3369 = vld [vmem:[%s3366 + $0x10] sm:$0xff]
    %v3370 = vld [vmem:[%s3366 + $0x18] sm:$0xff]
    %v3371 = vld [vmem:[%s3366 + $0x20] sm:$0xff]
    %v3372 = vld [vmem:[%s3366 + $0x28] sm:$0xff]
    %v3373 = vld [vmem:[%s3366 + $0x30] sm:$0xff]
    %v3374 = vld [vmem:[%s3366 + $0x38] sm:$0xff]
    %v3375 = vld [vmem:[%s3366 + $0x40] sm:$0xff]
    %v3376 = vld [vmem:[%s3366 + $0x48] sm:$0xff]
    %v3377 = vld [vmem:[%s3366 + $0x50] sm:$0xff]
    %v3378 = vld [vmem:[%s3366 + $0x58] sm:$0xff]
    %v3379 = vld [vmem:[%s3366 + $0x60] sm:$0xff]
    %v3380 = vld [vmem:[%s3366 + $0x68] sm:$0xff]
    %v3381 = vld [vmem:[%s3366 + $0x70] sm:$0xff]
    %v3382 = vld [vmem:[%s3366 + $0x78] sm:$0xff]
    %v3383 = vld [vmem:[%s3366 + $0x80] sm:$0xff]
    %v3384 = vld [vmem:[%s3366 + $0x88] sm:$0xff]
    %v3385 = vld [vmem:[%s3366 + $0x90] sm:$0xff]
    %v3386 = vld [vmem:[%s3366 + $0x98] sm:$0xff]
    %v3387 = vld [vmem:[%s3366 + $0xa0] sm:$0xff]
    %v3388 = vld [vmem:[%s3366 + $0xa8] sm:$0xff]
    %v3389 = vld [vmem:[%s3366 + $0xb0] sm:$0xff]
    %v3390 = vld [vmem:[%s3366 + $0xb8] sm:$0xff]
    %v3391 = vld [vmem:[%s3366 + $0xc0] sm:$0xff]
    %v3392 = vld [vmem:[%s3366 + $0xc8] sm:$0xff]
    %v3393 = vld [vmem:[%s3366 + $0xd0] sm:$0xff]
    %v3394 = vld [vmem:[%s3366 + $0xd8] sm:$0xff]
    %v3395 = vld [vmem:[%s3366 + $0xe0] sm:$0xff]
    %v3396 = vld [vmem:[%s3366 + $0xe8] sm:$0xff]
    %v3397 = vld [vmem:[%s3366 + $0xf0] sm:$0xff]
    %v3398 = vld [vmem:[%s3366 + $0xf8] sm:$0xff]
    %v3399 = vld [vmem:[%s3366 + $0x100] sm:$0xff]
    %v3400 = vld [vmem:[%s3366 + $0x108] sm:$0xff]
    %v3401 = vld [vmem:[%s3366 + $0x110] sm:$0xff]
    %v3402 = vld [vmem:[%s3366 + $0x118] sm:$0xff]
    %v3403 = vld [vmem:[%s3366 + $0x120] sm:$0xff]
    %v3404 = vld [vmem:[%s3366 + $0x128] sm:$0xff]
    %v3405 = vld [vmem:[%s3366 + $0x130] sm:$0xff]
    %v3406 = vld [vmem:[%s3366 + $0x138] sm:$0xff]
    %v3407 = vld [vmem:[%s3366 + $0x140] sm:$0xff]
    %v3408 = vld [vmem:[%s3366 + $0x148] sm:$0xff]
    %v3409 = vld [vmem:[%s3366 + $0x150] sm:$0xff]
    %v3410 = vld [vmem:[%s3366 + $0x158] sm:$0xff]
    %v3411 = vld [vmem:[%s3366 + $0x160] sm:$0xff]
    %v3412 = vld [vmem:[%s3366 + $0x168] sm:$0xff]
    %v3413 = vld [vmem:[%s3366 + $0x170] sm:$0xff]
    %v3414 = vld [vmem:[%s3366 + $0x178] sm:$0xff]
    %s3415 = scalar_lea.vmem %s11, 16
    %v3416 = vld [vmem:[%s3415] sm:$0xff]
    %v3417 = vld [vmem:[%s3415 + $0x8] sm:$0xff]
    %v3420 = vlaneseq
    %v3421 = vshrl.u32 %v3420, 7
    %v3422 = vsub.s32 0, %v3421
    %v3423 = vrot.slane %v3416, %v3422
    %v3424 = vlaneseq
    %v3425 = vshrl.u32 %v3424, 7
    %v3426 = vsub.s32 1, %v3425
    %v3427 = vrot.slane %v3416, %v3426
    %v3428 = vlaneseq
    %v3429 = vshrl.u32 %v3428, 7
    %v3430 = vsub.s32 2, %v3429
    %v3431 = vrot.slane %v3416, %v3430
    %v3432 = vlaneseq
    %v3433 = vshrl.u32 %v3432, 7
    %v3434 = vsub.s32 3, %v3433
    %v3435 = vrot.slane %v3416, %v3434
    %v3436 = vlaneseq
    %v3437 = vshrl.u32 %v3436, 7
    %v3438 = vsub.s32 4, %v3437
    %v3439 = vrot.slane %v3416, %v3438
    %v3440 = vlaneseq
    %v3441 = vshrl.u32 %v3440, 7
    %v3442 = vsub.s32 5, %v3441
    %v3443 = vrot.slane %v3416, %v3442
    %v3444 = vlaneseq
    %v3445 = vshrl.u32 %v3444, 7
    %v3446 = vsub.s32 6, %v3445
    %v3447 = vrot.slane %v3416, %v3446
    %v3448 = vlaneseq
    %v3449 = vshrl.u32 %v3448, 7
    %v3450 = vsub.s32 7, %v3449
    %v3451 = vrot.slane %v3416, %v3450
    %v3452 = vlaneseq
    %v3453 = vshrl.u32 %v3452, 7
    %v3454 = vsub.s32 0, %v3453
    %v3455 = vrot.slane %v3417, %v3454
    %v3456 = vlaneseq
    %v3457 = vshrl.u32 %v3456, 7
    %v3458 = vsub.s32 1, %v3457
    %v3459 = vrot.slane %v3417, %v3458
    %v3460 = vlaneseq
    %v3461 = vshrl.u32 %v3460, 7
    %v3462 = vsub.s32 2, %v3461
    %v3463 = vrot.slane %v3417, %v3462
    %v3464 = vlaneseq
    %v3465 = vshrl.u32 %v3464, 7
    %v3466 = vsub.s32 3, %v3465
    %v3467 = vrot.slane %v3417, %v3466
    %v3468 = vlaneseq
    %v3469 = vshrl.u32 %v3468, 7
    %v3470 = vsub.s32 4, %v3469
    %v3471 = vrot.slane %v3417, %v3470
    %v3472 = vlaneseq
    %v3473 = vshrl.u32 %v3472, 7
    %v3474 = vsub.s32 5, %v3473
    %v3475 = vrot.slane %v3417, %v3474
    %v3476 = vlaneseq
    %v3477 = vshrl.u32 %v3476, 7
    %v3478 = vsub.s32 6, %v3477
    %v3479 = vrot.slane %v3417, %v3478
    %v3480 = vlaneseq
    %v3481 = vshrl.u32 %v3480, 7
    %v3482 = vsub.s32 7, %v3481
    %v3483 = vrot.slane %v3417, %v3482
    %v3548 = vunpack.c.l.b16 %v3367
    %v3549 = vunpack.c.h.b16 %v3367
    %v3550 = vunpack.c.l.b16 %v3368
    %v3551 = vunpack.c.h.b16 %v3368
    %v3552 = vunpack.c.l.b16 %v3369
    %v3553 = vunpack.c.h.b16 %v3369
    %v3554 = vunpack.c.l.b16 %v3370
    %v3555 = vunpack.c.h.b16 %v3370
    %v3556 = vunpack.c.l.b16 %v3371
    %v3557 = vunpack.c.h.b16 %v3371
    %v3558 = vunpack.c.l.b16 %v3372
    %v3559 = vunpack.c.h.b16 %v3372
    %v3560 = vunpack.c.l.b16 %v3373
    %v3561 = vunpack.c.h.b16 %v3373
    %v3562 = vunpack.c.l.b16 %v3374
    %v3563 = vunpack.c.h.b16 %v3374
    %v3564 = vunpack.c.l.b16 %v3375
    %v3565 = vunpack.c.h.b16 %v3375
    %v3566 = vunpack.c.l.b16 %v3376
    %v3567 = vunpack.c.h.b16 %v3376
    %v3568 = vunpack.c.l.b16 %v3377
    %v3569 = vunpack.c.h.b16 %v3377
    %v3570 = vunpack.c.l.b16 %v3378
    %v3571 = vunpack.c.h.b16 %v3378
    %v3572 = vunpack.c.l.b16 %v3379
    %v3573 = vunpack.c.h.b16 %v3379
    %v3574 = vunpack.c.l.b16 %v3380
    %v3575 = vunpack.c.h.b16 %v3380
    %v3576 = vunpack.c.l.b16 %v3381
    %v3577 = vunpack.c.h.b16 %v3381
    %v3578 = vunpack.c.l.b16 %v3382
    %v3579 = vunpack.c.h.b16 %v3382
    %v3580 = vunpack.c.l.b16 %v3383
    %v3581 = vunpack.c.h.b16 %v3383
    %v3582 = vunpack.c.l.b16 %v3384
    %v3583 = vunpack.c.h.b16 %v3384
    %v3584 = vunpack.c.l.b16 %v3385
    %v3585 = vunpack.c.h.b16 %v3385
    %v3586 = vunpack.c.l.b16 %v3386
    %v3587 = vunpack.c.h.b16 %v3386
    %v3588 = vunpack.c.l.b16 %v3387
    %v3589 = vunpack.c.h.b16 %v3387
    %v3590 = vunpack.c.l.b16 %v3388
    %v3591 = vunpack.c.h.b16 %v3388
    %v3592 = vunpack.c.l.b16 %v3389
    %v3593 = vunpack.c.h.b16 %v3389
    %v3594 = vunpack.c.l.b16 %v3390
    %v3595 = vunpack.c.h.b16 %v3390
    %v3596 = vunpack.c.l.b16 %v3391
    %v3597 = vunpack.c.h.b16 %v3391
    %v3598 = vunpack.c.l.b16 %v3392
    %v3599 = vunpack.c.h.b16 %v3392
    %v3600 = vunpack.c.l.b16 %v3393
    %v3601 = vunpack.c.h.b16 %v3393
    %v3602 = vunpack.c.l.b16 %v3394
    %v3603 = vunpack.c.h.b16 %v3394
    %v3604 = vunpack.c.l.b16 %v3395
    %v3605 = vunpack.c.h.b16 %v3395
    %v3606 = vunpack.c.l.b16 %v3396
    %v3607 = vunpack.c.h.b16 %v3396
    %v3608 = vunpack.c.l.b16 %v3397
    %v3609 = vunpack.c.h.b16 %v3397
    %v3610 = vunpack.c.l.b16 %v3398
    %v3611 = vunpack.c.h.b16 %v3398
    %v3612 = vunpack.c.l.b16 %v3399
    %v3613 = vunpack.c.h.b16 %v3399
    %v3614 = vunpack.c.l.b16 %v3400
    %v3615 = vunpack.c.h.b16 %v3400
    %v3616 = vunpack.c.l.b16 %v3401
    %v3617 = vunpack.c.h.b16 %v3401
    %v3618 = vunpack.c.l.b16 %v3402
    %v3619 = vunpack.c.h.b16 %v3402
    %v3620 = vunpack.c.l.b16 %v3403
    %v3621 = vunpack.c.h.b16 %v3403
    %v3622 = vunpack.c.l.b16 %v3404
    %v3623 = vunpack.c.h.b16 %v3404
    %v3624 = vunpack.c.l.b16 %v3405
    %v3625 = vunpack.c.h.b16 %v3405
    %v3626 = vunpack.c.l.b16 %v3406
    %v3627 = vunpack.c.h.b16 %v3406
    %v3628 = vunpack.c.l.b16 %v3407
    %v3629 = vunpack.c.h.b16 %v3407
    %v3630 = vunpack.c.l.b16 %v3408
    %v3631 = vunpack.c.h.b16 %v3408
    %v3632 = vunpack.c.l.b16 %v3409
    %v3633 = vunpack.c.h.b16 %v3409
    %v3634 = vunpack.c.l.b16 %v3410
    %v3635 = vunpack.c.h.b16 %v3410
    %v3636 = vunpack.c.l.b16 %v3411
    %v3637 = vunpack.c.h.b16 %v3411
    %v3638 = vunpack.c.l.b16 %v3412
    %v3639 = vunpack.c.h.b16 %v3412
    %v3640 = vunpack.c.l.b16 %v3413
    %v3641 = vunpack.c.h.b16 %v3413
    %v3642 = vunpack.c.l.b16 %v3414
    %v3643 = vunpack.c.h.b16 %v3414
    %v3644 = vpack.c.b16 %v3564, %v3548
    %v3645 = vpack.c.b16 %v3565, %v3549
    %v3646 = vpack.c.b16 %v3566, %v3550
    %v3647 = vpack.c.b16 %v3567, %v3551
    %v3648 = vpack.c.b16 %v3568, %v3552
    %v3649 = vpack.c.b16 %v3569, %v3553
    %v3650 = vpack.c.b16 %v3570, %v3554
    %v3651 = vpack.c.b16 %v3571, %v3555
    %v3652 = vpack.c.b16 %v3572, %v3556
    %v3653 = vpack.c.b16 %v3573, %v3557
    %v3654 = vpack.c.b16 %v3574, %v3558
    %v3655 = vpack.c.b16 %v3575, %v3559
    %v3656 = vpack.c.b16 %v3576, %v3560
    %v3657 = vpack.c.b16 %v3577, %v3561
    %v3658 = vpack.c.b16 %v3578, %v3562
    %v3659 = vpack.c.b16 %v3579, %v3563
    %v3660 = vpack.c.b16 %v3596, %v3580
    %v3661 = vpack.c.b16 %v3597, %v3581
    %v3662 = vpack.c.b16 %v3598, %v3582
    %v3663 = vpack.c.b16 %v3599, %v3583
    %v3664 = vpack.c.b16 %v3600, %v3584
    %v3665 = vpack.c.b16 %v3601, %v3585
    %v3666 = vpack.c.b16 %v3602, %v3586
    %v3667 = vpack.c.b16 %v3603, %v3587
    %v3668 = vpack.c.b16 %v3604, %v3588
    %v3669 = vpack.c.b16 %v3605, %v3589
    %v3670 = vpack.c.b16 %v3606, %v3590
    %v3671 = vpack.c.b16 %v3607, %v3591
    %v3672 = vpack.c.b16 %v3608, %v3592
    %v3673 = vpack.c.b16 %v3609, %v3593
    %v3674 = vpack.c.b16 %v3610, %v3594
    %v3675 = vpack.c.b16 %v3611, %v3595
    %v3676 = vpack.c.b16 %v3628, %v3612
    %v3677 = vpack.c.b16 %v3629, %v3613
    %v3678 = vpack.c.b16 %v3630, %v3614
    %v3679 = vpack.c.b16 %v3631, %v3615
    %v3680 = vpack.c.b16 %v3632, %v3616
    %v3681 = vpack.c.b16 %v3633, %v3617
    %v3682 = vpack.c.b16 %v3634, %v3618
    %v3683 = vpack.c.b16 %v3635, %v3619
    %v3684 = vpack.c.b16 %v3636, %v3620
    %v3685 = vpack.c.b16 %v3637, %v3621
    %v3686 = vpack.c.b16 %v3638, %v3622
    %v3687 = vpack.c.b16 %v3639, %v3623
    %v3688 = vpack.c.b16 %v3640, %v3624
    %v3689 = vpack.c.b16 %v3641, %v3625
    %v3690 = vpack.c.b16 %v3642, %v3626
    %v3691 = vpack.c.b16 %v3643, %v3627
    %v3741 = vsel %vm411, %v3365, 0
    %3743 = vmatprep.subr.bf16.mxu0 %v3645
    %3744 = vmatpush1.bf16.msra.mxu0 %v3644
    %3745 = vmatprep.subr.bf16.mxu0 %v3661
    %3746 = vmatpush1.bf16.msra.mxu0 %v3660
    %3747 = vmatprep.subr.bf16.mxu0 %v3677
    %3748 = vmatpush1.bf16.msra.mxu0 %v3676
    %3749 = vmatprep.subr.bf16.mxu0 0
    %3750 = vmatpush1.bf16.msra.mxu0 0
    %3751 = vmatprep.subr.bf16.mxu0 0
    %3752 = vmatpush1.bf16.msra.mxu0 0
    %3753 = vmatprep.subr.bf16.mxu0 0
    %3754 = vmatpush1.bf16.msra.mxu0 0
    %3755 = vmatprep.subr.bf16.mxu0 0
    %3756 = vmatpush1.bf16.msra.mxu0 0
    %3757 = vmatprep.subr.bf16.mxu0 0
    %3758 = vmatpush1.bf16.msra.mxu0 0
    %3759 = vmatprep.subr.bf16.mxu0 0
    %3760 = vmatpush1.bf16.msra.mxu0 0
    %3761 = vmatprep.subr.bf16.mxu0 0
    %3762 = vmatpush1.bf16.msra.mxu0 0
    %3763 = vmatprep.subr.bf16.mxu0 0
    %3764 = vmatpush1.bf16.msra.mxu0 0
    %3765 = vmatprep.subr.bf16.mxu0 0
    %3766 = vmatpush1.bf16.msra.mxu0 0
    %3767 = vmatprep.subr.bf16.mxu0 0
    %3768 = vmatpush1.bf16.msra.mxu0 0
    %3769 = vmatprep.subr.bf16.mxu0 0
    %3770 = vmatpush1.bf16.msra.mxu0 0
    %3771 = vmatprep.subr.bf16.mxu0 0
    %3772 = vmatpush1.bf16.msra.mxu0 0
    %3773 = vmatprep.subr.bf16.mxu0 0
    %3774 = vmatpush1.bf16.msra.mxu0 0
    %3775 = vmatprep.mubr.bf16.mxu0 0
    %3776 = vmatmul.mubr.bf16.gmra.mrb[0].mxu0 %v3741
    %v3777 = vpop.f32.mrb[0].mxu0
    %v3778 = vadd.f32 %v3423, %v3777
    %v3779 = vpop.f32.mrb[0].mxu0
    %v3780 = vadd.f32 %v3427, %v3779
    %v3781 = vpop.f32.mrb[0].mxu0
    %v3782 = vadd.f32 %v3423, %v3781
    %v3783 = vpop.f32.mrb[0].mxu0
    %v3784 = vadd.f32 %v3427, %v3783
    %3785 = vdwg.mxu0
    %3786 = vmatprep.subr.bf16.mxu0 %v3647
    %3787 = vmatpush1.bf16.msra.mxu0 %v3646
    %3788 = vmatprep.subr.bf16.mxu0 %v3663
    %3789 = vmatpush1.bf16.msra.mxu0 %v3662
    %3790 = vmatprep.subr.bf16.mxu0 %v3679
    %3791 = vmatpush1.bf16.msra.mxu0 %v3678
    %3792 = vmatprep.subr.bf16.mxu0 0
    %3793 = vmatpush1.bf16.msra.mxu0 0
    %3794 = vmatprep.subr.bf16.mxu0 0
    %3795 = vmatpush1.bf16.msra.mxu0 0
    %3796 = vmatprep.subr.bf16.mxu0 0
    %3797 = vmatpush1.bf16.msra.mxu0 0
    %3798 = vmatprep.subr.bf16.mxu0 0
    %3799 = vmatpush1.bf16.msra.mxu0 0
    %3800 = vmatprep.subr.bf16.mxu0 0
    %3801 = vmatpush1.bf16.msra.mxu0 0
    %3802 = vmatprep.subr.bf16.mxu0 0
    %3803 = vmatpush1.bf16.msra.mxu0 0
    %3804 = vmatprep.subr.bf16.mxu0 0
    %3805 = vmatpush1.bf16.msra.mxu0 0
    %3806 = vmatprep.subr.bf16.mxu0 0
    %3807 = vmatpush1.bf16.msra.mxu0 0
    %3808 = vmatprep.subr.bf16.mxu0 0
    %3809 = vmatpush1.bf16.msra.mxu0 0
    %3810 = vmatprep.subr.bf16.mxu0 0
    %3811 = vmatpush1.bf16.msra.mxu0 0
    %3812 = vmatprep.subr.bf16.mxu0 0
    %3813 = vmatpush1.bf16.msra.mxu0 0
    %3814 = vmatprep.subr.bf16.mxu0 0
    %3815 = vmatpush1.bf16.msra.mxu0 0
    %3816 = vmatprep.subr.bf16.mxu0 0
    %3817 = vmatpush1.bf16.msra.mxu0 0
    %3818 = vmatprep.mubr.bf16.mxu0 0
    %3819 = vmatmul.mubr.bf16.gmra.mrb[0].mxu0 %v3741
    %v3820 = vpop.f32.mrb[0].mxu0
    %v3821 = vadd.f32 %v3431, %v3820
    %v3822 = vpop.f32.mrb[0].mxu0
    %v3823 = vadd.f32 %v3435, %v3822
    %v3824 = vpop.f32.mrb[0].mxu0
    %v3825 = vadd.f32 %v3431, %v3824
    %v3826 = vpop.f32.mrb[0].mxu0
    %v3827 = vadd.f32 %v3435, %v3826
    %3828 = vdwg.mxu0
    %3829 = vmatprep.subr.bf16.mxu0 %v3649
    %3830 = vmatpush1.bf16.msra.mxu0 %v3648
    %3831 = vmatprep.subr.bf16.mxu0 %v3665
    %3832 = vmatpush1.bf16.msra.mxu0 %v3664
    %3833 = vmatprep.subr.bf16.mxu0 %v3681
    %3834 = vmatpush1.bf16.msra.mxu0 %v3680
    %3835 = vmatprep.subr.bf16.mxu0 0
    %3836 = vmatpush1.bf16.msra.mxu0 0
    %3837 = vmatprep.subr.bf16.mxu0 0
    %3838 = vmatpush1.bf16.msra.mxu0 0
    %3839 = vmatprep.subr.bf16.mxu0 0
    %3840 = vmatpush1.bf16.msra.mxu0 0
    %3841 = vmatprep.subr.bf16.mxu0 0
    %3842 = vmatpush1.bf16.msra.mxu0 0
    %3843 = vmatprep.subr.bf16.mxu0 0
    %3844 = vmatpush1.bf16.msra.mxu0 0
    %3845 = vmatprep.subr.bf16.mxu0 0
    %3846 = vmatpush1.bf16.msra.mxu0 0
    %3847 = vmatprep.subr.bf16.mxu0 0
    %3848 = vmatpush1.bf16.msra.mxu0 0
    %3849 = vmatprep.subr.bf16.mxu0 0
    %3850 = vmatpush1.bf16.msra.mxu0 0
    %3851 = vmatprep.subr.bf16.mxu0 0
    %3852 = vmatpush1.bf16.msra.mxu0 0
    %3853 = vmatprep.subr.bf16.mxu0 0
    %3854 = vmatpush1.bf16.msra.mxu0 0
    %3855 = vmatprep.subr.bf16.mxu0 0
    %3856 = vmatpush1.bf16.msra.mxu0 0
    %3857 = vmatprep.subr.bf16.mxu0 0
    %3858 = vmatpush1.bf16.msra.mxu0 0
    %3859 = vmatprep.subr.bf16.mxu0 0
    %3860 = vmatpush1.bf16.msra.mxu0 0
    %3861 = vmatprep.mubr.bf16.mxu0 0
    %3862 = vmatmul.mubr.bf16.gmra.mrb[0].mxu0 %v3741
    %v3863 = vpop.f32.mrb[0].mxu0
    %v3864 = vadd.f32 %v3439, %v3863
    %v3865 = vpop.f32.mrb[0].mxu0
    %v3866 = vadd.f32 %v3443, %v3865
    %v3867 = vpop.f32.mrb[0].mxu0
    %v3868 = vadd.f32 %v3439, %v3867
    %v3869 = vpop.f32.mrb[0].mxu0
    %v3870 = vadd.f32 %v3443, %v3869
    %3871 = vdwg.mxu0
    %3872 = vmatprep.subr.bf16.mxu0 %v3651
    %3873 = vmatpush1.bf16.msra.mxu0 %v3650
    %3874 = vmatprep.subr.bf16.mxu0 %v3667
    %3875 = vmatpush1.bf16.msra.mxu0 %v3666
    %3876 = vmatprep.subr.bf16.mxu0 %v3683
    %3877 = vmatpush1.bf16.msra.mxu0 %v3682
    %3878 = vmatprep.subr.bf16.mxu0 0
    %3879 = vmatpush1.bf16.msra.mxu0 0
    %3880 = vmatprep.subr.bf16.mxu0 0
    %3881 = vmatpush1.bf16.msra.mxu0 0
    %3882 = vmatprep.subr.bf16.mxu0 0
    %3883 = vmatpush1.bf16.msra.mxu0 0
    %3884 = vmatprep.subr.bf16.mxu0 0
    %3885 = vmatpush1.bf16.msra.mxu0 0
    %3886 = vmatprep.subr.bf16.mxu0 0
    %3887 = vmatpush1.bf16.msra.mxu0 0
    %3888 = vmatprep.subr.bf16.mxu0 0
    %3889 = vmatpush1.bf16.msra.mxu0 0
    %3890 = vmatprep.subr.bf16.mxu0 0
    %3891 = vmatpush1.bf16.msra.mxu0 0
    %3892 = vmatprep.subr.bf16.mxu0 0
    %3893 = vmatpush1.bf16.msra.mxu0 0
    %3894 = vmatprep.subr.bf16.mxu0 0
    %3895 = vmatpush1.bf16.msra.mxu0 0
    %3896 = vmatprep.subr.bf16.mxu0 0
    %3897 = vmatpush1.bf16.msra.mxu0 0
    %3898 = vmatprep.subr.bf16.mxu0 0
    %3899 = vmatpush1.bf16.msra.mxu0 0
    %3900 = vmatprep.subr.bf16.mxu0 0
    %3901 = vmatpush1.bf16.msra.mxu0 0
    %3902 = vmatprep.subr.bf16.mxu0 0
    %3903 = vmatpush1.bf16.msra.mxu0 0
    %3904 = vmatprep.mubr.bf16.mxu0 0
    %3905 = vmatmul.mubr.bf16.gmra.mrb[0].mxu0 %v3741
    %v3906 = vpop.f32.mrb[0].mxu0
    %v3907 = vadd.f32 %v3447, %v3906
    %v3908 = vpop.f32.mrb[0].mxu0
    %v3909 = vadd.f32 %v3451, %v3908
    %v3910 = vpop.f32.mrb[0].mxu0
    %v3911 = vadd.f32 %v3447, %v3910
    %v3912 = vpop.f32.mrb[0].mxu0
    %v3913 = vadd.f32 %v3451, %v3912
    %3914 = vdwg.mxu0
    %3915 = vmatprep.subr.bf16.mxu0 %v3653
    %3916 = vmatpush1.bf16.msra.mxu0 %v3652
    %3917 = vmatprep.subr.bf16.mxu0 %v3669
    %3918 = vmatpush1.bf16.msra.mxu0 %v3668
    %3919 = vmatprep.subr.bf16.mxu0 %v3685
    %3920 = vmatpush1.bf16.msra.mxu0 %v3684
    %3921 = vmatprep.subr.bf16.mxu0 0
    %3922 = vmatpush1.bf16.msra.mxu0 0
    %3923 = vmatprep.subr.bf16.mxu0 0
    %3924 = vmatpush1.bf16.msra.mxu0 0
    %3925 = vmatprep.subr.bf16.mxu0 0
    %3926 = vmatpush1.bf16.msra.mxu0 0
    %3927 = vmatprep.subr.bf16.mxu0 0
    %3928 = vmatpush1.bf16.msra.mxu0 0
    %3929 = vmatprep.subr.bf16.mxu0 0
    %3930 = vmatpush1.bf16.msra.mxu0 0
    %3931 = vmatprep.subr.bf16.mxu0 0
    %3932 = vmatpush1.bf16.msra.mxu0 0
    %3933 = vmatprep.subr.bf16.mxu0 0
    %3934 = vmatpush1.bf16.msra.mxu0 0
    %3935 = vmatprep.subr.bf16.mxu0 0
    %3936 = vmatpush1.bf16.msra.mxu0 0
    %3937 = vmatprep.subr.bf16.mxu0 0
    %3938 = vmatpush1.bf16.msra.mxu0 0
    %3939 = vmatprep.subr.bf16.mxu0 0
    %3940 = vmatpush1.bf16.msra.mxu0 0
    %3941 = vmatprep.subr.bf16.mxu0 0
    %3942 = vmatpush1.bf16.msra.mxu0 0
    %3943 = vmatprep.subr.bf16.mxu0 0
    %3944 = vmatpush1.bf16.msra.mxu0 0
    %3945 = vmatprep.subr.bf16.mxu0 0
    %3946 = vmatpush1.bf16.msra.mxu0 0
    %3947 = vmatprep.mubr.bf16.mxu0 0
    %3948 = vmatmul.mubr.bf16.gmra.mrb[0].mxu0 %v3741
    %v3949 = vpop.f32.mrb[0].mxu0
    %v3950 = vadd.f32 %v3455, %v3949
    %v3951 = vpop.f32.mrb[0].mxu0
    %v3952 = vadd.f32 %v3459, %v3951
    %v3953 = vpop.f32.mrb[0].mxu0
    %v3954 = vadd.f32 %v3455, %v3953
    %v3955 = vpop.f32.mrb[0].mxu0
    %v3956 = vadd.f32 %v3459, %v3955
    %3957 = vdwg.mxu0
    %3958 = vmatprep.subr.bf16.mxu0 %v3655
    %3959 = vmatpush1.bf16.msra.mxu0 %v3654
    %3960 = vmatprep.subr.bf16.mxu0 %v3671
    %3961 = vmatpush1.bf16.msra.mxu0 %v3670
    %3962 = vmatprep.subr.bf16.mxu0 %v3687
    %3963 = vmatpush1.bf16.msra.mxu0 %v3686
    %3964 = vmatprep.subr.bf16.mxu0 0
    %3965 = vmatpush1.bf16.msra.mxu0 0
    %3966 = vmatprep.subr.bf16.mxu0 0
    %3967 = vmatpush1.bf16.msra.mxu0 0
    %3968 = vmatprep.subr.bf16.mxu0 0
    %3969 = vmatpush1.bf16.msra.mxu0 0
    %3970 = vmatprep.subr.bf16.mxu0 0
    %3971 = vmatpush1.bf16.msra.mxu0 0
    %3972 = vmatprep.subr.bf16.mxu0 0
    %3973 = vmatpush1.bf16.msra.mxu0 0
    %3974 = vmatprep.subr.bf16.mxu0 0
    %3975 = vmatpush1.bf16.msra.mxu0 0
    %3976 = vmatprep.subr.bf16.mxu0 0
    %3977 = vmatpush1.bf16.msra.mxu0 0
    %3978 = vmatprep.subr.bf16.mxu0 0
    %3979 = vmatpush1.bf16.msra.mxu0 0
    %3980 = vmatprep.subr.bf16.mxu0 0
    %3981 = vmatpush1.bf16.msra.mxu0 0
    %3982 = vmatprep.subr.bf16.mxu0 0
    %3983 = vmatpush1.bf16.msra.mxu0 0
    %3984 = vmatprep.subr.bf16.mxu0 0
    %3985 = vmatpush1.bf16.msra.mxu0 0
    %3986 = vmatprep.subr.bf16.mxu0 0
    %3987 = vmatpush1.bf16.msra.mxu0 0
    %3988 = vmatprep.subr.bf16.mxu0 0
    %3989 = vmatpush1.bf16.msra.mxu0 0
    %3990 = vmatprep.mubr.bf16.mxu0 0
    %3991 = vmatmul.mubr.bf16.gmra.mrb[0].mxu0 %v3741
    %v3992 = vpop.f32.mrb[0].mxu0
    %v3993 = vadd.f32 %v3463, %v3992
    %v3994 = vpop.f32.mrb[0].mxu0
    %v3995 = vadd.f32 %v3467, %v3994
    %v3996 = vpop.f32.mrb[0].mxu0
    %v3997 = vadd.f32 %v3463, %v3996
    %v3998 = vpop.f32.mrb[0].mxu0
    %v3999 = vadd.f32 %v3467, %v3998
    %4000 = vdwg.mxu0
    %4001 = vmatprep.subr.bf16.mxu0 %v3657
    %4002 = vmatpush1.bf16.msra.mxu0 %v3656
    %4003 = vmatprep.subr.bf16.mxu0 %v3673
    %4004 = vmatpush1.bf16.msra.mxu0 %v3672
    %4005 = vmatprep.subr.bf16.mxu0 %v3689
    %4006 = vmatpush1.bf16.msra.mxu0 %v3688
    %4007 = vmatprep.subr.bf16.mxu0 0
    %4008 = vmatpush1.bf16.msra.mxu0 0
    %4009 = vmatprep.subr.bf16.mxu0 0
    %4010 = vmatpush1.bf16.msra.mxu0 0
    %4011 = vmatprep.subr.bf16.mxu0 0
    %4012 = vmatpush1.bf16.msra.mxu0 0
    %4013 = vmatprep.subr.bf16.mxu0 0
    %4014 = vmatpush1.bf16.msra.mxu0 0
    %4015 = vmatprep.subr.bf16.mxu0 0
    %4016 = vmatpush1.bf16.msra.mxu0 0
    %4017 = vmatprep.subr.bf16.mxu0 0
    %4018 = vmatpush1.bf16.msra.mxu0 0
    %4019 = vmatprep.subr.bf16.mxu0 0
    %4020 = vmatpush1.bf16.msra.mxu0 0
    %4021 = vmatprep.subr.bf16.mxu0 0
    %4022 = vmatpush1.bf16.msra.mxu0 0
    %4023 = vmatprep.subr.bf16.mxu0 0
    %4024 = vmatpush1.bf16.msra.mxu0 0
    %4025 = vmatprep.subr.bf16.mxu0 0
    %4026 = vmatpush1.bf16.msra.mxu0 0
    %4027 = vmatprep.subr.bf16.mxu0 0
    %4028 = vmatpush1.bf16.msra.mxu0 0
    %4029 = vmatprep.subr.bf16.mxu0 0
    %4030 = vmatpush1.bf16.msra.mxu0 0
    %4031 = vmatprep.subr.bf16.mxu0 0
    %4032 = vmatpush1.bf16.msra.mxu0 0
    %4033 = vmatprep.mubr.bf16.mxu0 0
    %4034 = vmatmul.mubr.bf16.gmra.mrb[0].mxu0 %v3741
    %v4035 = vpop.f32.mrb[0].mxu0
    %v4036 = vadd.f32 %v3471, %v4035
    %v4037 = vpop.f32.mrb[0].mxu0
    %v4038 = vadd.f32 %v3475, %v4037
    %v4039 = vpop.f32.mrb[0].mxu0
    %v4040 = vadd.f32 %v3471, %v4039
    %v4041 = vpop.f32.mrb[0].mxu0
    %v4042 = vadd.f32 %v3475, %v4041
    %4043 = vdwg.mxu0
    %4044 = vmatprep.subr.bf16.mxu0 %v3659
    %4045 = vmatpush1.bf16.msra.mxu0 %v3658
    %4046 = vmatprep.subr.bf16.mxu0 %v3675
    %4047 = vmatpush1.bf16.msra.mxu0 %v3674
    %4048 = vmatprep.subr.bf16.mxu0 %v3691
    %4049 = vmatpush1.bf16.msra.mxu0 %v3690
    %4050 = vmatprep.subr.bf16.mxu0 0
    %4051 = vmatpush1.bf16.msra.mxu0 0
    %4052 = vmatprep.subr.bf16.mxu0 0
    %4053 = vmatpush1.bf16.msra.mxu0 0
    %4054 = vmatprep.subr.bf16.mxu0 0
    %4055 = vmatpush1.bf16.msra.mxu0 0
    %4056 = vmatprep.subr.bf16.mxu0 0
    %4057 = vmatpush1.bf16.msra.mxu0 0
    %4058 = vmatprep.subr.bf16.mxu0 0
    %4059 = vmatpush1.bf16.msra.mxu0 0
    %4060 = vmatprep.subr.bf16.mxu0 0
    %4061 = vmatpush1.bf16.msra.mxu0 0
    %4062 = vmatprep.subr.bf16.mxu0 0
    %4063 = vmatpush1.bf16.msra.mxu0 0
    %4064 = vmatprep.subr.bf16.mxu0 0
    %4065 = vmatpush1.bf16.msra.mxu0 0
    %4066 = vmatprep.subr.bf16.mxu0 0
    %4067 = vmatpush1.bf16.msra.mxu0 0
    %4068 = vmatprep.subr.bf16.mxu0 0
    %4069 = vmatpush1.bf16.msra.mxu0 0
    %4070 = vmatprep.subr.bf16.mxu0 0
    %4071 = vmatpush1.bf16.msra.mxu0 0
    %4072 = vmatprep.subr.bf16.mxu0 0
    %4073 = vmatpush1.bf16.msra.mxu0 0
    %4074 = vmatprep.subr.bf16.mxu0 0
    %4075 = vmatpush1.bf16.msra.mxu0 0
    %4076 = vmatprep.mubr.bf16.mxu0 0
    %4077 = vmatmul.mubr.bf16.gmra.mrb[0].mxu0 %v3741
    %v4078 = vpop.f32.mrb[0].mxu0
    %v4079 = vadd.f32 %v3479, %v4078
    %v4080 = vpop.f32.mrb[0].mxu0
    %v4081 = vadd.f32 %v3483, %v4080
    %v4082 = vpop.f32.mrb[0].mxu0
    %v4083 = vadd.f32 %v3479, %v4082
    %v4084 = vpop.f32.mrb[0].mxu0
    %v4085 = vadd.f32 %v3483, %v4084
    %4086 = vdwg.mxu0
    %v4087 = vmax.f32 %v3778, 0.0
    %v4088 = vmax.f32 %v3780, 0.0
    %v4089 = vmax.f32 %v3821, 0.0
    %v4090 = vmax.f32 %v3823, 0.0
    %v4091 = vmax.f32 %v3864, 0.0
    %v4092 = vmax.f32 %v3866, 0.0
    %v4093 = vmax.f32 %v3907, 0.0
    %v4094 = vmax.f32 %v3909, 0.0
    %v4095 = vmax.f32 %v3950, 0.0
    %v4096 = vmax.f32 %v3952, 0.0
    %v4097 = vmax.f32 %v3993, 0.0
    %v4098 = vmax.f32 %v3995, 0.0
    %v4099 = vmax.f32 %v4036, 0.0
    %v4100 = vmax.f32 %v4038, 0.0
    %v4101 = vmax.f32 %v4079, 0.0
    %v4102 = vmax.f32 %v4081, 0.0
    %v4103 = vmax.f32 %v3782, 0.0
    %v4104 = vmax.f32 %v3784, 0.0
    %v4105 = vmax.f32 %v3825, 0.0
    %v4106 = vmax.f32 %v3827, 0.0
    %v4107 = vmax.f32 %v3868, 0.0
    %v4108 = vmax.f32 %v3870, 0.0
    %v4109 = vmax.f32 %v3911, 0.0
    %v4110 = vmax.f32 %v3913, 0.0
    %v4111 = vmax.f32 %v3954, 0.0
    %v4112 = vmax.f32 %v3956, 0.0
    %v4113 = vmax.f32 %v3997, 0.0
    %v4114 = vmax.f32 %v3999, 0.0
    %v4115 = vmax.f32 %v4040, 0.0
    %v4116 = vmax.f32 %v4042, 0.0
    %v4117 = vmax.f32 %v4083, 0.0
    %v4118 = vmax.f32 %v4085, 0.0
    %v4119 = vpack.c.bf16 %v4103, %v4087
    %v4120 = vpack.c.bf16 %v4104, %v4088
    %v4121 = vpack.c.bf16 %v4105, %v4089
    %v4122 = vpack.c.bf16 %v4106, %v4090
    %v4123 = vpack.c.bf16 %v4107, %v4091
    %v4124 = vpack.c.bf16 %v4108, %v4092
    %v4125 = vpack.c.bf16 %v4109, %v4093
    %v4126 = vpack.c.bf16 %v4110, %v4094
    %v4127 = vpack.c.bf16 %v4111, %v4095
    %v4128 = vpack.c.bf16 %v4112, %v4096
    %v4129 = vpack.c.bf16 %v4113, %v4097
    %v4130 = vpack.c.bf16 %v4114, %v4098
    %v4131 = vpack.c.bf16 %v4115, %v4099
    %v4132 = vpack.c.bf16 %v4116, %v4100
    %v4133 = vpack.c.bf16 %v4117, %v4101
    %v4134 = vpack.c.bf16 %v4118, %v4102
    %s4135 = scalar_lea.vmem %s12, 1024
    %v4136 = vld [vmem:[%s4135] sm:$0xf]
    %v4137 = vld [vmem:[%s4135 + $0x4] sm:$0xf]
    %v4138 = vld [vmem:[%s4135 + $0x8] sm:$0xf]
    %v4139 = vld [vmem:[%s4135 + $0xc] sm:$0xf]
    %v4140 = vld [vmem:[%s4135 + $0x10] sm:$0xf]
    %v4141 = vld [vmem:[%s4135 + $0x14] sm:$0xf]
    %v4142 = vld [vmem:[%s4135 + $0x18] sm:$0xf]
    %v4143 = vld [vmem:[%s4135 + $0x1c] sm:$0xf]
    %v4144 = vld [vmem:[%s4135 + $0x20] sm:$0xf]
    %v4145 = vld [vmem:[%s4135 + $0x24] sm:$0xf]
    %v4146 = vld [vmem:[%s4135 + $0x28] sm:$0xf]
    %v4147 = vld [vmem:[%s4135 + $0x2c] sm:$0xf]
    %v4148 = vld [vmem:[%s4135 + $0x30] sm:$0xf]
    %v4149 = vld [vmem:[%s4135 + $0x34] sm:$0xf]
    %v4150 = vld [vmem:[%s4135 + $0x38] sm:$0xf]
    %v4151 = vld [vmem:[%s4135 + $0x3c] sm:$0xf]
    %v4152 = vld [vmem:[%s4135 + $0x40] sm:$0xf]
    %v4153 = vld [vmem:[%s4135 + $0x44] sm:$0xf]
    %v4154 = vld [vmem:[%s4135 + $0x48] sm:$0xf]
    %v4155 = vld [vmem:[%s4135 + $0x4c] sm:$0xf]
    %v4156 = vld [vmem:[%s4135 + $0x50] sm:$0xf]
    %v4157 = vld [vmem:[%s4135 + $0x54] sm:$0xf]
    %v4158 = vld [vmem:[%s4135 + $0x58] sm:$0xf]
    %v4159 = vld [vmem:[%s4135 + $0x5c] sm:$0xf]
    %v4160 = vld [vmem:[%s4135 + $0x60] sm:$0xf]
    %v4161 = vld [vmem:[%s4135 + $0x64] sm:$0xf]
    %v4162 = vld [vmem:[%s4135 + $0x68] sm:$0xf]
    %v4163 = vld [vmem:[%s4135 + $0x6c] sm:$0xf]
    %v4164 = vld [vmem:[%s4135 + $0x70] sm:$0xf]
    %v4165 = vld [vmem:[%s4135 + $0x74] sm:$0xf]
    %v4166 = vld [vmem:[%s4135 + $0x78] sm:$0xf]
    %v4167 = vld [vmem:[%s4135 + $0x7c] sm:$0xf]
    %v4168 = vld [vmem:[%s4135 + $0x80] sm:$0xf]
    %v4169 = vld [vmem:[%s4135 + $0x84] sm:$0xf]
    %v4170 = vld [vmem:[%s4135 + $0x88] sm:$0xf]
    %v4171 = vld [vmem:[%s4135 + $0x8c] sm:$0xf]
    %v4172 = vld [vmem:[%s4135 + $0x90] sm:$0xf]
    %v4173 = vld [vmem:[%s4135 + $0x94] sm:$0xf]
    %v4174 = vld [vmem:[%s4135 + $0x98] sm:$0xf]
    %v4175 = vld [vmem:[%s4135 + $0x9c] sm:$0xf]
    %v4176 = vld [vmem:[%s4135 + $0xa0] sm:$0xf]
    %v4177 = vld [vmem:[%s4135 + $0xa4] sm:$0xf]
    %v4178 = vld [vmem:[%s4135 + $0xa8] sm:$0xf]
    %v4179 = vld [vmem:[%s4135 + $0xac] sm:$0xf]
    %v4180 = vld [vmem:[%s4135 + $0xb0] sm:$0xf]
    %v4181 = vld [vmem:[%s4135 + $0xb4] sm:$0xf]
    %v4182 = vld [vmem:[%s4135 + $0xb8] sm:$0xf]
    %v4183 = vld [vmem:[%s4135 + $0xbc] sm:$0xf]
    %v4184 = vld [vmem:[%s4135 + $0xc0] sm:$0xf]
    %v4185 = vld [vmem:[%s4135 + $0xc4] sm:$0xf]
    %v4186 = vld [vmem:[%s4135 + $0xc8] sm:$0xf]
    %v4187 = vld [vmem:[%s4135 + $0xcc] sm:$0xf]
    %v4188 = vld [vmem:[%s4135 + $0xd0] sm:$0xf]
    %v4189 = vld [vmem:[%s4135 + $0xd4] sm:$0xf]
    %v4190 = vld [vmem:[%s4135 + $0xd8] sm:$0xf]
    %v4191 = vld [vmem:[%s4135 + $0xdc] sm:$0xf]
    %v4192 = vld [vmem:[%s4135 + $0xe0] sm:$0xf]
    %v4193 = vld [vmem:[%s4135 + $0xe4] sm:$0xf]
    %v4194 = vld [vmem:[%s4135 + $0xe8] sm:$0xf]
    %v4195 = vld [vmem:[%s4135 + $0xec] sm:$0xf]
    %v4196 = vld [vmem:[%s4135 + $0xf0] sm:$0xf]
    %v4197 = vld [vmem:[%s4135 + $0xf4] sm:$0xf]
    %v4198 = vld [vmem:[%s4135 + $0xf8] sm:$0xf]
    %v4199 = vld [vmem:[%s4135 + $0xfc] sm:$0xf]
    %v4200 = vld [vmem:[%s4135 + $0x100] sm:$0xf]
    %v4201 = vld [vmem:[%s4135 + $0x104] sm:$0xf]
    %v4202 = vld [vmem:[%s4135 + $0x108] sm:$0xf]
    %v4203 = vld [vmem:[%s4135 + $0x10c] sm:$0xf]
    %v4204 = vld [vmem:[%s4135 + $0x110] sm:$0xf]
    %v4205 = vld [vmem:[%s4135 + $0x114] sm:$0xf]
    %v4206 = vld [vmem:[%s4135 + $0x118] sm:$0xf]
    %v4207 = vld [vmem:[%s4135 + $0x11c] sm:$0xf]
    %v4208 = vld [vmem:[%s4135 + $0x120] sm:$0xf]
    %v4209 = vld [vmem:[%s4135 + $0x124] sm:$0xf]
    %v4210 = vld [vmem:[%s4135 + $0x128] sm:$0xf]
    %v4211 = vld [vmem:[%s4135 + $0x12c] sm:$0xf]
    %v4212 = vld [vmem:[%s4135 + $0x130] sm:$0xf]
    %v4213 = vld [vmem:[%s4135 + $0x134] sm:$0xf]
    %v4214 = vld [vmem:[%s4135 + $0x138] sm:$0xf]
    %v4215 = vld [vmem:[%s4135 + $0x13c] sm:$0xf]
    %v4216 = vld [vmem:[%s4135 + $0x140] sm:$0xf]
    %v4217 = vld [vmem:[%s4135 + $0x144] sm:$0xf]
    %v4218 = vld [vmem:[%s4135 + $0x148] sm:$0xf]
    %v4219 = vld [vmem:[%s4135 + $0x14c] sm:$0xf]
    %v4220 = vld [vmem:[%s4135 + $0x150] sm:$0xf]
    %v4221 = vld [vmem:[%s4135 + $0x154] sm:$0xf]
    %v4222 = vld [vmem:[%s4135 + $0x158] sm:$0xf]
    %v4223 = vld [vmem:[%s4135 + $0x15c] sm:$0xf]
    %v4224 = vld [vmem:[%s4135 + $0x160] sm:$0xf]
    %v4225 = vld [vmem:[%s4135 + $0x164] sm:$0xf]
    %v4226 = vld [vmem:[%s4135 + $0x168] sm:$0xf]
    %v4227 = vld [vmem:[%s4135 + $0x16c] sm:$0xf]
    %v4228 = vld [vmem:[%s4135 + $0x170] sm:$0xf]
    %v4229 = vld [vmem:[%s4135 + $0x174] sm:$0xf]
    %v4230 = vld [vmem:[%s4135 + $0x178] sm:$0xf]
    %v4231 = vld [vmem:[%s4135 + $0x17c] sm:$0xf]
    %v4232 = vld [vmem:[%s4135 + $0x180] sm:$0xf]
    %v4233 = vld [vmem:[%s4135 + $0x184] sm:$0xf]
    %v4234 = vld [vmem:[%s4135 + $0x188] sm:$0xf]
    %v4235 = vld [vmem:[%s4135 + $0x18c] sm:$0xf]
    %v4236 = vld [vmem:[%s4135 + $0x190] sm:$0xf]
    %v4237 = vld [vmem:[%s4135 + $0x194] sm:$0xf]
    %v4238 = vld [vmem:[%s4135 + $0x198] sm:$0xf]
    %v4239 = vld [vmem:[%s4135 + $0x19c] sm:$0xf]
    %v4240 = vld [vmem:[%s4135 + $0x1a0] sm:$0xf]
    %v4241 = vld [vmem:[%s4135 + $0x1a4] sm:$0xf]
    %v4242 = vld [vmem:[%s4135 + $0x1a8] sm:$0xf]
    %v4243 = vld [vmem:[%s4135 + $0x1ac] sm:$0xf]
    %v4244 = vld [vmem:[%s4135 + $0x1b0] sm:$0xf]
    %v4245 = vld [vmem:[%s4135 + $0x1b4] sm:$0xf]
    %v4246 = vld [vmem:[%s4135 + $0x1b8] sm:$0xf]
    %v4247 = vld [vmem:[%s4135 + $0x1bc] sm:$0xf]
    %v4248 = vld [vmem:[%s4135 + $0x1c0] sm:$0xf]
    %v4249 = vld [vmem:[%s4135 + $0x1c4] sm:$0xf]
    %v4250 = vld [vmem:[%s4135 + $0x1c8] sm:$0xf]
    %v4251 = vld [vmem:[%s4135 + $0x1cc] sm:$0xf]
    %v4252 = vld [vmem:[%s4135 + $0x1d0] sm:$0xf]
    %v4253 = vld [vmem:[%s4135 + $0x1d4] sm:$0xf]
    %v4254 = vld [vmem:[%s4135 + $0x1d8] sm:$0xf]
    %v4255 = vld [vmem:[%s4135 + $0x1dc] sm:$0xf]
    %v4256 = vld [vmem:[%s4135 + $0x1e0] sm:$0xf]
    %v4257 = vld [vmem:[%s4135 + $0x1e4] sm:$0xf]
    %v4258 = vld [vmem:[%s4135 + $0x1e8] sm:$0xf]
    %v4259 = vld [vmem:[%s4135 + $0x1ec] sm:$0xf]
    %v4260 = vld [vmem:[%s4135 + $0x1f0] sm:$0xf]
    %v4261 = vld [vmem:[%s4135 + $0x1f4] sm:$0xf]
    %v4262 = vld [vmem:[%s4135 + $0x1f8] sm:$0xf]
    %v4263 = vld [vmem:[%s4135 + $0x1fc] sm:$0xf]
    %v4264 = vld [vmem:[%s4135 + $0x200] sm:$0xf]
    %v4265 = vld [vmem:[%s4135 + $0x204] sm:$0xf]
    %v4266 = vld [vmem:[%s4135 + $0x208] sm:$0xf]
    %v4267 = vld [vmem:[%s4135 + $0x20c] sm:$0xf]
    %v4268 = vld [vmem:[%s4135 + $0x210] sm:$0xf]
    %v4269 = vld [vmem:[%s4135 + $0x214] sm:$0xf]
    %v4270 = vld [vmem:[%s4135 + $0x218] sm:$0xf]
    %v4271 = vld [vmem:[%s4135 + $0x21c] sm:$0xf]
    %v4272 = vld [vmem:[%s4135 + $0x220] sm:$0xf]
    %v4273 = vld [vmem:[%s4135 + $0x224] sm:$0xf]
    %v4274 = vld [vmem:[%s4135 + $0x228] sm:$0xf]
    %v4275 = vld [vmem:[%s4135 + $0x22c] sm:$0xf]
    %v4276 = vld [vmem:[%s4135 + $0x230] sm:$0xf]
    %v4277 = vld [vmem:[%s4135 + $0x234] sm:$0xf]
    %v4278 = vld [vmem:[%s4135 + $0x238] sm:$0xf]
    %v4279 = vld [vmem:[%s4135 + $0x23c] sm:$0xf]
    %v4280 = vld [vmem:[%s4135 + $0x240] sm:$0xf]
    %v4281 = vld [vmem:[%s4135 + $0x244] sm:$0xf]
    %v4282 = vld [vmem:[%s4135 + $0x248] sm:$0xf]
    %v4283 = vld [vmem:[%s4135 + $0x24c] sm:$0xf]
    %v4284 = vld [vmem:[%s4135 + $0x250] sm:$0xf]
    %v4285 = vld [vmem:[%s4135 + $0x254] sm:$0xf]
    %v4286 = vld [vmem:[%s4135 + $0x258] sm:$0xf]
    %v4287 = vld [vmem:[%s4135 + $0x25c] sm:$0xf]
    %v4288 = vld [vmem:[%s4135 + $0x260] sm:$0xf]
    %v4289 = vld [vmem:[%s4135 + $0x264] sm:$0xf]
    %v4290 = vld [vmem:[%s4135 + $0x268] sm:$0xf]
    %v4291 = vld [vmem:[%s4135 + $0x26c] sm:$0xf]
    %v4292 = vld [vmem:[%s4135 + $0x270] sm:$0xf]
    %v4293 = vld [vmem:[%s4135 + $0x274] sm:$0xf]
    %v4294 = vld [vmem:[%s4135 + $0x278] sm:$0xf]
    %v4295 = vld [vmem:[%s4135 + $0x27c] sm:$0xf]
    %v4296 = vld [vmem:[%s4135 + $0x280] sm:$0xf]
    %v4297 = vld [vmem:[%s4135 + $0x284] sm:$0xf]
    %v4298 = vld [vmem:[%s4135 + $0x288] sm:$0xf]
    %v4299 = vld [vmem:[%s4135 + $0x28c] sm:$0xf]
    %v4300 = vld [vmem:[%s4135 + $0x290] sm:$0xf]
    %v4301 = vld [vmem:[%s4135 + $0x294] sm:$0xf]
    %v4302 = vld [vmem:[%s4135 + $0x298] sm:$0xf]
    %v4303 = vld [vmem:[%s4135 + $0x29c] sm:$0xf]
    %v4304 = vld [vmem:[%s4135 + $0x2a0] sm:$0xf]
    %v4305 = vld [vmem:[%s4135 + $0x2a4] sm:$0xf]
    %v4306 = vld [vmem:[%s4135 + $0x2a8] sm:$0xf]
    %v4307 = vld [vmem:[%s4135 + $0x2ac] sm:$0xf]
    %v4308 = vld [vmem:[%s4135 + $0x2b0] sm:$0xf]
    %v4309 = vld [vmem:[%s4135 + $0x2b4] sm:$0xf]
    %v4310 = vld [vmem:[%s4135 + $0x2b8] sm:$0xf]
    %v4311 = vld [vmem:[%s4135 + $0x2bc] sm:$0xf]
    %v4312 = vld [vmem:[%s4135 + $0x2c0] sm:$0xf]
    %v4313 = vld [vmem:[%s4135 + $0x2c4] sm:$0xf]
    %v4314 = vld [vmem:[%s4135 + $0x2c8] sm:$0xf]
    %v4315 = vld [vmem:[%s4135 + $0x2cc] sm:$0xf]
    %v4316 = vld [vmem:[%s4135 + $0x2d0] sm:$0xf]
    %v4317 = vld [vmem:[%s4135 + $0x2d4] sm:$0xf]
    %v4318 = vld [vmem:[%s4135 + $0x2d8] sm:$0xf]
    %v4319 = vld [vmem:[%s4135 + $0x2dc] sm:$0xf]
    %v4320 = vld [vmem:[%s4135 + $0x2e0] sm:$0xf]
    %v4321 = vld [vmem:[%s4135 + $0x2e4] sm:$0xf]
    %v4322 = vld [vmem:[%s4135 + $0x2e8] sm:$0xf]
    %v4323 = vld [vmem:[%s4135 + $0x2ec] sm:$0xf]
    %v4324 = vld [vmem:[%s4135 + $0x2f0] sm:$0xf]
    %v4325 = vld [vmem:[%s4135 + $0x2f4] sm:$0xf]
    %v4326 = vld [vmem:[%s4135 + $0x2f8] sm:$0xf]
    %v4327 = vld [vmem:[%s4135 + $0x2fc] sm:$0xf]
    %v4328 = vld [vmem:[%s4135 + $0x300] sm:$0xf]
    %v4329 = vld [vmem:[%s4135 + $0x304] sm:$0xf]
    %v4330 = vld [vmem:[%s4135 + $0x308] sm:$0xf]
    %v4331 = vld [vmem:[%s4135 + $0x30c] sm:$0xf]
    %v4332 = vld [vmem:[%s4135 + $0x310] sm:$0xf]
    %v4333 = vld [vmem:[%s4135 + $0x314] sm:$0xf]
    %v4334 = vld [vmem:[%s4135 + $0x318] sm:$0xf]
    %v4335 = vld [vmem:[%s4135 + $0x31c] sm:$0xf]
    %v4336 = vld [vmem:[%s4135 + $0x320] sm:$0xf]
    %v4337 = vld [vmem:[%s4135 + $0x324] sm:$0xf]
    %v4338 = vld [vmem:[%s4135 + $0x328] sm:$0xf]
    %v4339 = vld [vmem:[%s4135 + $0x32c] sm:$0xf]
    %v4340 = vld [vmem:[%s4135 + $0x330] sm:$0xf]
    %v4341 = vld [vmem:[%s4135 + $0x334] sm:$0xf]
    %v4342 = vld [vmem:[%s4135 + $0x338] sm:$0xf]
    %v4343 = vld [vmem:[%s4135 + $0x33c] sm:$0xf]
    %v4344 = vld [vmem:[%s4135 + $0x340] sm:$0xf]
    %v4345 = vld [vmem:[%s4135 + $0x344] sm:$0xf]
    %v4346 = vld [vmem:[%s4135 + $0x348] sm:$0xf]
    %v4347 = vld [vmem:[%s4135 + $0x34c] sm:$0xf]
    %v4348 = vld [vmem:[%s4135 + $0x350] sm:$0xf]
    %v4349 = vld [vmem:[%s4135 + $0x354] sm:$0xf]
    %v4350 = vld [vmem:[%s4135 + $0x358] sm:$0xf]
    %v4351 = vld [vmem:[%s4135 + $0x35c] sm:$0xf]
    %v4352 = vld [vmem:[%s4135 + $0x360] sm:$0xf]
    %v4353 = vld [vmem:[%s4135 + $0x364] sm:$0xf]
    %v4354 = vld [vmem:[%s4135 + $0x368] sm:$0xf]
    %v4355 = vld [vmem:[%s4135 + $0x36c] sm:$0xf]
    %v4356 = vld [vmem:[%s4135 + $0x370] sm:$0xf]
    %v4357 = vld [vmem:[%s4135 + $0x374] sm:$0xf]
    %v4358 = vld [vmem:[%s4135 + $0x378] sm:$0xf]
    %v4359 = vld [vmem:[%s4135 + $0x37c] sm:$0xf]
    %v4360 = vld [vmem:[%s4135 + $0x380] sm:$0xf]
    %v4361 = vld [vmem:[%s4135 + $0x384] sm:$0xf]
    %v4362 = vld [vmem:[%s4135 + $0x388] sm:$0xf]
    %v4363 = vld [vmem:[%s4135 + $0x38c] sm:$0xf]
    %v4364 = vld [vmem:[%s4135 + $0x390] sm:$0xf]
    %v4365 = vld [vmem:[%s4135 + $0x394] sm:$0xf]
    %v4366 = vld [vmem:[%s4135 + $0x398] sm:$0xf]
    %v4367 = vld [vmem:[%s4135 + $0x39c] sm:$0xf]
    %v4368 = vld [vmem:[%s4135 + $0x3a0] sm:$0xf]
    %v4369 = vld [vmem:[%s4135 + $0x3a4] sm:$0xf]
    %v4370 = vld [vmem:[%s4135 + $0x3a8] sm:$0xf]
    %v4371 = vld [vmem:[%s4135 + $0x3ac] sm:$0xf]
    %v4372 = vld [vmem:[%s4135 + $0x3b0] sm:$0xf]
    %v4373 = vld [vmem:[%s4135 + $0x3b4] sm:$0xf]
    %v4374 = vld [vmem:[%s4135 + $0x3b8] sm:$0xf]
    %v4375 = vld [vmem:[%s4135 + $0x3bc] sm:$0xf]
    %v4376 = vld [vmem:[%s4135 + $0x3c0] sm:$0xf]
    %v4377 = vld [vmem:[%s4135 + $0x3c4] sm:$0xf]
    %v4378 = vld [vmem:[%s4135 + $0x3c8] sm:$0xf]
    %v4379 = vld [vmem:[%s4135 + $0x3cc] sm:$0xf]
    %v4380 = vld [vmem:[%s4135 + $0x3d0] sm:$0xf]
    %v4381 = vld [vmem:[%s4135 + $0x3d4] sm:$0xf]
    %v4382 = vld [vmem:[%s4135 + $0x3d8] sm:$0xf]
    %v4383 = vld [vmem:[%s4135 + $0x3dc] sm:$0xf]
    %v4384 = vld [vmem:[%s4135 + $0x3e0] sm:$0xf]
    %v4385 = vld [vmem:[%s4135 + $0x3e4] sm:$0xf]
    %v4386 = vld [vmem:[%s4135 + $0x3e8] sm:$0xf]
    %v4387 = vld [vmem:[%s4135 + $0x3ec] sm:$0xf]
    %v4388 = vld [vmem:[%s4135 + $0x3f0] sm:$0xf]
    %v4389 = vld [vmem:[%s4135 + $0x3f4] sm:$0xf]
    %v4390 = vld [vmem:[%s4135 + $0x3f8] sm:$0xf]
    %v4391 = vld [vmem:[%s4135 + $0x3fc] sm:$0xf]
    %s4392 = scalar_lea.vmem %s13, 1
    %v4393 = vld [vmem:[%s4392] sm:$0x1]
    %v4395 = vlaneseq
    %v4396 = vshrl.u32 %v4395, 7
    %v4397 = vsub.s32 0, %v4396
    %v4398 = vrot.slane %v4393, %v4397
    %v4656 = vunpack.c.l.b16 %v4136
    %v4657 = vunpack.c.l.b16 %v4137
    %v4658 = vunpack.c.l.b16 %v4138
    %v4659 = vunpack.c.l.b16 %v4139
    %v4660 = vunpack.c.l.b16 %v4140
    %v4661 = vunpack.c.l.b16 %v4141
    %v4662 = vunpack.c.l.b16 %v4142
    %v4663 = vunpack.c.l.b16 %v4143
    %v4664 = vunpack.c.l.b16 %v4144
    %v4665 = vunpack.c.l.b16 %v4145
    %v4666 = vunpack.c.l.b16 %v4146
    %v4667 = vunpack.c.l.b16 %v4147
    %v4668 = vunpack.c.l.b16 %v4148
    %v4669 = vunpack.c.l.b16 %v4149
    %v4670 = vunpack.c.l.b16 %v4150
    %v4671 = vunpack.c.l.b16 %v4151
    %v4672 = vunpack.c.l.b16 %v4152
    %v4673 = vunpack.c.l.b16 %v4153
    %v4674 = vunpack.c.l.b16 %v4154
    %v4675 = vunpack.c.l.b16 %v4155
    %v4676 = vunpack.c.l.b16 %v4156
    %v4677 = vunpack.c.l.b16 %v4157
    %v4678 = vunpack.c.l.b16 %v4158
    %v4679 = vunpack.c.l.b16 %v4159
    %v4680 = vunpack.c.l.b16 %v4160
    %v4681 = vunpack.c.l.b16 %v4161
    %v4682 = vunpack.c.l.b16 %v4162
    %v4683 = vunpack.c.l.b16 %v4163
    %v4684 = vunpack.c.l.b16 %v4164
    %v4685 = vunpack.c.l.b16 %v4165
    %v4686 = vunpack.c.l.b16 %v4166
    %v4687 = vunpack.c.l.b16 %v4167
    %v4688 = vunpack.c.l.b16 %v4168
    %v4689 = vunpack.c.l.b16 %v4169
    %v4690 = vunpack.c.l.b16 %v4170
    %v4691 = vunpack.c.l.b16 %v4171
    %v4692 = vunpack.c.l.b16 %v4172
    %v4693 = vunpack.c.l.b16 %v4173
    %v4694 = vunpack.c.l.b16 %v4174
    %v4695 = vunpack.c.l.b16 %v4175
    %v4696 = vunpack.c.l.b16 %v4176
    %v4697 = vunpack.c.l.b16 %v4177
    %v4698 = vunpack.c.l.b16 %v4178
    %v4699 = vunpack.c.l.b16 %v4179
    %v4700 = vunpack.c.l.b16 %v4180
    %v4701 = vunpack.c.l.b16 %v4181
    %v4702 = vunpack.c.l.b16 %v4182
    %v4703 = vunpack.c.l.b16 %v4183
    %v4704 = vunpack.c.l.b16 %v4184
    %v4705 = vunpack.c.l.b16 %v4185
    %v4706 = vunpack.c.l.b16 %v4186
    %v4707 = vunpack.c.l.b16 %v4187
    %v4708 = vunpack.c.l.b16 %v4188
    %v4709 = vunpack.c.l.b16 %v4189
    %v4710 = vunpack.c.l.b16 %v4190
    %v4711 = vunpack.c.l.b16 %v4191
    %v4712 = vunpack.c.l.b16 %v4192
    %v4713 = vunpack.c.l.b16 %v4193
    %v4714 = vunpack.c.l.b16 %v4194
    %v4715 = vunpack.c.l.b16 %v4195
    %v4716 = vunpack.c.l.b16 %v4196
    %v4717 = vunpack.c.l.b16 %v4197
    %v4718 = vunpack.c.l.b16 %v4198
    %v4719 = vunpack.c.l.b16 %v4199
    %v4720 = vunpack.c.l.b16 %v4200
    %v4721 = vunpack.c.l.b16 %v4201
    %v4722 = vunpack.c.l.b16 %v4202
    %v4723 = vunpack.c.l.b16 %v4203
    %v4724 = vunpack.c.l.b16 %v4204
    %v4725 = vunpack.c.l.b16 %v4205
    %v4726 = vunpack.c.l.b16 %v4206
    %v4727 = vunpack.c.l.b16 %v4207
    %v4728 = vunpack.c.l.b16 %v4208
    %v4729 = vunpack.c.l.b16 %v4209
    %v4730 = vunpack.c.l.b16 %v4210
    %v4731 = vunpack.c.l.b16 %v4211
    %v4732 = vunpack.c.l.b16 %v4212
    %v4733 = vunpack.c.l.b16 %v4213
    %v4734 = vunpack.c.l.b16 %v4214
    %v4735 = vunpack.c.l.b16 %v4215
    %v4736 = vunpack.c.l.b16 %v4216
    %v4737 = vunpack.c.l.b16 %v4217
    %v4738 = vunpack.c.l.b16 %v4218
    %v4739 = vunpack.c.l.b16 %v4219
    %v4740 = vunpack.c.l.b16 %v4220
    %v4741 = vunpack.c.l.b16 %v4221
    %v4742 = vunpack.c.l.b16 %v4222
    %v4743 = vunpack.c.l.b16 %v4223
    %v4744 = vunpack.c.l.b16 %v4224
    %v4745 = vunpack.c.l.b16 %v4225
    %v4746 = vunpack.c.l.b16 %v4226
    %v4747 = vunpack.c.l.b16 %v4227
    %v4748 = vunpack.c.l.b16 %v4228
    %v4749 = vunpack.c.l.b16 %v4229
    %v4750 = vunpack.c.l.b16 %v4230
    %v4751 = vunpack.c.l.b16 %v4231
    %v4752 = vunpack.c.l.b16 %v4232
    %v4753 = vunpack.c.l.b16 %v4233
    %v4754 = vunpack.c.l.b16 %v4234
    %v4755 = vunpack.c.l.b16 %v4235
    %v4756 = vunpack.c.l.b16 %v4236
    %v4757 = vunpack.c.l.b16 %v4237
    %v4758 = vunpack.c.l.b16 %v4238
    %v4759 = vunpack.c.l.b16 %v4239
    %v4760 = vunpack.c.l.b16 %v4240
    %v4761 = vunpack.c.l.b16 %v4241
    %v4762 = vunpack.c.l.b16 %v4242
    %v4763 = vunpack.c.l.b16 %v4243
    %v4764 = vunpack.c.l.b16 %v4244
    %v4765 = vunpack.c.l.b16 %v4245
    %v4766 = vunpack.c.l.b16 %v4246
    %v4767 = vunpack.c.l.b16 %v4247
    %v4768 = vunpack.c.l.b16 %v4248
    %v4769 = vunpack.c.l.b16 %v4249
    %v4770 = vunpack.c.l.b16 %v4250
    %v4771 = vunpack.c.l.b16 %v4251
    %v4772 = vunpack.c.l.b16 %v4252
    %v4773 = vunpack.c.l.b16 %v4253
    %v4774 = vunpack.c.l.b16 %v4254
    %v4775 = vunpack.c.l.b16 %v4255
    %v4776 = vunpack.c.l.b16 %v4256
    %v4777 = vunpack.c.l.b16 %v4257
    %v4778 = vunpack.c.l.b16 %v4258
    %v4779 = vunpack.c.l.b16 %v4259
    %v4780 = vunpack.c.l.b16 %v4260
    %v4781 = vunpack.c.l.b16 %v4261
    %v4782 = vunpack.c.l.b16 %v4262
    %v4783 = vunpack.c.l.b16 %v4263
    %v4784 = vunpack.c.l.b16 %v4264
    %v4785 = vunpack.c.l.b16 %v4265
    %v4786 = vunpack.c.l.b16 %v4266
    %v4787 = vunpack.c.l.b16 %v4267
    %v4788 = vunpack.c.l.b16 %v4268
    %v4789 = vunpack.c.l.b16 %v4269
    %v4790 = vunpack.c.l.b16 %v4270
    %v4791 = vunpack.c.l.b16 %v4271
    %v4792 = vunpack.c.l.b16 %v4272
    %v4793 = vunpack.c.l.b16 %v4273
    %v4794 = vunpack.c.l.b16 %v4274
    %v4795 = vunpack.c.l.b16 %v4275
    %v4796 = vunpack.c.l.b16 %v4276
    %v4797 = vunpack.c.l.b16 %v4277
    %v4798 = vunpack.c.l.b16 %v4278
    %v4799 = vunpack.c.l.b16 %v4279
    %v4800 = vunpack.c.l.b16 %v4280
    %v4801 = vunpack.c.l.b16 %v4281
    %v4802 = vunpack.c.l.b16 %v4282
    %v4803 = vunpack.c.l.b16 %v4283
    %v4804 = vunpack.c.l.b16 %v4284
    %v4805 = vunpack.c.l.b16 %v4285
    %v4806 = vunpack.c.l.b16 %v4286
    %v4807 = vunpack.c.l.b16 %v4287
    %v4808 = vunpack.c.l.b16 %v4288
    %v4809 = vunpack.c.l.b16 %v4289
    %v4810 = vunpack.c.l.b16 %v4290
    %v4811 = vunpack.c.l.b16 %v4291
    %v4812 = vunpack.c.l.b16 %v4292
    %v4813 = vunpack.c.l.b16 %v4293
    %v4814 = vunpack.c.l.b16 %v4294
    %v4815 = vunpack.c.l.b16 %v4295
    %v4816 = vunpack.c.l.b16 %v4296
    %v4817 = vunpack.c.l.b16 %v4297
    %v4818 = vunpack.c.l.b16 %v4298
    %v4819 = vunpack.c.l.b16 %v4299
    %v4820 = vunpack.c.l.b16 %v4300
    %v4821 = vunpack.c.l.b16 %v4301
    %v4822 = vunpack.c.l.b16 %v4302
    %v4823 = vunpack.c.l.b16 %v4303
    %v4824 = vunpack.c.l.b16 %v4304
    %v4825 = vunpack.c.l.b16 %v4305
    %v4826 = vunpack.c.l.b16 %v4306
    %v4827 = vunpack.c.l.b16 %v4307
    %v4828 = vunpack.c.l.b16 %v4308
    %v4829 = vunpack.c.l.b16 %v4309
    %v4830 = vunpack.c.l.b16 %v4310
    %v4831 = vunpack.c.l.b16 %v4311
    %v4832 = vunpack.c.l.b16 %v4312
    %v4833 = vunpack.c.l.b16 %v4313
    %v4834 = vunpack.c.l.b16 %v4314
    %v4835 = vunpack.c.l.b16 %v4315
    %v4836 = vunpack.c.l.b16 %v4316
    %v4837 = vunpack.c.l.b16 %v4317
    %v4838 = vunpack.c.l.b16 %v4318
    %v4839 = vunpack.c.l.b16 %v4319
    %v4840 = vunpack.c.l.b16 %v4320
    %v4841 = vunpack.c.l.b16 %v4321
    %v4842 = vunpack.c.l.b16 %v4322
    %v4843 = vunpack.c.l.b16 %v4323
    %v4844 = vunpack.c.l.b16 %v4324
    %v4845 = vunpack.c.l.b16 %v4325
    %v4846 = vunpack.c.l.b16 %v4326
    %v4847 = vunpack.c.l.b16 %v4327
    %v4848 = vunpack.c.l.b16 %v4328
    %v4849 = vunpack.c.l.b16 %v4329
    %v4850 = vunpack.c.l.b16 %v4330
    %v4851 = vunpack.c.l.b16 %v4331
    %v4852 = vunpack.c.l.b16 %v4332
    %v4853 = vunpack.c.l.b16 %v4333
    %v4854 = vunpack.c.l.b16 %v4334
    %v4855 = vunpack.c.l.b16 %v4335
    %v4856 = vunpack.c.l.b16 %v4336
    %v4857 = vunpack.c.l.b16 %v4337
    %v4858 = vunpack.c.l.b16 %v4338
    %v4859 = vunpack.c.l.b16 %v4339
    %v4860 = vunpack.c.l.b16 %v4340
    %v4861 = vunpack.c.l.b16 %v4341
    %v4862 = vunpack.c.l.b16 %v4342
    %v4863 = vunpack.c.l.b16 %v4343
    %v4864 = vunpack.c.l.b16 %v4344
    %v4865 = vunpack.c.l.b16 %v4345
    %v4866 = vunpack.c.l.b16 %v4346
    %v4867 = vunpack.c.l.b16 %v4347
    %v4868 = vunpack.c.l.b16 %v4348
    %v4869 = vunpack.c.l.b16 %v4349
    %v4870 = vunpack.c.l.b16 %v4350
    %v4871 = vunpack.c.l.b16 %v4351
    %v4872 = vunpack.c.l.b16 %v4352
    %v4873 = vunpack.c.l.b16 %v4353
    %v4874 = vunpack.c.l.b16 %v4354
    %v4875 = vunpack.c.l.b16 %v4355
    %v4876 = vunpack.c.l.b16 %v4356
    %v4877 = vunpack.c.l.b16 %v4357
    %v4878 = vunpack.c.l.b16 %v4358
    %v4879 = vunpack.c.l.b16 %v4359
    %v4880 = vunpack.c.l.b16 %v4360
    %v4881 = vunpack.c.l.b16 %v4361
    %v4882 = vunpack.c.l.b16 %v4362
    %v4883 = vunpack.c.l.b16 %v4363
    %v4884 = vunpack.c.l.b16 %v4364
    %v4885 = vunpack.c.l.b16 %v4365
    %v4886 = vunpack.c.l.b16 %v4366
    %v4887 = vunpack.c.l.b16 %v4367
    %v4888 = vunpack.c.l.b16 %v4368
    %v4889 = vunpack.c.l.b16 %v4369
    %v4890 = vunpack.c.l.b16 %v4370
    %v4891 = vunpack.c.l.b16 %v4371
    %v4892 = vunpack.c.l.b16 %v4372
    %v4893 = vunpack.c.l.b16 %v4373
    %v4894 = vunpack.c.l.b16 %v4374
    %v4895 = vunpack.c.l.b16 %v4375
    %v4896 = vunpack.c.l.b16 %v4376
    %v4897 = vunpack.c.l.b16 %v4377
    %v4898 = vunpack.c.l.b16 %v4378
    %v4899 = vunpack.c.l.b16 %v4379
    %v4900 = vunpack.c.l.b16 %v4380
    %v4901 = vunpack.c.l.b16 %v4381
    %v4902 = vunpack.c.l.b16 %v4382
    %v4903 = vunpack.c.l.b16 %v4383
    %v4904 = vunpack.c.l.b16 %v4384
    %v4905 = vunpack.c.l.b16 %v4385
    %v4906 = vunpack.c.l.b16 %v4386
    %v4907 = vunpack.c.l.b16 %v4387
    %v4908 = vunpack.c.l.b16 %v4388
    %v4909 = vunpack.c.l.b16 %v4389
    %v4910 = vunpack.c.l.b16 %v4390
    %v4911 = vunpack.c.l.b16 %v4391
    %v4912 = vpack.c.b16 %v4657, %v4656
    %v4913 = vpack.c.b16 %v4659, %v4658
    %v4914 = vpack.c.b16 %v4661, %v4660
    %v4915 = vpack.c.b16 %v4663, %v4662
    %v4916 = vpack.c.b16 %v4665, %v4664
    %v4917 = vpack.c.b16 %v4667, %v4666
    %v4918 = vpack.c.b16 %v4669, %v4668
    %v4919 = vpack.c.b16 %v4671, %v4670
    %v4920 = vpack.c.b16 %v4673, %v4672
    %v4921 = vpack.c.b16 %v4675, %v4674
    %v4922 = vpack.c.b16 %v4677, %v4676
    %v4923 = vpack.c.b16 %v4679, %v4678
    %v4924 = vpack.c.b16 %v4681, %v4680
    %v4925 = vpack.c.b16 %v4683, %v4682
    %v4926 = vpack.c.b16 %v4685, %v4684
    %v4927 = vpack.c.b16 %v4687, %v4686
    %v4928 = vpack.c.b16 %v4689, %v4688
    %v4929 = vpack.c.b16 %v4691, %v4690
    %v4930 = vpack.c.b16 %v4693, %v4692
    %v4931 = vpack.c.b16 %v4695, %v4694
    %v4932 = vpack.c.b16 %v4697, %v4696
    %v4933 = vpack.c.b16 %v4699, %v4698
    %v4934 = vpack.c.b16 %v4701, %v4700
    %v4935 = vpack.c.b16 %v4703, %v4702
    %v4936 = vpack.c.b16 %v4705, %v4704
    %v4937 = vpack.c.b16 %v4707, %v4706
    %v4938 = vpack.c.b16 %v4709, %v4708
    %v4939 = vpack.c.b16 %v4711, %v4710
    %v4940 = vpack.c.b16 %v4713, %v4712
    %v4941 = vpack.c.b16 %v4715, %v4714
    %v4942 = vpack.c.b16 %v4717, %v4716
    %v4943 = vpack.c.b16 %v4719, %v4718
    %v4944 = vpack.c.b16 %v4721, %v4720
    %v4945 = vpack.c.b16 %v4723, %v4722
    %v4946 = vpack.c.b16 %v4725, %v4724
    %v4947 = vpack.c.b16 %v4727, %v4726
    %v4948 = vpack.c.b16 %v4729, %v4728
    %v4949 = vpack.c.b16 %v4731, %v4730
    %v4950 = vpack.c.b16 %v4733, %v4732
    %v4951 = vpack.c.b16 %v4735, %v4734
    %v4952 = vpack.c.b16 %v4737, %v4736
    %v4953 = vpack.c.b16 %v4739, %v4738
    %v4954 = vpack.c.b16 %v4741, %v4740
    %v4955 = vpack.c.b16 %v4743, %v4742
    %v4956 = vpack.c.b16 %v4745, %v4744
    %v4957 = vpack.c.b16 %v4747, %v4746
    %v4958 = vpack.c.b16 %v4749, %v4748
    %v4959 = vpack.c.b16 %v4751, %v4750
    %v4960 = vpack.c.b16 %v4753, %v4752
    %v4961 = vpack.c.b16 %v4755, %v4754
    %v4962 = vpack.c.b16 %v4757, %v4756
    %v4963 = vpack.c.b16 %v4759, %v4758
    %v4964 = vpack.c.b16 %v4761, %v4760
    %v4965 = vpack.c.b16 %v4763, %v4762
    %v4966 = vpack.c.b16 %v4765, %v4764
    %v4967 = vpack.c.b16 %v4767, %v4766
    %v4968 = vpack.c.b16 %v4769, %v4768
    %v4969 = vpack.c.b16 %v4771, %v4770
    %v4970 = vpack.c.b16 %v4773, %v4772
    %v4971 = vpack.c.b16 %v4775, %v4774
    %v4972 = vpack.c.b16 %v4777, %v4776
    %v4973 = vpack.c.b16 %v4779, %v4778
    %v4974 = vpack.c.b16 %v4781, %v4780
    %v4975 = vpack.c.b16 %v4783, %v4782
    %v4976 = vpack.c.b16 %v4785, %v4784
    %v4977 = vpack.c.b16 %v4787, %v4786
    %v4978 = vpack.c.b16 %v4789, %v4788
    %v4979 = vpack.c.b16 %v4791, %v4790
    %v4980 = vpack.c.b16 %v4793, %v4792
    %v4981 = vpack.c.b16 %v4795, %v4794
    %v4982 = vpack.c.b16 %v4797, %v4796
    %v4983 = vpack.c.b16 %v4799, %v4798
    %v4984 = vpack.c.b16 %v4801, %v4800
    %v4985 = vpack.c.b16 %v4803, %v4802
    %v4986 = vpack.c.b16 %v4805, %v4804
    %v4987 = vpack.c.b16 %v4807, %v4806
    %v4988 = vpack.c.b16 %v4809, %v4808
    %v4989 = vpack.c.b16 %v4811, %v4810
    %v4990 = vpack.c.b16 %v4813, %v4812
    %v4991 = vpack.c.b16 %v4815, %v4814
    %v4992 = vpack.c.b16 %v4817, %v4816
    %v4993 = vpack.c.b16 %v4819, %v4818
    %v4994 = vpack.c.b16 %v4821, %v4820
    %v4995 = vpack.c.b16 %v4823, %v4822
    %v4996 = vpack.c.b16 %v4825, %v4824
    %v4997 = vpack.c.b16 %v4827, %v4826
    %v4998 = vpack.c.b16 %v4829, %v4828
    %v4999 = vpack.c.b16 %v4831, %v4830
    %v5000 = vpack.c.b16 %v4833, %v4832
    %v5001 = vpack.c.b16 %v4835, %v4834
    %v5002 = vpack.c.b16 %v4837, %v4836
    %v5003 = vpack.c.b16 %v4839, %v4838
    %v5004 = vpack.c.b16 %v4841, %v4840
    %v5005 = vpack.c.b16 %v4843, %v4842
    %v5006 = vpack.c.b16 %v4845, %v4844
    %v5007 = vpack.c.b16 %v4847, %v4846
    %v5008 = vpack.c.b16 %v4849, %v4848
    %v5009 = vpack.c.b16 %v4851, %v4850
    %v5010 = vpack.c.b16 %v4853, %v4852
    %v5011 = vpack.c.b16 %v4855, %v4854
    %v5012 = vpack.c.b16 %v4857, %v4856
    %v5013 = vpack.c.b16 %v4859, %v4858
    %v5014 = vpack.c.b16 %v4861, %v4860
    %v5015 = vpack.c.b16 %v4863, %v4862
    %v5016 = vpack.c.b16 %v4865, %v4864
    %v5017 = vpack.c.b16 %v4867, %v4866
    %v5018 = vpack.c.b16 %v4869, %v4868
    %v5019 = vpack.c.b16 %v4871, %v4870
    %v5020 = vpack.c.b16 %v4873, %v4872
    %v5021 = vpack.c.b16 %v4875, %v4874
    %v5022 = vpack.c.b16 %v4877, %v4876
    %v5023 = vpack.c.b16 %v4879, %v4878
    %v5024 = vpack.c.b16 %v4881, %v4880
    %v5025 = vpack.c.b16 %v4883, %v4882
    %v5026 = vpack.c.b16 %v4885, %v4884
    %v5027 = vpack.c.b16 %v4887, %v4886
    %v5028 = vpack.c.b16 %v4889, %v4888
    %v5029 = vpack.c.b16 %v4891, %v4890
    %v5030 = vpack.c.b16 %v4893, %v4892
    %v5031 = vpack.c.b16 %v4895, %v4894
    %v5032 = vpack.c.b16 %v4897, %v4896
    %v5033 = vpack.c.b16 %v4899, %v4898
    %v5034 = vpack.c.b16 %v4901, %v4900
    %v5035 = vpack.c.b16 %v4903, %v4902
    %v5036 = vpack.c.b16 %v4905, %v4904
    %v5037 = vpack.c.b16 %v4907, %v4906
    %v5038 = vpack.c.b16 %v4909, %v4908
    %v5039 = vpack.c.b16 %v4911, %v4910
    %5168 = vmatprep.subr.bf16.mxu0 0
    %5169 = vmatpush1.bf16.msra.mxu0 %v4912
    %5170 = vmatprep.subr.bf16.mxu0 0
    %5171 = vmatpush1.bf16.msra.mxu0 %v4913
    %5172 = vmatprep.subr.bf16.mxu0 0
    %5173 = vmatpush1.bf16.msra.mxu0 %v4914
    %5174 = vmatprep.subr.bf16.mxu0 0
    %5175 = vmatpush1.bf16.msra.mxu0 %v4915
    %5176 = vmatprep.subr.bf16.mxu0 0
    %5177 = vmatpush1.bf16.msra.mxu0 %v4916
    %5178 = vmatprep.subr.bf16.mxu0 0
    %5179 = vmatpush1.bf16.msra.mxu0 %v4917
    %5180 = vmatprep.subr.bf16.mxu0 0
    %5181 = vmatpush1.bf16.msra.mxu0 %v4918
    %5182 = vmatprep.subr.bf16.mxu0 0
    %5183 = vmatpush1.bf16.msra.mxu0 %v4919
    %5184 = vmatprep.subr.bf16.mxu0 0
    %5185 = vmatpush1.bf16.msra.mxu0 %v4920
    %5186 = vmatprep.subr.bf16.mxu0 0
    %5187 = vmatpush1.bf16.msra.mxu0 %v4921
    %5188 = vmatprep.subr.bf16.mxu0 0
    %5189 = vmatpush1.bf16.msra.mxu0 %v4922
    %5190 = vmatprep.subr.bf16.mxu0 0
    %5191 = vmatpush1.bf16.msra.mxu0 %v4923
    %5192 = vmatprep.subr.bf16.mxu0 0
    %5193 = vmatpush1.bf16.msra.mxu0 %v4924
    %5194 = vmatprep.subr.bf16.mxu0 0
    %5195 = vmatpush1.bf16.msra.mxu0 %v4925
    %5196 = vmatprep.subr.bf16.mxu0 0
    %5197 = vmatpush1.bf16.msra.mxu0 %v4926
    %5198 = vmatprep.subr.bf16.mxu0 0
    %5199 = vmatpush1.bf16.msra.mxu0 %v4927
    %5200 = vmatprep.mubr.bf16.mxu0 %v4120
    %5201 = vmatmul.mubr.bf16.gmra.mrb[0].mxu0 %v4119
    %v5202 = vpop.f32.mrb[0].mxu0
    %v5203 = vadd.f32 %v4398, %v5202
    %v5204 = vpop.f32.mrb[0].mxu0
    %v5205 = vpop.f32.mrb[0].mxu0
    %v5206 = vadd.f32 %v4398, %v5205
    %v5207 = vpop.f32.mrb[0].mxu0
    %5208 = vdwg.mxu0
    %5209 = vmatprep.subr.bf16.mxu0 0
    %5210 = vmatpush1.bf16.msra.mxu0 %v4928
    %5211 = vmatprep.subr.bf16.mxu0 0
    %5212 = vmatpush1.bf16.msra.mxu0 %v4929
    %5213 = vmatprep.subr.bf16.mxu0 0
    %5214 = vmatpush1.bf16.msra.mxu0 %v4930
    %5215 = vmatprep.subr.bf16.mxu0 0
    %5216 = vmatpush1.bf16.msra.mxu0 %v4931
    %5217 = vmatprep.subr.bf16.mxu0 0
    %5218 = vmatpush1.bf16.msra.mxu0 %v4932
    %5219 = vmatprep.subr.bf16.mxu0 0
    %5220 = vmatpush1.bf16.msra.mxu0 %v4933
    %5221 = vmatprep.subr.bf16.mxu0 0
    %5222 = vmatpush1.bf16.msra.mxu0 %v4934
    %5223 = vmatprep.subr.bf16.mxu0 0
    %5224 = vmatpush1.bf16.msra.mxu0 %v4935
    %5225 = vmatprep.subr.bf16.mxu0 0
    %5226 = vmatpush1.bf16.msra.mxu0 %v4936
    %5227 = vmatprep.subr.bf16.mxu0 0
    %5228 = vmatpush1.bf16.msra.mxu0 %v4937
    %5229 = vmatprep.subr.bf16.mxu0 0
    %5230 = vmatpush1.bf16.msra.mxu0 %v4938
    %5231 = vmatprep.subr.bf16.mxu0 0
    %5232 = vmatpush1.bf16.msra.mxu0 %v4939
    %5233 = vmatprep.subr.bf16.mxu0 0
    %5234 = vmatpush1.bf16.msra.mxu0 %v4940
    %5235 = vmatprep.subr.bf16.mxu0 0
    %5236 = vmatpush1.bf16.msra.mxu0 %v4941
    %5237 = vmatprep.subr.bf16.mxu0 0
    %5238 = vmatpush1.bf16.msra.mxu0 %v4942
    %5239 = vmatprep.subr.bf16.mxu0 0
    %5240 = vmatpush1.bf16.msra.mxu0 %v4943
    %5241 = vmatprep.mubr.bf16.mxu0 %v4122
    %5242 = vmatmul.mubr.bf16.gmra.mrb[0].mxu0 %v4121
    %v5243 = vpop.f32.mrb[0].mxu0
    %v5244 = vadd.f32 %v5203, %v5243
    %v5245 = vpop.f32.mrb[0].mxu0
    %v5246 = vpop.f32.mrb[0].mxu0
    %v5247 = vadd.f32 %v5206, %v5246
    %v5248 = vpop.f32.mrb[0].mxu0
    %5249 = vdwg.mxu0
    %5250 = vmatprep.subr.bf16.mxu0 0
    %5251 = vmatpush1.bf16.msra.mxu0 %v4944
    %5252 = vmatprep.subr.bf16.mxu0 0
    %5253 = vmatpush1.bf16.msra.mxu0 %v4945
    %5254 = vmatprep.subr.bf16.mxu0 0
    %5255 = vmatpush1.bf16.msra.mxu0 %v4946
    %5256 = vmatprep.subr.bf16.mxu0 0
    %5257 = vmatpush1.bf16.msra.mxu0 %v4947
    %5258 = vmatprep.subr.bf16.mxu0 0
    %5259 = vmatpush1.bf16.msra.mxu0 %v4948
    %5260 = vmatprep.subr.bf16.mxu0 0
    %5261 = vmatpush1.bf16.msra.mxu0 %v4949
    %5262 = vmatprep.subr.bf16.mxu0 0
    %5263 = vmatpush1.bf16.msra.mxu0 %v4950
    %5264 = vmatprep.subr.bf16.mxu0 0
    %5265 = vmatpush1.bf16.msra.mxu0 %v4951
    %5266 = vmatprep.subr.bf16.mxu0 0
    %5267 = vmatpush1.bf16.msra.mxu0 %v4952
    %5268 = vmatprep.subr.bf16.mxu0 0
    %5269 = vmatpush1.bf16.msra.mxu0 %v4953
    %5270 = vmatprep.subr.bf16.mxu0 0
    %5271 = vmatpush1.bf16.msra.mxu0 %v4954
    %5272 = vmatprep.subr.bf16.mxu0 0
    %5273 = vmatpush1.bf16.msra.mxu0 %v4955
    %5274 = vmatprep.subr.bf16.mxu0 0
    %5275 = vmatpush1.bf16.msra.mxu0 %v4956
    %5276 = vmatprep.subr.bf16.mxu0 0
    %5277 = vmatpush1.bf16.msra.mxu0 %v4957
    %5278 = vmatprep.subr.bf16.mxu0 0
    %5279 = vmatpush1.bf16.msra.mxu0 %v4958
    %5280 = vmatprep.subr.bf16.mxu0 0
    %5281 = vmatpush1.bf16.msra.mxu0 %v4959
    %5282 = vmatprep.mubr.bf16.mxu0 %v4124
    %5283 = vmatmul.mubr.bf16.gmra.mrb[0].mxu0 %v4123
    %v5284 = vpop.f32.mrb[0].mxu0
    %v5285 = vadd.f32 %v5244, %v5284
    %v5286 = vpop.f32.mrb[0].mxu0
    %v5287 = vpop.f32.mrb[0].mxu0
    %v5288 = vadd.f32 %v5247, %v5287
    %v5289 = vpop.f32.mrb[0].mxu0
    %5290 = vdwg.mxu0
    %5291 = vmatprep.subr.bf16.mxu0 0
    %5292 = vmatpush1.bf16.msra.mxu0 %v4960
    %5293 = vmatprep.subr.bf16.mxu0 0
    %5294 = vmatpush1.bf16.msra.mxu0 %v4961
    %5295 = vmatprep.subr.bf16.mxu0 0
    %5296 = vmatpush1.bf16.msra.mxu0 %v4962
    %5297 = vmatprep.subr.bf16.mxu0 0
    %5298 = vmatpush1.bf16.msra.mxu0 %v4963
    %5299 = vmatprep.subr.bf16.mxu0 0
    %5300 = vmatpush1.bf16.msra.mxu0 %v4964
    %5301 = vmatprep.subr.bf16.mxu0 0
    %5302 = vmatpush1.bf16.msra.mxu0 %v4965
    %5303 = vmatprep.subr.bf16.mxu0 0
    %5304 = vmatpush1.bf16.msra.mxu0 %v4966
    %5305 = vmatprep.subr.bf16.mxu0 0
    %5306 = vmatpush1.bf16.msra.mxu0 %v4967
    %5307 = vmatprep.subr.bf16.mxu0 0
    %5308 = vmatpush1.bf16.msra.mxu0 %v4968
    %5309 = vmatprep.subr.bf16.mxu0 0
    %5310 = vmatpush1.bf16.msra.mxu0 %v4969
    %5311 = vmatprep.subr.bf16.mxu0 0
    %5312 = vmatpush1.bf16.msra.mxu0 %v4970
    %5313 = vmatprep.subr.bf16.mxu0 0
    %5314 = vmatpush1.bf16.msra.mxu0 %v4971
    %5315 = vmatprep.subr.bf16.mxu0 0
    %5316 = vmatpush1.bf16.msra.mxu0 %v4972
    %5317 = vmatprep.subr.bf16.mxu0 0
    %5318 = vmatpush1.bf16.msra.mxu0 %v4973
    %5319 = vmatprep.subr.bf16.mxu0 0
    %5320 = vmatpush1.bf16.msra.mxu0 %v4974
    %5321 = vmatprep.subr.bf16.mxu0 0
    %5322 = vmatpush1.bf16.msra.mxu0 %v4975
    %5323 = vmatprep.mubr.bf16.mxu0 %v4126
    %5324 = vmatmul.mubr.bf16.gmra.mrb[0].mxu0 %v4125
    %v5325 = vpop.f32.mrb[0].mxu0
    %v5326 = vadd.f32 %v5285, %v5325
    %v5327 = vpop.f32.mrb[0].mxu0
    %v5328 = vpop.f32.mrb[0].mxu0
    %v5329 = vadd.f32 %v5288, %v5328
    %v5330 = vpop.f32.mrb[0].mxu0
    %5331 = vdwg.mxu0
    %5332 = vmatprep.subr.bf16.mxu0 0
    %5333 = vmatpush1.bf16.msra.mxu0 %v4976
    %5334 = vmatprep.subr.bf16.mxu0 0
    %5335 = vmatpush1.bf16.msra.mxu0 %v4977
    %5336 = vmatprep.subr.bf16.mxu0 0
    %5337 = vmatpush1.bf16.msra.mxu0 %v4978
    %5338 = vmatprep.subr.bf16.mxu0 0
    %5339 = vmatpush1.bf16.msra.mxu0 %v4979
    %5340 = vmatprep.subr.bf16.mxu0 0
    %5341 = vmatpush1.bf16.msra.mxu0 %v4980
    %5342 = vmatprep.subr.bf16.mxu0 0
    %5343 = vmatpush1.bf16.msra.mxu0 %v4981
    %5344 = vmatprep.subr.bf16.mxu0 0
    %5345 = vmatpush1.bf16.msra.mxu0 %v4982
    %5346 = vmatprep.subr.bf16.mxu0 0
    %5347 = vmatpush1.bf16.msra.mxu0 %v4983
    %5348 = vmatprep.subr.bf16.mxu0 0
    %5349 = vmatpush1.bf16.msra.mxu0 %v4984
    %5350 = vmatprep.subr.bf16.mxu0 0
    %5351 = vmatpush1.bf16.msra.mxu0 %v4985
    %5352 = vmatprep.subr.bf16.mxu0 0
    %5353 = vmatpush1.bf16.msra.mxu0 %v4986
    %5354 = vmatprep.subr.bf16.mxu0 0
    %5355 = vmatpush1.bf16.msra.mxu0 %v4987
    %5356 = vmatprep.subr.bf16.mxu0 0
    %5357 = vmatpush1.bf16.msra.mxu0 %v4988
    %5358 = vmatprep.subr.bf16.mxu0 0
    %5359 = vmatpush1.bf16.msra.mxu0 %v4989
    %5360 = vmatprep.subr.bf16.mxu0 0
    %5361 = vmatpush1.bf16.msra.mxu0 %v4990
    %5362 = vmatprep.subr.bf16.mxu0 0
    %5363 = vmatpush1.bf16.msra.mxu0 %v4991
    %5364 = vmatprep.mubr.bf16.mxu0 %v4128
    %5365 = vmatmul.mubr.bf16.gmra.mrb[0].mxu0 %v4127
    %v5366 = vpop.f32.mrb[0].mxu0
    %v5367 = vadd.f32 %v5326, %v5366
    %v5368 = vpop.f32.mrb[0].mxu0
    %v5369 = vpop.f32.mrb[0].mxu0
    %v5370 = vadd.f32 %v5329, %v5369
    %v5371 = vpop.f32.mrb[0].mxu0
    %5372 = vdwg.mxu0
    %5373 = vmatprep.subr.bf16.mxu0 0
    %5374 = vmatpush1.bf16.msra.mxu0 %v4992
    %5375 = vmatprep.subr.bf16.mxu0 0
    %5376 = vmatpush1.bf16.msra.mxu0 %v4993
    %5377 = vmatprep.subr.bf16.mxu0 0
    %5378 = vmatpush1.bf16.msra.mxu0 %v4994
    %5379 = vmatprep.subr.bf16.mxu0 0
    %5380 = vmatpush1.bf16.msra.mxu0 %v4995
    %5381 = vmatprep.subr.bf16.mxu0 0
    %5382 = vmatpush1.bf16.msra.mxu0 %v4996
    %5383 = vmatprep.subr.bf16.mxu0 0
    %5384 = vmatpush1.bf16.msra.mxu0 %v4997
    %5385 = vmatprep.subr.bf16.mxu0 0
    %5386 = vmatpush1.bf16.msra.mxu0 %v4998
    %5387 = vmatprep.subr.bf16.mxu0 0
    %5388 = vmatpush1.bf16.msra.mxu0 %v4999
    %5389 = vmatprep.subr.bf16.mxu0 0
    %5390 = vmatpush1.bf16.msra.mxu0 %v5000
    %5391 = vmatprep.subr.bf16.mxu0 0
    %5392 = vmatpush1.bf16.msra.mxu0 %v5001
    %5393 = vmatprep.subr.bf16.mxu0 0
    %5394 = vmatpush1.bf16.msra.mxu0 %v5002
    %5395 = vmatprep.subr.bf16.mxu0 0
    %5396 = vmatpush1.bf16.msra.mxu0 %v5003
    %5397 = vmatprep.subr.bf16.mxu0 0
    %5398 = vmatpush1.bf16.msra.mxu0 %v5004
    %5399 = vmatprep.subr.bf16.mxu0 0
    %5400 = vmatpush1.bf16.msra.mxu0 %v5005
    %5401 = vmatprep.subr.bf16.mxu0 0
    %5402 = vmatpush1.bf16.msra.mxu0 %v5006
    %5403 = vmatprep.subr.bf16.mxu0 0
    %5404 = vmatpush1.bf16.msra.mxu0 %v5007
    %5405 = vmatprep.mubr.bf16.mxu0 %v4130
    %5406 = vmatmul.mubr.bf16.gmra.mrb[0].mxu0 %v4129
    %v5407 = vpop.f32.mrb[0].mxu0
    %v5408 = vadd.f32 %v5367, %v5407
    %v5409 = vpop.f32.mrb[0].mxu0
    %v5410 = vpop.f32.mrb[0].mxu0
    %v5411 = vadd.f32 %v5370, %v5410
    %v5412 = vpop.f32.mrb[0].mxu0
    %5413 = vdwg.mxu0
    %5414 = vmatprep.subr.bf16.mxu0 0
    %5415 = vmatpush1.bf16.msra.mxu0 %v5008
    %5416 = vmatprep.subr.bf16.mxu0 0
    %5417 = vmatpush1.bf16.msra.mxu0 %v5009
    %5418 = vmatprep.subr.bf16.mxu0 0
    %5419 = vmatpush1.bf16.msra.mxu0 %v5010
    %5420 = vmatprep.subr.bf16.mxu0 0
    %5421 = vmatpush1.bf16.msra.mxu0 %v5011
    %5422 = vmatprep.subr.bf16.mxu0 0
    %5423 = vmatpush1.bf16.msra.mxu0 %v5012
    %5424 = vmatprep.subr.bf16.mxu0 0
    %5425 = vmatpush1.bf16.msra.mxu0 %v5013
    %5426 = vmatprep.subr.bf16.mxu0 0
    %5427 = vmatpush1.bf16.msra.mxu0 %v5014
    %5428 = vmatprep.subr.bf16.mxu0 0
    %5429 = vmatpush1.bf16.msra.mxu0 %v5015
    %5430 = vmatprep.subr.bf16.mxu0 0
    %5431 = vmatpush1.bf16.msra.mxu0 %v5016
    %5432 = vmatprep.subr.bf16.mxu0 0
    %5433 = vmatpush1.bf16.msra.mxu0 %v5017
    %5434 = vmatprep.subr.bf16.mxu0 0
    %5435 = vmatpush1.bf16.msra.mxu0 %v5018
    %5436 = vmatprep.subr.bf16.mxu0 0
    %5437 = vmatpush1.bf16.msra.mxu0 %v5019
    %5438 = vmatprep.subr.bf16.mxu0 0
    %5439 = vmatpush1.bf16.msra.mxu0 %v5020
    %5440 = vmatprep.subr.bf16.mxu0 0
    %5441 = vmatpush1.bf16.msra.mxu0 %v5021
    %5442 = vmatprep.subr.bf16.mxu0 0
    %5443 = vmatpush1.bf16.msra.mxu0 %v5022
    %5444 = vmatprep.subr.bf16.mxu0 0
    %5445 = vmatpush1.bf16.msra.mxu0 %v5023
    %5446 = vmatprep.mubr.bf16.mxu0 %v4132
    %5447 = vmatmul.mubr.bf16.gmra.mrb[0].mxu0 %v4131
    %v5448 = vpop.f32.mrb[0].mxu0
    %v5449 = vadd.f32 %v5408, %v5448
    %v5450 = vpop.f32.mrb[0].mxu0
    %v5451 = vpop.f32.mrb[0].mxu0
    %v5452 = vadd.f32 %v5411, %v5451
    %v5453 = vpop.f32.mrb[0].mxu0
    %5454 = vdwg.mxu0
    %5455 = vmatprep.subr.bf16.mxu0 0
    %5456 = vmatpush1.bf16.msra.mxu0 %v5024
    %5457 = vmatprep.subr.bf16.mxu0 0
    %5458 = vmatpush1.bf16.msra.mxu0 %v5025
    %5459 = vmatprep.subr.bf16.mxu0 0
    %5460 = vmatpush1.bf16.msra.mxu0 %v5026
    %5461 = vmatprep.subr.bf16.mxu0 0
    %5462 = vmatpush1.bf16.msra.mxu0 %v5027
    %5463 = vmatprep.subr.bf16.mxu0 0
    %5464 = vmatpush1.bf16.msra.mxu0 %v5028
    %5465 = vmatprep.subr.bf16.mxu0 0
    %5466 = vmatpush1.bf16.msra.mxu0 %v5029
    %5467 = vmatprep.subr.bf16.mxu0 0
    %5468 = vmatpush1.bf16.msra.mxu0 %v5030
    %5469 = vmatprep.subr.bf16.mxu0 0
    %5470 = vmatpush1.bf16.msra.mxu0 %v5031
    %5471 = vmatprep.subr.bf16.mxu0 0
    %5472 = vmatpush1.bf16.msra.mxu0 %v5032
    %5473 = vmatprep.subr.bf16.mxu0 0
    %5474 = vmatpush1.bf16.msra.mxu0 %v5033
    %5475 = vmatprep.subr.bf16.mxu0 0
    %5476 = vmatpush1.bf16.msra.mxu0 %v5034
    %5477 = vmatprep.subr.bf16.mxu0 0
    %5478 = vmatpush1.bf16.msra.mxu0 %v5035
    %5479 = vmatprep.subr.bf16.mxu0 0
    %5480 = vmatpush1.bf16.msra.mxu0 %v5036
    %5481 = vmatprep.subr.bf16.mxu0 0
    %5482 = vmatpush1.bf16.msra.mxu0 %v5037
    %5483 = vmatprep.subr.bf16.mxu0 0
    %5484 = vmatpush1.bf16.msra.mxu0 %v5038
    %5485 = vmatprep.subr.bf16.mxu0 0
    %5486 = vmatpush1.bf16.msra.mxu0 %v5039
    %5487 = vmatprep.mubr.bf16.mxu0 %v4134
    %5488 = vmatmul.mubr.bf16.gmra.mrb[0].mxu0 %v4133
    %v5489 = vpop.f32.mrb[0].mxu0
    %v5490 = vadd.f32 %v5449, %v5489
    %v5491 = vpop.f32.mrb[0].mxu0
    %v5492 = vpop.f32.mrb[0].mxu0
    %v5493 = vadd.f32 %v5452, %v5492
    %v5494 = vpop.f32.mrb[0].mxu0
    %5495 = vdwg.mxu0
    %v5496 = vadd.f32 %v3363, %v5490
    %v5497 = vadd.f32 %v3364, %v5493
    %s5498 = scalar_lea.vmem %s14, 1
    %v5499 = vld [vmem:[%s5498] sm:$0x1]
    %s5500 = scalar_lea.vmem %s15, 1
    %v5501 = vld [vmem:[%s5500] sm:$0x1]
    %v5502 = vsel %vm411, %v5496, 0.0
    %5503 = vadd.xlane.f32.xlu0 %v5502
    %v5504 = vpop.xlane.xlu0 %5503
    %v5505 = vsel %vm411, %v5497, 0.0
    %5506 = vadd.xlane.f32.xlu0 %v5505
    %v5507 = vpop.xlane.xlu0 %5506
    %v5508 = vmul.f32 %v5504, %v751
    %v5509 = vmul.f32 %v5507, %v751
    %v5510 = vsub.f32 %v5496, %v5508
    %v5511 = vsub.f32 %v5497, %v5509
    %v5512 = vmul.f32 %v5510, %v5510
    %v5513 = vmul.f32 %v5511, %v5511
    %v5514 = vsel %vm411, %v5512, 0.0
    %5515 = vadd.xlane.f32.xlu0 %v5514
    %v5516 = vpop.xlane.xlu0 %5515
    %v5517 = vsel %vm411, %v5513, 0.0
    %5518 = vadd.xlane.f32.xlu0 %v5517
    %v5519 = vpop.xlane.xlu0 %5518
    %v5520 = vmul.f32 %v5516, %v751
    %v5521 = vmul.f32 %v5519, %v751
    %v5522 = vadd.f32 %v5520, 1e-05
    %v5523 = vadd.f32 %v5521, 1e-05
    %v5524 = vrsqrt.pop %v5522
    %v5525 = vrsqrt.pop %v5523
    %v5526 = vmul.f32 %v5510, %v5524
    %v5527 = vmul.f32 %v5511, %v5525
    %v5529 = vlaneseq
    %v5530 = vshrl.u32 %v5529, 7
    %v5531 = vsub.s32 0, %v5530
    %v5532 = vrot.slane %v5499, %v5531
    %v5534 = vmul.f32 %v5526, %v5532
    %v5535 = vmul.f32 %v5527, %v5532
    %v5537 = vlaneseq
    %v5538 = vshrl.u32 %v5537, 7
    %v5539 = vsub.s32 0, %v5538
    %v5540 = vrot.slane %v5501, %v5539
    %v5542 = vadd.f32 %v5534, %v5540
    %v5543 = vadd.f32 %v5535, %v5540
    %v5544 = vsel %vm411, %v5542, -inf
    %v5545 = vrot.slane %v5544, 4
    %v5546 = vmax.f32 %v5544, %v5545
    %v5547 = vrot.slane %v5546, 2
    %v5548 = vmax.f32 %v5546, %v5547
    %v5549 = vrot.slane %v5548, 1
    %v5550 = vmax.f32 %v5548, %v5549
    %v5551 = vsel %vm411, %v5543, -inf
    %v5552 = vrot.slane %v5551, 4
    %v5553 = vmax.f32 %v5551, %v5552
    %v5554 = vrot.slane %v5553, 2
    %v5555 = vmax.f32 %v5553, %v5554
    %v5556 = vrot.slane %v5555, 1
    %v5557 = vmax.f32 %v5555, %v5556
    %vm5558 = vcmask 1040384
    %v5559 = vsel %vm5558, %v5550, %v5557
    %v5560 = vld [vmem:[%s16] sm:$0xff]
    %v5561 = vld [vmem:[%s16 + $0x8] sm:$0xff]
    %v5562 = vld [vmem:[%s16 + $0x10] sm:$0xff]
    %v5563 = vld [vmem:[%s16 + $0x18] sm:$0xff]
    %v5564 = vld [vmem:[%s16 + $0x20] sm:$0xff]
    %v5565 = vld [vmem:[%s16 + $0x28] sm:$0xff]
    %v5566 = vld [vmem:[%s17] sm:$0x1]
    %v5568 = vlaneseq
    %v5569 = vshrl.u32 %v5568, 7
    %v5570 = vsub.s32 0, %v5569
    %v5571 = vrot.slane %v5566, %v5570
    %v5574 = vsel %vm411, %v5559, 0
    %5576 = vmatprep.subr.mxu0 0.0
    %5577 = vmatpush1.msra.mxu0 %v5560
    %5578 = vmatprep.subr.mxu0 0.0
    %5579 = vmatpush1.msra.mxu0 %v5561
    %5580 = vmatprep.subr.mxu0 0.0
    %5581 = vmatpush1.msra.mxu0 %v5562
    %5582 = vmatprep.subr.mxu0 0.0
    %5583 = vmatpush1.msra.mxu0 %v5563
    %5584 = vmatprep.subr.mxu0 0.0
    %5585 = vmatpush1.msra.mxu0 %v5564
    %5586 = vmatprep.subr.mxu0 0.0
    %5587 = vmatpush1.msra.mxu0 %v5565
    %5588 = vmatprep.subr.mxu0 0.0
    %5589 = vmatpush1.msra.mxu0 0.0
    %5590 = vmatprep.subr.mxu0 0.0
    %5591 = vmatpush1.msra.mxu0 0.0
    %5592 = vmatprep.subr.mxu0 0.0
    %5593 = vmatpush1.msra.mxu0 0.0
    %5594 = vmatprep.subr.mxu0 0.0
    %5595 = vmatpush1.msra.mxu0 0.0
    %5596 = vmatprep.subr.mxu0 0.0
    %5597 = vmatpush1.msra.mxu0 0.0
    %5598 = vmatprep.subr.mxu0 0.0
    %5599 = vmatpush1.msra.mxu0 0.0
    %5600 = vmatprep.subr.mxu0 0.0
    %5601 = vmatpush1.msra.mxu0 0.0
    %5602 = vmatprep.subr.mxu0 0.0
    %5603 = vmatpush1.msra.mxu0 0.0
    %5604 = vmatprep.subr.mxu0 0.0
    %5605 = vmatpush1.msra.mxu0 0.0
    %5606 = vmatprep.subr.mxu0 0.0
    %5607 = vmatpush1.msra.mxu0 0.0
    %5608 = vmatprep.subr.mxu0 0.0
    %5609 = vmatpush1.msra.mxu0 0.0
    %5610 = vmatprep.subr.mxu0 0.0
    %5611 = vmatpush1.msra.mxu0 0.0
    %5612 = vmatprep.subr.mxu0 0.0
    %5613 = vmatpush1.msra.mxu0 0.0
    %5614 = vmatprep.subr.mxu0 0.0
    %5615 = vmatpush1.msra.mxu0 0.0
    %5616 = vmatprep.subr.mxu0 0.0
    %5617 = vmatpush1.msra.mxu0 0.0
    %5618 = vmatprep.subr.mxu0 0.0
    %5619 = vmatpush1.msra.mxu0 0.0
    %5620 = vmatprep.subr.mxu0 0.0
    %5621 = vmatpush1.msra.mxu0 0.0
    %5622 = vmatprep.subr.mxu0 0.0
    %5623 = vmatpush1.msra.mxu0 0.0
    %5624 = vmatprep.subr.mxu0 0.0
    %5625 = vmatpush1.msra.mxu0 0.0
    %5626 = vmatprep.subr.mxu0 0.0
    %5627 = vmatpush1.msra.mxu0 0.0
    %5628 = vmatprep.subr.mxu0 0.0
    %5629 = vmatpush1.msra.mxu0 0.0
    %5630 = vmatprep.subr.mxu0 0.0
    %5631 = vmatpush1.msra.mxu0 0.0
    %5632 = vmatprep.subr.mxu0 0.0
    %5633 = vmatpush1.msra.mxu0 0.0
    %5634 = vmatprep.subr.mxu0 0.0
    %5635 = vmatpush1.msra.mxu0 0.0
    %5636 = vmatprep.subr.mxu0 0.0
    %5637 = vmatpush1.msra.mxu0 0.0
    %5638 = vmatprep.subr.mxu0 0.0
    %5639 = vmatpush1.msra.mxu0 0.0
    %5640 = vmatprep.mubr.f32.mxu0 0.0
    %5641 = vmatmul.mubr.f32.gmra.mrb[0].mxu0 %v5574
    %v5642 = vpop.f32.mrb[0].mxu0
    %v5643 = vadd.f32 %v5571, %v5642
    %v5644 = vpop.f32.mrb[0].mxu0
    %5645 = vdwg.mxu0
    %vm5646 = vcmask 74752
    %5647 = vst.msk [vmem:[#allocation2] sm:$0x3] %vm5646, %v5643
    // Predicated region
    $region74: #{audio_trans_forward.1} parent=1 // pred_check
      _
    $region75: #{audio_trans_forward.1} parent=1 // pred_check_branch
      %5649 = sbr.rel (0) target = $region77
    $region76: #{audio_trans_forward.1} parent=1 // pred_region
      %s5651 = ssub.s32 32, 32
      %5652 = vsyncadd [#allocation3], %s5651
      %s5654 = sshll.u32 [#allocation2], 4
      %s5655 = int_to_ptr.vmem [resolvable:$true] %s5654
      %5657 = dma.vmem_to_hbm [thread:$0]  %s5655, 32, %s18, [#allocation3]
    $region77: #{audio_trans_forward.1} parent=1 // pred_fallthru
      _
    // Predicated region
    $region78: #{audio_trans_forward.1} parent=1 // pred_check
      _
    $region79: #{audio_trans_forward.1} parent=1 // pred_check_branch
      %5659 = sbr.rel (0) target = $region81
    $region80: #{audio_trans_forward.1} parent=1 // pred_region
      %5660 = dma.done [#allocation3], 32
    $region81: #{audio_trans_forward.1} parent=1 // pred_fallthru
      _
    %5661 = vsyncpa [#allocation3], 1

</llo_original>
